<compile_context>
chip_gen: v7x
topology: tpu7x:2x2x1
jax: 0.10.0
libtpu: 0.0.40
codegen_flags: <defaults>
</compile_context>

<pallas_src>
import functools

import jax
import jax.numpy as jnp
from jax import lax
from jax.experimental import pallas as pl
from jax.experimental.pallas import tpu as pltpu

BN_EPS = 1e-5
NEG_SLOPE = 0.2
VMEM_LIMIT_BYTES = 48 * 1024 * 1024   # explicit; fits the v7x 64 MiB budget


def _round_up(x, m):
    return (x + m - 1) // m * m


# ---------------------------------------------------------------------------
# Kernel: implicit-im2col conv as ONE fused MXU matmul per tile
#         + fused masked per-tile BN partial statistics.
# Grid: (num_tiles,), "parallel" (no cross-tile carry).
# ---------------------------------------------------------------------------
def _conv_stats_kernel(xa_ref, xb_ref, w_ref, y_ref, s_ref, joint_ref, stack_ref,
                       *, offsets, tm, cin_p, dims, pdims, mp):
    D, H, W = dims
    Dp, Hp, Wp = pdims

    # Stitch current window + narrow halo into one contiguous slab (aligned stores).
    joint_ref[:, :tm] = xa_ref[...]
    joint_ref[:, tm:] = xb_ref[...]

    # Implicit im2col: 27 statically shifted (cin_p, tm) views stacked along the
    # contraction dim.  TODO(synk): the unaligned lane shifts could be routed
    # explicitly through the XLU with pltpu.roll if this ever shows up VALU-bound.
    for t, off in enumerate(offsets):
        stack_ref[t * cin_p:(t + 1) * cin_p, :] = joint_ref[:, off:off + tm]

    # Single MXU matmul, K = 27*cin_p, f32 accumulation inside the MXU.
    y = jnp.dot(w_ref[...], stack_ref[...], preferred_element_type=jnp.float32)
    y_ref[...] = y                                 # lane-dense (cout_p, tm) store

    # In-kernel validity mask from the flat padded-grid column index:
    #   valid <=> col < mp  and  w < W  and  h < H  and  d < D
    # using  x // Wp < H  <=>  x < H*Wp  to avoid vector divisions (rem only).
    col = lax.broadcasted_iota(jnp.int32, (1, tm), 1) + pl.program_id(0) * tm
    m = ((col < mp)
         & (col % Wp < W)
         & (col % (Hp * Wp) < H * Wp)
         & (col % (Dp * Hp * Wp) < D * Hp * Wp)).astype(jnp.float32)

    ym = y * m
    s1 = jnp.sum(ym, axis=1, keepdims=True)        # sum(y)    (cout_p, 1)
    s2 = jnp.sum(ym * y, axis=1, keepdims=True)    # sum(y^2)  (cout_p, 1)
    s_ref[0] = jnp.concatenate([s1, s2], axis=1)   # (cout_p, 2) partial stats


# ---------------------------------------------------------------------------
# Wrapper: layout prep + one pallas_call + fused JAX epilogue.
# ---------------------------------------------------------------------------
def conv3d_block_forward(x_ncdhw, params, *, base_tm=1024):
    """Conv3d(k=3,s=1,p=1) -> BatchNorm3d (training batch stats) -> LeakyReLU(0.2)."""
    w, gamma, beta = params["w"], params["gamma"], params["beta"]
    # params["b"] (conv bias) intentionally unused: batch-stat BN cancels it exactly.
    N, Cin, D, H, W = x_ncdhw.shape
    Cout = w.shape[0]
    Dp, Hp, Wp = D + 2, H + 2, W + 2
    mp = N * Dp * Hp * Wp                 # rows of the padded flat grid
    m_real = N * D * H * W                # real output voxels (BN denominator)
    cin_p = _round_up(Cin, 8)
    cout_p = _round_up(Cout, 8)

    # Constant flat-row offset for each of the 27 taps (kd outer, kw inner).
    offsets = tuple(kd * Hp * Wp + kh * Wp + kw
                    for kd in range(3) for kh in range(3) for kw in range(3))
    max_off = offsets[-1]
    halo_cols = _round_up(max_off, 128)

    # Tile width: multiple of the halo width (so the halo BlockSpec stays a plain
    # Blocked index), large enough to amortize per-step overhead, capped so the
    # "parallel" grid keeps >= 2 steps (v7x has 2 TensorCores sharing the grid).
    tm = max(halo_cols, (base_tm // halo_cols) * halo_cols)
    while tm > halo_cols and -(-mp // tm) < 2:
        tm -= halo_cols
    num_tiles = -(-mp // tm)
    mp_cols = num_tiles * tm
    x_cols = mp_cols + halo_cols          # room for the last halo window

    # Flat channels-first padded input X_p[cin_p, x_cols].
    xp = jnp.pad(x_ncdhw, ((0, 0), (0, cin_p - Cin), (1, 1), (1, 1), (1, 1)))
    xp = jnp.transpose(xp, (1, 0, 2, 3, 4)).reshape(cin_p, mp)
    xp = jnp.pad(xp, ((0, 0), (0, x_cols - mp)))

    # Weights as one (cout_p, 27*cin_p) matrix; column block t = kd*9+kh*3+kw
    # holds the (padded) input-channel slice for that tap.
    w2 = jnp.transpose(w.reshape(Cout, Cin, 27), (0, 2, 1))        # (Cout, 27, Cin)
    w2 = jnp.pad(w2, ((0, cout_p - Cout), (0, 0), (0, cin_p - Cin)))
    w2 = w2.reshape(cout_p, 27 * cin_p)

    kernel = functools.partial(
        _conv_stats_kernel, offsets=offsets, tm=tm, cin_p=cin_p,
        dims=(D, H, W), pdims=(Dp, Hp, Wp), mp=mp)

    y_p, stats = pl.pallas_call(
        kernel,
        out_shape=(jax.ShapeDtypeStruct((cout_p, mp_cols), jnp.float32),
                   jax.ShapeDtypeStruct((num_tiles, cout_p, 2), jnp.float32)),
        grid_spec=pltpu.PrefetchScalarGridSpec(
            num_scalar_prefetch=0,
            grid=(num_tiles,),
            in_specs=[
                pl.BlockSpec((cin_p, tm), lambda j: (0, j)),               # window
                pl.BlockSpec((cin_p, halo_cols),
                             lambda j: (0, (j + 1) * (tm // halo_cols))),  # halo
                pl.BlockSpec((cout_p, 27 * cin_p), lambda j: (0, 0)),      # weights
            ],
            out_specs=[
                pl.BlockSpec((cout_p, tm), lambda j: (0, j)),
                pl.BlockSpec((1, cout_p, 2), lambda j: (j, 0, 0)),
            ],
            scratch_shapes=[
                pltpu.VMEM((cin_p, tm + halo_cols), jnp.float32),   # stitched slab
                pltpu.VMEM((27 * cin_p, tm), jnp.float32),          # im2col stack
            ]),
        compiler_params=pltpu.CompilerParams(
            dimension_semantics=("parallel",),
            vmem_limit_bytes=VMEM_LIMIT_BYTES),
    )(xp, xp, w2)

    # Tiny cross-tile reduction + BN affine folding (pure JAX, O(num_tiles*Cout)).
    ssum = jnp.sum(stats[:, :Cout, 0], axis=0)
    ssq = jnp.sum(stats[:, :Cout, 1], axis=0)
    mean = ssum / m_real
    # TODO(synk): single-pass E[y^2]-E[y]^2 is cancellation-prone for huge voxel
    #             counts; switch to a mean-shifted two-pass reduction for production.
    var = jnp.maximum(ssq / m_real - mean * mean, 0.0)   # biased var (training BN)
    scale = gamma * lax.rsqrt(var + BN_EPS)
    shift = beta - mean * scale

    # Epilogue: drop halo/padding rows & padded channels; the folded affine +
    # LeakyReLU fuses into the reshape/transpose XLA performs anyway.
    y = y_p[:Cout, :mp].reshape(Cout, N, Dp, Hp, Wp)[:, :, :D, :H, :W]
    y = y * scale.reshape(Cout, 1, 1, 1, 1) + shift.reshape(Cout, 1, 1, 1, 1)
    y = jnp.where(y > 0, y, NEG_SLOPE * y)
    return jnp.transpose(y, (1, 0, 2, 3, 4))


# ---------------------------------------------------------------------------
# Pure-JAX reference (correctness check).
# ---------------------------------------------------------------------------
def reference_forward(x_ncdhw, params):
    w, b, gamma, beta = params["w"], params["b"], params["gamma"], params["beta"]
    y = lax.conv_general_dilated(
        x_ncdhw, w, window_strides=(1, 1, 1),
        padding=((1, 1), (1, 1), (1, 1)),
        dimension_numbers=("NCDHW", "OIDHW", "NCDHW"))
    y = y + b.reshape(1, -1, 1, 1, 1)
    mean = jnp.mean(y, axis=(0, 2, 3, 4), keepdims=True)
    var = jnp.mean((y - mean) ** 2, axis=(0, 2, 3, 4), keepdims=True)
    y = (y - mean) * lax.rsqrt(var + BN_EPS)
    y = y * gamma.reshape(1, -1, 1, 1, 1) + beta.reshape(1, -1, 1, 1, 1)
    return jnp.where(y > 0, y, NEG_SLOPE * y)


if __name__ == "__main__":
    # Small shapes: batch=2, in_channels=4, out_channels=8, spatial 8x8x8.
    N, Cin, Cout, D, H, W = 2, 4, 8, 8, 8, 8

    key = jax.random.PRNGKey(0)
    kx, kw, kb, kg, kbt = jax.random.split(key, 5)
    x = jax.random.normal(kx, (N, Cin, D, H, W), dtype=jnp.float32)

    params = {
        "w": jax.random.normal(kw, (Cout, Cin, 3, 3, 3), dtype=jnp.float32) * 0.1,
        "b": jax.random.normal(kb, (Cout,), dtype=jnp.float32) * 0.1,
        "gamma": 1.0 + 0.1 * jax.random.normal(kg, (Cout,), dtype=jnp.float32),
        "beta": 0.1 * jax.random.normal(kbt, (Cout,), dtype=jnp.float32),
    }

    out = jax.jit(conv3d_block_forward)(x, params)
    out = jax.block_until_ready(out)

    ref = reference_forward(x, params)
    assert out.shape == (N, Cout, D, H, W)
    assert jnp.allclose(out, ref, rtol=1e-3, atol=1e-3), "mismatch vs reference"

    print("KERNEL_OK")
</pallas_src>

<mosaic_0001>
module attributes {stable_mosaic.version = 11 : i64} {
  func.func @_conv_stats_kernel(%arg0: i32, %arg1: memref<8x1024xf32, #tpu.memory_space<vmem>>, %arg2: memref<8x256xf32, #tpu.memory_space<vmem>>, %arg3: memref<8x216xf32, #tpu.memory_space<vmem>>, %arg4: memref<8x1024xf32, #tpu.memory_space<vmem>>, %arg5: memref<1x8x2xf32, #tpu.memory_space<vmem>>, %arg6: memref<8x1280xf32, #tpu.memory_space<vmem>>, %arg7: memref<216x1024xf32, #tpu.memory_space<vmem>>) attributes {dimension_semantics = [#tpu.dimension_semantics<parallel>], iteration_bounds = array<i64: 2>, scalar_prefetch = 0 : i64, scratch_operands = 2 : i64, tpu.core_type = #tpu.core_type<tc>, window_params = [{transform_indices = @transform_0, window_bounds = array<i64: 8, 1024>}, {transform_indices = @transform_1, window_bounds = array<i64: 8, 256>}, {pipeline_mode = #tpu.pipeline_mode<synchronous>, transform_indices = @transform_2, window_bounds = array<i64: 8, 216>}, {transform_indices = @transform_3, window_bounds = array<i64: 8, 1024>}, {transform_indices = @transform_4, window_bounds = array<i64: 1, 8, 2>}]} {
    %c0 = arith.constant 0 : index
    %c0_0 = arith.constant 0 : index
    %0 = vector.load %arg1[%c0, %c0_0] : memref<8x1024xf32, #tpu.memory_space<vmem>>, vector<8x1024xf32>
    %c0_1 = arith.constant 0 : index
    %c0_2 = arith.constant 0 : index
    %1 = vector.load %arg6[%c0_1, %c0_2] : memref<8x1280xf32, #tpu.memory_space<vmem>>, vector<8x1024xf32>
    tpu.vector_store %arg6[%c0_1, %c0_2], %0 {strides = array<i32>} : memref<8x1280xf32, #tpu.memory_space<vmem>>, vector<8x1024xf32>,
    %c0_3 = arith.constant 0 : index
    %c0_4 = arith.constant 0 : index
    %2 = vector.load %arg2[%c0_3, %c0_4] : memref<8x256xf32, #tpu.memory_space<vmem>>, vector<8x256xf32>
    %c0_5 = arith.constant 0 : index
    %c1024 = arith.constant 1024 : index
    %3 = vector.load %arg6[%c0_5, %c1024] : memref<8x1280xf32, #tpu.memory_space<vmem>>, vector<8x256xf32>
    tpu.vector_store %arg6[%c0_5, %c1024], %2 {strides = array<i32>} : memref<8x1280xf32, #tpu.memory_space<vmem>>, vector<8x256xf32>,
    %c0_6 = arith.constant 0 : index
    %c0_7 = arith.constant 0 : index
    %4 = vector.load %arg6[%c0_6, %c0_7] : memref<8x1280xf32, #tpu.memory_space<vmem>>, vector<8x1024xf32>
    %c0_8 = arith.constant 0 : index
    %c0_9 = arith.constant 0 : index
    %5 = vector.load %arg7[%c0_8, %c0_9] : memref<216x1024xf32, #tpu.memory_space<vmem>>, vector<8x1024xf32>
    tpu.vector_store %arg7[%c0_8, %c0_9], %4 {strides = array<i32>} : memref<216x1024xf32, #tpu.memory_space<vmem>>, vector<8x1024xf32>,
    %c0_10 = arith.constant 0 : index
    %c1 = arith.constant 1 : index
    %6 = vector.load %arg6[%c0_10, %c1] : memref<8x1280xf32, #tpu.memory_space<vmem>>, vector<8x1024xf32>
    %c8 = arith.constant 8 : index
    %c0_11 = arith.constant 0 : index
    %7 = vector.load %arg7[%c8, %c0_11] : memref<216x1024xf32, #tpu.memory_space<vmem>>, vector<8x1024xf32>
    tpu.vector_store %arg7[%c8, %c0_11], %6 {strides = array<i32>} : memref<216x1024xf32, #tpu.memory_space<vmem>>, vector<8x1024xf32>,
    %c0_12 = arith.constant 0 : index
    %c2 = arith.constant 2 : index
    %8 = vector.load %arg6[%c0_12, %c2] : memref<8x1280xf32, #tpu.memory_space<vmem>>, vector<8x1024xf32>
    %c16 = arith.constant 16 : index
    %c0_13 = arith.constant 0 : index
    %9 = vector.load %arg7[%c16, %c0_13] : memref<216x1024xf32, #tpu.memory_space<vmem>>, vector<8x1024xf32>
    tpu.vector_store %arg7[%c16, %c0_13], %8 {strides = array<i32>} : memref<216x1024xf32, #tpu.memory_space<vmem>>, vector<8x1024xf32>,
    %c0_14 = arith.constant 0 : index
    %c10 = arith.constant 10 : index
    %10 = vector.load %arg6[%c0_14, %c10] : memref<8x1280xf32, #tpu.memory_space<vmem>>, vector<8x1024xf32>
    %c24 = arith.constant 24 : index
    %c0_15 = arith.constant 0 : index
    %11 = vector.load %arg7[%c24, %c0_15] : memref<216x1024xf32, #tpu.memory_space<vmem>>, vector<8x1024xf32>
    tpu.vector_store %arg7[%c24, %c0_15], %10 {strides = array<i32>} : memref<216x1024xf32, #tpu.memory_space<vmem>>, vector<8x1024xf32>,
    %c0_16 = arith.constant 0 : index
    %c11 = arith.constant 11 : index
    %12 = vector.load %arg6[%c0_16, %c11] : memref<8x1280xf32, #tpu.memory_space<vmem>>, vector<8x1024xf32>
    %c32 = arith.constant 32 : index
    %c0_17 = arith.constant 0 : index
    %13 = vector.load %arg7[%c32, %c0_17] : memref<216x1024xf32, #tpu.memory_space<vmem>>, vector<8x1024xf32>
    tpu.vector_store %arg7[%c32, %c0_17], %12 {strides = array<i32>} : memref<216x1024xf32, #tpu.memory_space<vmem>>, vector<8x1024xf32>,
    %c0_18 = arith.constant 0 : index
    %c12 = arith.constant 12 : index
    %14 = vector.load %arg6[%c0_18, %c12] : memref<8x1280xf32, #tpu.memory_space<vmem>>, vector<8x1024xf32>
    %c40 = arith.constant 40 : index
    %c0_19 = arith.constant 0 : index
    %15 = vector.load %arg7[%c40, %c0_19] : memref<216x1024xf32, #tpu.memory_space<vmem>>, vector<8x1024xf32>
    tpu.vector_store %arg7[%c40, %c0_19], %14 {strides = array<i32>} : memref<216x1024xf32, #tpu.memory_space<vmem>>, vector<8x1024xf32>,
    %c0_20 = arith.constant 0 : index
    %c20 = arith.constant 20 : index
    %16 = vector.load %arg6[%c0_20, %c20] : memref<8x1280xf32, #tpu.memory_space<vmem>>, vector<8x1024xf32>
    %c48 = arith.constant 48 : index
    %c0_21 = arith.constant 0 : index
    %17 = vector.load %arg7[%c48, %c0_21] : memref<216x1024xf32, #tpu.memory_space<vmem>>, vector<8x1024xf32>
    tpu.vector_store %arg7[%c48, %c0_21], %16 {strides = array<i32>} : memref<216x1024xf32, #tpu.memory_space<vmem>>, vector<8x1024xf32>,
    %c0_22 = arith.constant 0 : index
    %c21 = arith.constant 21 : index
    %18 = vector.load %arg6[%c0_22, %c21] : memref<8x1280xf32, #tpu.memory_space<vmem>>, vector<8x1024xf32>
    %c56 = arith.constant 56 : index
    %c0_23 = arith.constant 0 : index
    %19 = vector.load %arg7[%c56, %c0_23] : memref<216x1024xf32, #tpu.memory_space<vmem>>, vector<8x1024xf32>
    tpu.vector_store %arg7[%c56, %c0_23], %18 {strides = array<i32>} : memref<216x1024xf32, #tpu.memory_space<vmem>>, vector<8x1024xf32>,
    %c0_24 = arith.constant 0 : index
    %c22 = arith.constant 22 : index
    %20 = vector.load %arg6[%c0_24, %c22] : memref<8x1280xf32, #tpu.memory_space<vmem>>, vector<8x1024xf32>
    %c64 = arith.constant 64 : index
    %c0_25 = arith.constant 0 : index
    %21 = vector.load %arg7[%c64, %c0_25] : memref<216x1024xf32, #tpu.memory_space<vmem>>, vector<8x1024xf32>
    tpu.vector_store %arg7[%c64, %c0_25], %20 {strides = array<i32>} : memref<216x1024xf32, #tpu.memory_space<vmem>>, vector<8x1024xf32>,
    %c0_26 = arith.constant 0 : index
    %c100 = arith.constant 100 : index
    %22 = vector.load %arg6[%c0_26, %c100] : memref<8x1280xf32, #tpu.memory_space<vmem>>, vector<8x1024xf32>
    %c72 = arith.constant 72 : index
    %c0_27 = arith.constant 0 : index
    %23 = vector.load %arg7[%c72, %c0_27] : memref<216x1024xf32, #tpu.memory_space<vmem>>, vector<8x1024xf32>
    tpu.vector_store %arg7[%c72, %c0_27], %22 {strides = array<i32>} : memref<216x1024xf32, #tpu.memory_space<vmem>>, vector<8x1024xf32>,
    %c0_28 = arith.constant 0 : index
    %c101 = arith.constant 101 : index
    %24 = vector.load %arg6[%c0_28, %c101] : memref<8x1280xf32, #tpu.memory_space<vmem>>, vector<8x1024xf32>
    %c80 = arith.constant 80 : index
    %c0_29 = arith.constant 0 : index
    %25 = vector.load %arg7[%c80, %c0_29] : memref<216x1024xf32, #tpu.memory_space<vmem>>, vector<8x1024xf32>
    tpu.vector_store %arg7[%c80, %c0_29], %24 {strides = array<i32>} : memref<216x1024xf32, #tpu.memory_space<vmem>>, vector<8x1024xf32>,
    %c0_30 = arith.constant 0 : index
    %c102 = arith.constant 102 : index
    %26 = vector.load %arg6[%c0_30, %c102] : memref<8x1280xf32, #tpu.memory_space<vmem>>, vector<8x1024xf32>
    %c88 = arith.constant 88 : index
    %c0_31 = arith.constant 0 : index
    %27 = vector.load %arg7[%c88, %c0_31] : memref<216x1024xf32, #tpu.memory_space<vmem>>, vector<8x1024xf32>
    tpu.vector_store %arg7[%c88, %c0_31], %26 {strides = array<i32>} : memref<216x1024xf32, #tpu.memory_space<vmem>>, vector<8x1024xf32>,
    %c0_32 = arith.constant 0 : index
    %c110 = arith.constant 110 : index
    %28 = vector.load %arg6[%c0_32, %c110] : memref<8x1280xf32, #tpu.memory_space<vmem>>, vector<8x1024xf32>
    %c96 = arith.constant 96 : index
    %c0_33 = arith.constant 0 : index
    %29 = vector.load %arg7[%c96, %c0_33] : memref<216x1024xf32, #tpu.memory_space<vmem>>, vector<8x1024xf32>
    tpu.vector_store %arg7[%c96, %c0_33], %28 {strides = array<i32>} : memref<216x1024xf32, #tpu.memory_space<vmem>>, vector<8x1024xf32>,
    %c0_34 = arith.constant 0 : index
    %c111 = arith.constant 111 : index
    %30 = vector.load %arg6[%c0_34, %c111] : memref<8x1280xf32, #tpu.memory_space<vmem>>, vector<8x1024xf32>
    %c104 = arith.constant 104 : index
    %c0_35 = arith.constant 0 : index
    %31 = vector.load %arg7[%c104, %c0_35] : memref<216x1024xf32, #tpu.memory_space<vmem>>, vector<8x1024xf32>
    tpu.vector_store %arg7[%c104, %c0_35], %30 {strides = array<i32>} : memref<216x1024xf32, #tpu.memory_space<vmem>>, vector<8x1024xf32>,
    %c0_36 = arith.constant 0 : index
    %c112 = arith.constant 112 : index
    %32 = vector.load %arg6[%c0_36, %c112] : memref<8x1280xf32, #tpu.memory_space<vmem>>, vector<8x1024xf32>
    %c112_37 = arith.constant 112 : index
    %c0_38 = arith.constant 0 : index
    %33 = vector.load %arg7[%c112_37, %c0_38] : memref<216x1024xf32, #tpu.memory_space<vmem>>, vector<8x1024xf32>
    tpu.vector_store %arg7[%c112_37, %c0_38], %32 {strides = array<i32>} : memref<216x1024xf32, #tpu.memory_space<vmem>>, vector<8x1024xf32>,
    %c0_39 = arith.constant 0 : index
    %c120 = arith.constant 120 : index
    %34 = vector.load %arg6[%c0_39, %c120] : memref<8x1280xf32, #tpu.memory_space<vmem>>, vector<8x1024xf32>
    %c120_40 = arith.constant 120 : index
    %c0_41 = arith.constant 0 : index
    %35 = vector.load %arg7[%c120_40, %c0_41] : memref<216x1024xf32, #tpu.memory_space<vmem>>, vector<8x1024xf32>
    tpu.vector_store %arg7[%c120_40, %c0_41], %34 {strides = array<i32>} : memref<216x1024xf32, #tpu.memory_space<vmem>>, vector<8x1024xf32>,
    %c0_42 = arith.constant 0 : index
    %c121 = arith.constant 121 : index
    %36 = vector.load %arg6[%c0_42, %c121] : memref<8x1280xf32, #tpu.memory_space<vmem>>, vector<8x1024xf32>
    %c128 = arith.constant 128 : index
    %c0_43 = arith.constant 0 : index
    %37 = vector.load %arg7[%c128, %c0_43] : memref<216x1024xf32, #tpu.memory_space<vmem>>, vector<8x1024xf32>
    tpu.vector_store %arg7[%c128, %c0_43], %36 {strides = array<i32>} : memref<216x1024xf32, #tpu.memory_space<vmem>>, vector<8x1024xf32>,
    %c0_44 = arith.constant 0 : index
    %c122 = arith.constant 122 : index
    %38 = vector.load %arg6[%c0_44, %c122] : memref<8x1280xf32, #tpu.memory_space<vmem>>, vector<8x1024xf32>
    %c136 = arith.constant 136 : index
    %c0_45 = arith.constant 0 : index
    %39 = vector.load %arg7[%c136, %c0_45] : memref<216x1024xf32, #tpu.memory_space<vmem>>, vector<8x1024xf32>
    tpu.vector_store %arg7[%c136, %c0_45], %38 {strides = array<i32>} : memref<216x1024xf32, #tpu.memory_space<vmem>>, vector<8x1024xf32>,
    %c0_46 = arith.constant 0 : index
    %c200 = arith.constant 200 : index
    %40 = vector.load %arg6[%c0_46, %c200] : memref<8x1280xf32, #tpu.memory_space<vmem>>, vector<8x1024xf32>
    %c144 = arith.constant 144 : index
    %c0_47 = arith.constant 0 : index
    %41 = vector.load %arg7[%c144, %c0_47] : memref<216x1024xf32, #tpu.memory_space<vmem>>, vector<8x1024xf32>
    tpu.vector_store %arg7[%c144, %c0_47], %40 {strides = array<i32>} : memref<216x1024xf32, #tpu.memory_space<vmem>>, vector<8x1024xf32>,
    %c0_48 = arith.constant 0 : index
    %c201 = arith.constant 201 : index
    %42 = vector.load %arg6[%c0_48, %c201] : memref<8x1280xf32, #tpu.memory_space<vmem>>, vector<8x1024xf32>
    %c152 = arith.constant 152 : index
    %c0_49 = arith.constant 0 : index
    %43 = vector.load %arg7[%c152, %c0_49] : memref<216x1024xf32, #tpu.memory_space<vmem>>, vector<8x1024xf32>
    tpu.vector_store %arg7[%c152, %c0_49], %42 {strides = array<i32>} : memref<216x1024xf32, #tpu.memory_space<vmem>>, vector<8x1024xf32>,
    %c0_50 = arith.constant 0 : index
    %c202 = arith.constant 202 : index
    %44 = vector.load %arg6[%c0_50, %c202] : memref<8x1280xf32, #tpu.memory_space<vmem>>, vector<8x1024xf32>
    %c160 = arith.constant 160 : index
    %c0_51 = arith.constant 0 : index
    %45 = vector.load %arg7[%c160, %c0_51] : memref<216x1024xf32, #tpu.memory_space<vmem>>, vector<8x1024xf32>
    tpu.vector_store %arg7[%c160, %c0_51], %44 {strides = array<i32>} : memref<216x1024xf32, #tpu.memory_space<vmem>>, vector<8x1024xf32>,
    %c0_52 = arith.constant 0 : index
    %c210 = arith.constant 210 : index
    %46 = vector.load %arg6[%c0_52, %c210] : memref<8x1280xf32, #tpu.memory_space<vmem>>, vector<8x1024xf32>
    %c168 = arith.constant 168 : index
    %c0_53 = arith.constant 0 : index
    %47 = vector.load %arg7[%c168, %c0_53] : memref<216x1024xf32, #tpu.memory_space<vmem>>, vector<8x1024xf32>
    tpu.vector_store %arg7[%c168, %c0_53], %46 {strides = array<i32>} : memref<216x1024xf32, #tpu.memory_space<vmem>>, vector<8x1024xf32>,
    %c0_54 = arith.constant 0 : index
    %c211 = arith.constant 211 : index
    %48 = vector.load %arg6[%c0_54, %c211] : memref<8x1280xf32, #tpu.memory_space<vmem>>, vector<8x1024xf32>
    %c176 = arith.constant 176 : index
    %c0_55 = arith.constant 0 : index
    %49 = vector.load %arg7[%c176, %c0_55] : memref<216x1024xf32, #tpu.memory_space<vmem>>, vector<8x1024xf32>
    tpu.vector_store %arg7[%c176, %c0_55], %48 {strides = array<i32>} : memref<216x1024xf32, #tpu.memory_space<vmem>>, vector<8x1024xf32>,
    %c0_56 = arith.constant 0 : index
    %c212 = arith.constant 212 : index
    %50 = vector.load %arg6[%c0_56, %c212] : memref<8x1280xf32, #tpu.memory_space<vmem>>, vector<8x1024xf32>
    %c184 = arith.constant 184 : index
    %c0_57 = arith.constant 0 : index
    %51 = vector.load %arg7[%c184, %c0_57] : memref<216x1024xf32, #tpu.memory_space<vmem>>, vector<8x1024xf32>
    tpu.vector_store %arg7[%c184, %c0_57], %50 {strides = array<i32>} : memref<216x1024xf32, #tpu.memory_space<vmem>>, vector<8x1024xf32>,
    %c0_58 = arith.constant 0 : index
    %c220 = arith.constant 220 : index
    %52 = vector.load %arg6[%c0_58, %c220] : memref<8x1280xf32, #tpu.memory_space<vmem>>, vector<8x1024xf32>
    %c192 = arith.constant 192 : index
    %c0_59 = arith.constant 0 : index
    %53 = vector.load %arg7[%c192, %c0_59] : memref<216x1024xf32, #tpu.memory_space<vmem>>, vector<8x1024xf32>
    tpu.vector_store %arg7[%c192, %c0_59], %52 {strides = array<i32>} : memref<216x1024xf32, #tpu.memory_space<vmem>>, vector<8x1024xf32>,
    %c0_60 = arith.constant 0 : index
    %c221 = arith.constant 221 : index
    %54 = vector.load %arg6[%c0_60, %c221] : memref<8x1280xf32, #tpu.memory_space<vmem>>, vector<8x1024xf32>
    %c200_61 = arith.constant 200 : index
    %c0_62 = arith.constant 0 : index
    %55 = vector.load %arg7[%c200_61, %c0_62] : memref<216x1024xf32, #tpu.memory_space<vmem>>, vector<8x1024xf32>
    tpu.vector_store %arg7[%c200_61, %c0_62], %54 {strides = array<i32>} : memref<216x1024xf32, #tpu.memory_space<vmem>>, vector<8x1024xf32>,
    %c0_63 = arith.constant 0 : index
    %c222 = arith.constant 222 : index
    %56 = vector.load %arg6[%c0_63, %c222] : memref<8x1280xf32, #tpu.memory_space<vmem>>, vector<8x1024xf32>
    %c208 = arith.constant 208 : index
    %c0_64 = arith.constant 0 : index
    %57 = vector.load %arg7[%c208, %c0_64] : memref<216x1024xf32, #tpu.memory_space<vmem>>, vector<8x1024xf32>
    tpu.vector_store %arg7[%c208, %c0_64], %56 {strides = array<i32>} : memref<216x1024xf32, #tpu.memory_space<vmem>>, vector<8x1024xf32>,
    %c0_65 = arith.constant 0 : index
    %c0_66 = arith.constant 0 : index
    %58 = vector.load %arg3[%c0_65, %c0_66] : memref<8x216xf32, #tpu.memory_space<vmem>>, vector<8x216xf32>
    %c0_67 = arith.constant 0 : index
    %c0_68 = arith.constant 0 : index
    %59 = vector.load %arg7[%c0_67, %c0_68] : memref<216x1024xf32, #tpu.memory_space<vmem>>, vector<216x1024xf32>
    %cst = arith.constant dense<0.000000e+00> : vector<8x1024xf32>
    %60 = tpu.matmul %58, %59, %cst {dimension_numbers = #tpu.dot_dimension_numbers<[1], [0], [0], [1], [0, 0, 1, 1], [], []>} : vector<8x216xf32>, vector<216x1024xf32>, vector<8x1024xf32> -> vector<8x1024xf32>
    %c0_69 = arith.constant 0 : index
    %c0_70 = arith.constant 0 : index
    %61 = vector.load %arg4[%c0_69, %c0_70] : memref<8x1024xf32, #tpu.memory_space<vmem>>, vector<8x1024xf32>
    tpu.vector_store %arg4[%c0_69, %c0_70], %60 {strides = array<i32>} : memref<8x1024xf32, #tpu.memory_space<vmem>>, vector<8x1024xf32>,
    %62 = tpu.iota {dimensions = array<i32: 1>} : vector<1x1024xi32>
    %c1024_i32 = arith.constant 1024 : i32
    %63 = arith.muli %arg0, %c1024_i32 : i32
    %64 = vector.broadcast %63 : i32 to vector<1x1024xi32>
    %65 = arith.addi %62, %64 : vector<1x1024xi32>
    %c2000_i32 = arith.constant 2000 : i32
    %66 = vector.broadcast %c2000_i32 : i32 to vector<1x1024xi32>
    %67 = arith.cmpi slt, %65, %66 : vector<1x1024xi32>
    %c10_i32 = arith.constant 10 : i32
    %c0_i32 = arith.constant 0 : i32
    %68 = arith.cmpi eq, %c10_i32, %c0_i32 : i32
    %c1_i32 = arith.constant 1 : i32
    %69 = arith.select %68, %c1_i32, %c10_i32 : i32
    %70 = vector.broadcast %69 : i32 to vector<1x1024xi32>
    %71 = arith.remsi %65, %70 : vector<1x1024xi32>
    %c0_i32_71 = arith.constant 0 : i32
    %72 = vector.broadcast %c0_i32_71 : i32 to vector<1x1024xi32>
    %73 = arith.cmpi ne, %71, %72 : vector<1x1024xi32>
    %c0_i32_72 = arith.constant 0 : i32
    %74 = vector.broadcast %c0_i32_72 : i32 to vector<1x1024xi32>
    %75 = arith.cmpi slt, %71, %74 : vector<1x1024xi32>
    %c0_i32_73 = arith.constant 0 : i32
    %76 = arith.cmpi slt, %69, %c0_i32_73 : i32
    %77 = vector.broadcast %76 : i1 to vector<1x1024xi1>
    %78 = vector.broadcast %77 : vector<1x1024xi1> to vector<1x1024xi1>
    %79 = arith.xori %75, %78 : vector<1x1024xi1>
    %80 = arith.andi %79, %73 : vector<1x1024xi1>
    %81 = vector.broadcast %69 : i32 to vector<1x1024xi32>
    %82 = arith.addi %71, %81 : vector<1x1024xi32>
    %83 = arith.select %80, %82, %71 : vector<1x1024xi1>, vector<1x1024xi32>
    %c8_i32 = arith.constant 8 : i32
    %84 = vector.broadcast %c8_i32 : i32 to vector<1x1024xi32>
    %85 = arith.cmpi slt, %83, %84 : vector<1x1024xi32>
    %86 = arith.andi %67, %85 : vector<1x1024xi1>
    %c100_i32 = arith.constant 100 : i32
    %c0_i32_74 = arith.constant 0 : i32
    %87 = arith.cmpi eq, %c100_i32, %c0_i32_74 : i32
    %c1_i32_75 = arith.constant 1 : i32
    %88 = arith.select %87, %c1_i32_75, %c100_i32 : i32
    %89 = vector.broadcast %88 : i32 to vector<1x1024xi32>
    %90 = arith.remsi %65, %89 : vector<1x1024xi32>
    %c0_i32_76 = arith.constant 0 : i32
    %91 = vector.broadcast %c0_i32_76 : i32 to vector<1x1024xi32>
    %92 = arith.cmpi ne, %90, %91 : vector<1x1024xi32>
    %c0_i32_77 = arith.constant 0 : i32
    %93 = vector.broadcast %c0_i32_77 : i32 to vector<1x1024xi32>
    %94 = arith.cmpi slt, %90, %93 : vector<1x1024xi32>
    %c0_i32_78 = arith.constant 0 : i32
    %95 = arith.cmpi slt, %88, %c0_i32_78 : i32
    %96 = vector.broadcast %95 : i1 to vector<1x1024xi1>
    %97 = vector.broadcast %96 : vector<1x1024xi1> to vector<1x1024xi1>
    %98 = arith.xori %94, %97 : vector<1x1024xi1>
    %99 = arith.andi %98, %92 : vector<1x1024xi1>
    %100 = vector.broadcast %88 : i32 to vector<1x1024xi32>
    %101 = arith.addi %90, %100 : vector<1x1024xi32>
    %102 = arith.select %99, %101, %90 : vector<1x1024xi1>, vector<1x1024xi32>
    %c80_i32 = arith.constant 80 : i32
    %103 = vector.broadcast %c80_i32 : i32 to vector<1x1024xi32>
    %104 = arith.cmpi slt, %102, %103 : vector<1x1024xi32>
    %105 = arith.andi %86, %104 : vector<1x1024xi1>
    %c1000_i32 = arith.constant 1000 : i32
    %c0_i32_79 = arith.constant 0 : i32
    %106 = arith.cmpi eq, %c1000_i32, %c0_i32_79 : i32
    %c1_i32_80 = arith.constant 1 : i32
    %107 = arith.select %106, %c1_i32_80, %c1000_i32 : i32
    %108 = vector.broadcast %107 : i32 to vector<1x1024xi32>
    %109 = arith.remsi %65, %108 : vector<1x1024xi32>
    %c0_i32_81 = arith.constant 0 : i32
    %110 = vector.broadcast %c0_i32_81 : i32 to vector<1x1024xi32>
    %111 = arith.cmpi ne, %109, %110 : vector<1x1024xi32>
    %c0_i32_82 = arith.constant 0 : i32
    %112 = vector.broadcast %c0_i32_82 : i32 to vector<1x1024xi32>
    %113 = arith.cmpi slt, %109, %112 : vector<1x1024xi32>
    %c0_i32_83 = arith.constant 0 : i32
    %114 = arith.cmpi slt, %107, %c0_i32_83 : i32
    %115 = vector.broadcast %114 : i1 to vector<1x1024xi1>
    %116 = vector.broadcast %115 : vector<1x1024xi1> to vector<1x1024xi1>
    %117 = arith.xori %113, %116 : vector<1x1024xi1>
    %118 = arith.andi %117, %111 : vector<1x1024xi1>
    %119 = vector.broadcast %107 : i32 to vector<1x1024xi32>
    %120 = arith.addi %109, %119 : vector<1x1024xi32>
    %121 = arith.select %118, %120, %109 : vector<1x1024xi1>, vector<1x1024xi32>
    %c800_i32 = arith.constant 800 : i32
    %122 = vector.broadcast %c800_i32 : i32 to vector<1x1024xi32>
    %123 = arith.cmpi slt, %121, %122 : vector<1x1024xi32>
    %124 = arith.andi %105, %123 : vector<1x1024xi1>
    %125 = arith.extui %124 : vector<1x1024xi1> to vector<1x1024xi32>
    %126 = arith.sitofp %125 : vector<1x1024xi32> to vector<1x1024xf32>
    %127 = vector.broadcast %126 : vector<1x1024xf32> to vector<8x1024xf32>
    %128 = arith.mulf %60, %127 : vector<8x1024xf32>
    %cst_84 = arith.constant dense<0.000000e+00> : vector<8xf32>
    %129 = vector.multi_reduction <add>, %128, %cst_84 [1] : vector<8x1024xf32> to vector<8xf32>
    %130 = vector.shape_cast %129 : vector<8xf32> to vector<8x1xf32>
    %131 = arith.mulf %128, %60 : vector<8x1024xf32>
    %cst_85 = arith.constant dense<0.000000e+00> : vector<8xf32>
    %132 = vector.multi_reduction <add>, %131, %cst_85 [1] : vector<8x1024xf32> to vector<8xf32>
    %133 = vector.shape_cast %132 : vector<8xf32> to vector<8x1xf32>
    %134 = tpu.concatenate %130, %133 in 1 : vector<8x1xf32>, vector<8x1xf32> -> vector<8x2xf32>
    %c0_86 = arith.constant 0 : index
    %c0_87 = arith.constant 0 : index
    %c0_88 = arith.constant 0 : index
    %135 = vector.load %arg5[%c0_86, %c0_87, %c0_88] : memref<1x8x2xf32, #tpu.memory_space<vmem>>, vector<1x8x2xf32>
    %136 = vector.shape_cast %135 : vector<1x8x2xf32> to vector<8x2xf32>
    %137 = vector.shape_cast %134 : vector<8x2xf32> to vector<1x8x2xf32>
    tpu.vector_store %arg5[%c0_86, %c0_87, %c0_88], %137 {strides = array<i32>} : memref<1x8x2xf32, #tpu.memory_space<vmem>>, vector<1x8x2xf32>,
    return
  }
  func.func @transform_0(%arg0: i32) -> (i32, i32) {
    %c0_i32 = arith.constant 0 : i32
    %c0_i32_0 = arith.constant 0 : i32
    return %c0_i32, %arg0 : i32, i32
  }
  func.func @transform_1(%arg0: i32) -> (i32, i32) {
    %c1_i32 = arith.constant 1 : i32
    %0 = arith.addi %arg0, %c1_i32 : i32
    %c4_i32 = arith.constant 4 : i32
    %1 = arith.muli %0, %c4_i32 : i32
    %c0_i32 = arith.constant 0 : i32
    %c0_i32_0 = arith.constant 0 : i32
    return %c0_i32, %1 : i32, i32
  }
  func.func @transform_2(%arg0: i32) -> (i32, i32) {
    %c0_i32 = arith.constant 0 : i32
    %c0_i32_0 = arith.constant 0 : i32
    %c0_i32_1 = arith.constant 0 : i32
    return %c0_i32, %c0_i32_0 : i32, i32
  }
  func.func @transform_3(%arg0: i32) -> (i32, i32) {
    %c0_i32 = arith.constant 0 : i32
    %c0_i32_0 = arith.constant 0 : i32
    return %c0_i32, %arg0 : i32, i32
  }
  func.func @transform_4(%arg0: i32) -> (i32, i32, i32) {
    %c0_i32 = arith.constant 0 : i32
    %c0_i32_0 = arith.constant 0 : i32
    %c0_i32_1 = arith.constant 0 : i32
    return %arg0, %c0_i32, %c0_i32_0 : i32, i32, i32
  }
}

</mosaic_0001>

<llo_original>
// kernel: conv3d_block_forward.1
$region0: #{conv3d_block_forward.1}
  #allocation0 [shape = 'u32[]', space=smem, size = 0x4, offset = 0x4, fixed_abs, tag = 'smem constant byte address 0x4 - core index']
  #allocation1 [shape = 'u32[144,128]{1,0:T(1,128)}', space=vmem, size = 0x12000, scoped, tag = 'internal scratch']
  #allocation2 [shape = 'f32[8,1280]{1,0:T(8,128)}', space=vmem, size = 0xa000, scoped, tag = 'scratch operand']
  #allocation3 [shape = 'f32[216,1024]{1,0:T(8,128)}', space=vmem, size = 0xd8000, scoped, tag = 'scratch operand']
  %s0 = inlined_call_operand.vmem [shape: f32[8,2304], index: 0, kind: input, shape index: {}, may-alias: {0,1}]
  %s1 = inlined_call_operand.vmem [shape: f32[8,2304], index: 1, kind: input, shape index: {}, may-alias: {0,1}]
  %s2 = inlined_call_operand.vmem [shape: f32[8,216], index: 2, kind: input, shape index: {}]
  %s3 = inlined_call_operand.vmem [shape: f32[8,2048], index: 3, kind: output, shape index: {0}]
  %s4 = inlined_call_operand.vmem [shape: f32[2,8,2], index: 4, kind: output, shape index: {1}]
  %5 = xla_tuple %s3, %s4
  %s6 = sld [smem:[#allocation0]]
  $region53: #{conv3d_block_forward.1} parent=0
    _
  %s8 = ssub.s32 1, %s6
  %s9 = scalar_select 0, %s8, %s6
  loop: start=0, step=1, limit=4
  $region2: #{conv3d_block_forward.1} parent=0 // loop_pre_header
    _
  $region3: #{conv3d_block_forward.1} parent=0 // loop_header
    %s11 = sphi 0, %s15
    %p12 = scmp.ge.s32.totalorder %s11, 4
    %s21 = sphi 0, %s23
    %s24 = sphi 0, %s21
    %s25 = sphi 0, %s24
    %s41 = sphi 0, %s25
    %s51 = sphi 0, %s53
    %s54 = sphi 0, %s51
    %s55 = sphi 0, %s54
    %s71 = sphi 0, %s55
    %s75 = sphi 0, %s75
    %s77 = sphi 0, %s75
    %s78 = sphi 0, %s77
    %s92 = sphi 0, %s78
    %s98 = sphi 0, %s100
    %s101 = sphi 0, %s98
    %s102 = sphi 0, %s101
    %s118 = sphi 0, %s102
    %s124 = sphi 0, %s126
    %s127 = sphi 0, %s124
    %s128 = sphi 0, %s127
    %s144 = sphi 0, %s128
  $region4: #{conv3d_block_forward.1} parent=0 // loop_header_branch
    %14 = sbr.rel (%p12) target = $region8
  $region5: #{conv3d_block_forward.1} parent=0 // loop_body
    %s16 = ssub.s32 %s11, 1
    %s17 = ssub.s32 %s11, 2
    %s18 = sadd.s32 %s11, 1
    %s19 = ssub.s32 %s11, %s18
    %p20 = scmp.eq.s32.totalorder %s19, 0
    %s22 = sadd.s32 %s21, 1
    %s23 = scalar_select %p20, %s21, %s22
    %p26 = pneg %p20
    %p27 = scmp.eq.s32.totalorder %s11, 1
    %p28 = por %p26, %p27
    %p29 = scmp.ne.s32.totalorder %s21, %s24
    %p30 = scmp.eq.s32.totalorder %s11, 0
    %p31 = por %p29, %p30
    %p32 = scmp.ne.s32.totalorder %s21, %s24
    %p33 = scmp.eq.s32.totalorder %s16, 1
    %p34 = por %p32, %p33
    %p35 = scmp.ne.s32.totalorder %s24, %s25
    %p36 = scmp.eq.s32.totalorder %s16, 0
    %p37 = por %p35, %p36
    %p38 = scmp.ne.s32.totalorder %s24, %s25
    %p39 = scmp.eq.s32.totalorder %s17, 1
    %p40 = por %p38, %p39
    %p42 = scmp.ne.s32.totalorder %s25, %s41
    %p43 = scmp.eq.s32.totalorder %s17, 0
    %p44 = por %p42, %p43
    %s45 = sadd.s32 %s11, 1
    %s46 = smul.u32 %s45, 4
    %s47 = sadd.s32 %s18, 1
    %s48 = smul.u32 %s47, 4
    %s49 = ssub.s32 %s46, %s48
    %p50 = scmp.eq.s32.totalorder %s49, 0
    %s52 = sadd.s32 %s51, 1
    %s53 = scalar_select %p50, %s51, %s52
    %p56 = pneg %p50
    %p57 = scmp.eq.s32.totalorder %s11, 1
    %p58 = por %p56, %p57
    %p59 = scmp.ne.s32.totalorder %s51, %s54
    %p60 = scmp.eq.s32.totalorder %s11, 0
    %p61 = por %p59, %p60
    %p62 = scmp.ne.s32.totalorder %s51, %s54
    %p63 = scmp.eq.s32.totalorder %s16, 1
    %p64 = por %p62, %p63
    %p65 = scmp.ne.s32.totalorder %s54, %s55
    %p66 = scmp.eq.s32.totalorder %s16, 0
    %p67 = por %p65, %p66
    %p68 = scmp.ne.s32.totalorder %s54, %s55
    %p69 = scmp.eq.s32.totalorder %s17, 1
    %p70 = por %p68, %p69
    %p72 = scmp.ne.s32.totalorder %s55, %s71
    %p73 = scmp.eq.s32.totalorder %s17, 0
    %p74 = por %p72, %p73
    %s76 = sadd.s32 %s75, 1
    %p79 = scmp.eq.s32.totalorder %s11, 1
    %p80 = scmp.ne.s32.totalorder %s75, %s77
    %p81 = scmp.eq.s32.totalorder %s11, 0
    %p82 = por %p80, %p81
    %p83 = scmp.ne.s32.totalorder %s75, %s77
    %p84 = scmp.eq.s32.totalorder %s16, 1
    %p85 = por %p83, %p84
    %p86 = scmp.ne.s32.totalorder %s77, %s78
    %p87 = scmp.eq.s32.totalorder %s16, 0
    %p88 = por %p86, %p87
    %p89 = scmp.ne.s32.totalorder %s77, %s78
    %p90 = scmp.eq.s32.totalorder %s17, 1
    %p91 = por %p89, %p90
    %p93 = scmp.ne.s32.totalorder %s78, %s92
    %p94 = scmp.eq.s32.totalorder %s17, 0
    %p95 = por %p93, %p94
    %s96 = ssub.s32 %s11, %s18
    %p97 = scmp.eq.s32.totalorder %s96, 0
    %s99 = sadd.s32 %s98, 1
    %s100 = scalar_select %p97, %s98, %s99
    %p103 = pneg %p97
    %p104 = scmp.eq.s32.totalorder %s11, 1
    %p105 = por %p103, %p104
    %p106 = scmp.ne.s32.totalorder %s98, %s101
    %p107 = scmp.eq.s32.totalorder %s11, 0
    %p108 = por %p106, %p107
    %p109 = scmp.ne.s32.totalorder %s98, %s101
    %p110 = scmp.eq.s32.totalorder %s16, 1
    %p111 = por %p109, %p110
    %p112 = scmp.ne.s32.totalorder %s101, %s102
    %p113 = scmp.eq.s32.totalorder %s16, 0
    %p114 = por %p112, %p113
    %p115 = scmp.ne.s32.totalorder %s101, %s102
    %p116 = scmp.eq.s32.totalorder %s17, 1
    %p117 = por %p115, %p116
    %p119 = scmp.ne.s32.totalorder %s102, %s118
    %p120 = scmp.eq.s32.totalorder %s17, 0
    %p121 = por %p119, %p120
    %s122 = ssub.s32 %s11, %s18
    %p123 = scmp.eq.s32.totalorder %s122, 0
    %s125 = sadd.s32 %s124, 1
    %s126 = scalar_select %p123, %s124, %s125
    %p129 = pneg %p123
    %p130 = scmp.eq.s32.totalorder %s11, 1
    %p131 = por %p129, %p130
    %p132 = scmp.ne.s32.totalorder %s124, %s127
    %p133 = scmp.eq.s32.totalorder %s11, 0
    %p134 = por %p132, %p133
    %p135 = scmp.ne.s32.totalorder %s124, %s127
    %p136 = scmp.eq.s32.totalorder %s16, 1
    %p137 = por %p135, %p136
    %p138 = scmp.ne.s32.totalorder %s127, %s128
    %p139 = scmp.eq.s32.totalorder %s16, 0
    %p140 = por %p138, %p139
    %p141 = scmp.ne.s32.totalorder %s127, %s128
    %p142 = scmp.eq.s32.totalorder %s17, 1
    %p143 = por %p141, %p142
    %p145 = scmp.ne.s32.totalorder %s128, %s144
    %p146 = scmp.eq.s32.totalorder %s17, 0
    %p147 = por %p145, %p146
    %p148 = scmp.le.s32.totalorder 1, %s11
    %p149 = scmp.lt.s32.totalorder %s11, 3
    %p150 = pnand %p148, %p149
    %p151 = pneg %p150
    // Predicated region
    $region9: #{conv3d_block_forward.1} parent=5 // pred_check
      _
    $region10: #{conv3d_block_forward.1} parent=5 // pred_check_branch
      %153 = sbr.rel (%p150) target = $region12
    $region11: #{conv3d_block_forward.1} parent=5 // pred_region
      %s154 = ssub.s32 %s11, 1
      // Predicated region
      $region13: #{conv3d_block_forward.1} parent=11 // pred_check
        %p155 = pneg %p88
      $region14: #{conv3d_block_forward.1} parent=11 // pred_check_branch
        %157 = sbr.rel (%p155) target = $region16
      $region15: #{conv3d_block_forward.1} parent=11 // pred_region
        _
      $region16: #{conv3d_block_forward.1} parent=11 // pred_fallthru
        _
    $region12: #{conv3d_block_forward.1} parent=5 // pred_fallthru
      _
    %p158 = scmp.lt.s32.totalorder %s11, 2
    // Predicated region
    $region17: #{conv3d_block_forward.1} parent=5 // pred_check
      %p159 = pneg %p158
    $region18: #{conv3d_block_forward.1} parent=5 // pred_check_branch
      %161 = sbr.rel (%p159) target = $region20
    $region19: #{conv3d_block_forward.1} parent=5 // pred_region
      // Predicated region
      $region21: #{conv3d_block_forward.1} parent=19 // pred_check
        %p162 = pneg %p31
      $region22: #{conv3d_block_forward.1} parent=19 // pred_check_branch
        %164 = sbr.rel (%p162) target = $region24
      $region23: #{conv3d_block_forward.1} parent=19 // pred_region
        %s165 = smul.u32 8, %s11
        %s166 = ssub.s32 18, %s165
        %p167 = scmp.lt.s32.totalorder %s166, 8
        %s168 = scalar_select %p167, %s166, 8
        %s169 = smul.u32 128, %s168
        %p170 = scmp.lt.s32.totalorder %s165, 17
        %s171 = scalar_select %p170, %s165, 17
        %s172 = smul.addr %s171, 8
        %s173 = scalar_lea.vmem %s0, %s172
        %s174 = smul.u32 8, %s11
        %s175 = ssub.s32 18, %s174
        %p176 = scmp.lt.s32.totalorder %s175, 8
        %s177 = scalar_select %p176, %s175, 8
        %s178 = smul.u32 128, %s177
      $region24: #{conv3d_block_forward.1} parent=19 // pred_fallthru
        _
      // Predicated region
      $region25: #{conv3d_block_forward.1} parent=19 // pred_check
        %p179 = pneg %p61
      $region26: #{conv3d_block_forward.1} parent=19 // pred_check_branch
        %181 = sbr.rel (%p179) target = $region28
      $region27: #{conv3d_block_forward.1} parent=19 // pred_region
        %s182 = sadd.s32 %s11, 1
        %s183 = smul.u32 %s182, 4
        %s184 = smul.u32 2, %s183
        %p185 = scmp.lt.s32.totalorder %s184, 17
        %s186 = scalar_select %p185, %s184, 17
        %s187 = smul.addr %s186, 8
        %s188 = scalar_lea.vmem %s1, %s187
        %s189 = sadd.s32 %s11, 1
        %s190 = smul.u32 %s189, 4
        %s191 = smul.u32 2, %s190
      $region28: #{conv3d_block_forward.1} parent=19 // pred_fallthru
        _
    $region20: #{conv3d_block_forward.1} parent=5 // pred_fallthru
      _
    %p192 = scmp.le.s32.totalorder 1, %s11
    %p193 = scmp.lt.s32.totalorder %s11, 3
    %p194 = pnand %p192, %p193
    %p195 = pneg %p194
    // Predicated region
    $region29: #{conv3d_block_forward.1} parent=5 // pred_check
      _
    $region30: #{conv3d_block_forward.1} parent=5 // pred_check_branch
      %197 = sbr.rel (%p194) target = $region32
    $region31: #{conv3d_block_forward.1} parent=5 // pred_region
      %s198 = ssub.s32 %s11, 1
      %s199 = smul.u32 8, %s16
      %s200 = ssub.s32 18, %s199
      %p201 = scmp.lt.s32.totalorder %s200, 8
      %s202 = scalar_select %p201, %s200, 8
      %s203 = smul.u32 128, %s202
      %p204 = scmp.lt.s32.totalorder %s199, 17
      %s205 = scalar_select %p204, %s199, 17
      %s206 = smul.addr %s205, 8
      %s207 = scalar_lea.vmem %s0, %s206
      %p208 = pneg %p37
      %p209 = pneg %p34
      %s210 = sadd.s32 %s16, 1
      %s211 = smul.u32 %s210, 4
      %s212 = smul.u32 2, %s211
      %p213 = scmp.lt.s32.totalorder %s212, 17
      %s214 = scalar_select %p213, %s212, 17
      %s215 = smul.addr %s214, 8
      %s216 = scalar_lea.vmem %s1, %s215
      %p217 = pneg %p67
      %p218 = pneg %p64
      %p219 = pneg %p88
      %p220 = pneg %p85
      %p221 = pneg %p114
      %p222 = pneg %p111
      %s223 = smul.u32 8, %s16
      %p224 = scmp.lt.s32.totalorder %s223, 15
      %s225 = scalar_select %p224, %s223, 15
      %s226 = smul.addr %s225, 8
      %s227 = scalar_lea.vmem %s3, %s226
      %p228 = pneg %p140
      %p229 = pneg %p137
      %p230 = scmp.lt.s32.totalorder %s16, 1
      %s231 = scalar_select %p230, %s16, 1
      %s232 = smul.addr %s231, 8
      %s233 = scalar_lea.vmem %s4, %s232
      %s234 = smul.u32 8, %s16
      %s235 = ssub.s32 18, %s234
      %p236 = scmp.lt.s32.totalorder %s235, 8
      %s237 = scalar_select %p236, %s235, 8
      %s238 = smul.u32 128, %s237
      %p239 = scmp.lt.s32.totalorder %s234, 17
      %s240 = scalar_select %p239, %s234, 17
      %s241 = smul.addr %s240, 8
      %s242 = scalar_lea.vmem %s0, %s241
      %s243 = smul.u32 8, %s16
      %s244 = ssub.s32 18, %s243
      %p245 = scmp.lt.s32.totalorder %s244, 8
      %s246 = scalar_select %p245, %s244, 8
      %s247 = smul.u32 128, %s246
      %s248 = sadd.s32 %s16, 1
      %s249 = smul.u32 %s248, 4
      %s250 = smul.u32 2, %s249
      %p251 = scmp.lt.s32.totalorder %s250, 17
      %s252 = scalar_select %p251, %s250, 17
      %s253 = smul.addr %s252, 8
      %s254 = scalar_lea.vmem %s1, %s253
      %s255 = sadd.s32 %s16, 1
      %s256 = smul.u32 %s255, 4
      %s257 = smul.u32 2, %s256
      %s258 = smul.u32 8, %s16
      %p259 = scmp.lt.s32.totalorder %s258, 15
      %s260 = scalar_select %p259, %s258, 15
      %s261 = smul.addr %s260, 8
      %s262 = scalar_lea.vmem %s3, %s261
      %s263 = smul.u32 8, %s16
      %p264 = scmp.lt.s32.totalorder %s16, 1
      %s265 = scalar_select %p264, %s16, 1
      %s266 = smul.addr %s265, 8
      %s267 = scalar_lea.vmem %s4, %s266
      %v268 = vld [vmem:[%s242] sm:$0xff]
      %v269 = vld [vmem:[%s242 + $0x8] sm:$0xff]
      %v270 = vld [vmem:[%s242 + $0x10] sm:$0xff]
      %v271 = vld [vmem:[%s242 + $0x18] sm:$0xff]
      %v272 = vld [vmem:[%s242 + $0x20] sm:$0xff]
      %v273 = vld [vmem:[%s242 + $0x28] sm:$0xff]
      %v274 = vld [vmem:[%s242 + $0x30] sm:$0xff]
      %v275 = vld [vmem:[%s242 + $0x38] sm:$0xff]
      %276 = vst [vmem:[#allocation2] sm:$0xff] %v268
      %277 = vst [vmem:[#allocation2 + $0x8] sm:$0xff] %v269
      %278 = vst [vmem:[#allocation2 + $0x10] sm:$0xff] %v270
      %279 = vst [vmem:[#allocation2 + $0x18] sm:$0xff] %v271
      %280 = vst [vmem:[#allocation2 + $0x20] sm:$0xff] %v272
      %281 = vst [vmem:[#allocation2 + $0x28] sm:$0xff] %v273
      %282 = vst [vmem:[#allocation2 + $0x30] sm:$0xff] %v274
      %283 = vst [vmem:[#allocation2 + $0x38] sm:$0xff] %v275
      %v284 = vld [vmem:[%s254] sm:$0xff]
      %v285 = vld [vmem:[%s254 + $0x8] sm:$0xff]
      %286 = vst [vmem:[#allocation2 + $0x40] sm:$0xff] %v284
      %287 = vst [vmem:[#allocation2 + $0x48] sm:$0xff] %v285
      %v288 = vld [vmem:[#allocation2] sm:$0xff]
      %v289 = vld [vmem:[#allocation2 + $0x8] sm:$0xff]
      %v290 = vld [vmem:[#allocation2 + $0x10] sm:$0xff]
      %v291 = vld [vmem:[#allocation2 + $0x18] sm:$0xff]
      %v292 = vld [vmem:[#allocation2 + $0x20] sm:$0xff]
      %v293 = vld [vmem:[#allocation2 + $0x28] sm:$0xff]
      %v294 = vld [vmem:[#allocation2 + $0x30] sm:$0xff]
      %v295 = vld [vmem:[#allocation2 + $0x38] sm:$0xff]
      %296 = vst [vmem:[#allocation3] sm:$0xff] %v288
      %297 = vst [vmem:[#allocation3 + $0x8] sm:$0xff] %v289
      %298 = vst [vmem:[#allocation3 + $0x10] sm:$0xff] %v290
      %299 = vst [vmem:[#allocation3 + $0x18] sm:$0xff] %v291
      %300 = vst [vmem:[#allocation3 + $0x20] sm:$0xff] %v292
      %301 = vst [vmem:[#allocation3 + $0x28] sm:$0xff] %v293
      %302 = vst [vmem:[#allocation3 + $0x30] sm:$0xff] %v294
      %303 = vst [vmem:[#allocation3 + $0x38] sm:$0xff] %v295
      %v304 = vld [vmem:[#allocation2] sm:$0xff]
      %v305 = vld [vmem:[#allocation2 + $0x8] sm:$0xff]
      %v306 = vld [vmem:[#allocation2 + $0x10] sm:$0xff]
      %v307 = vld [vmem:[#allocation2 + $0x18] sm:$0xff]
      %v308 = vld [vmem:[#allocation2 + $0x20] sm:$0xff]
      %v309 = vld [vmem:[#allocation2 + $0x28] sm:$0xff]
      %v310 = vld [vmem:[#allocation2 + $0x30] sm:$0xff]
      %v311 = vld [vmem:[#allocation2 + $0x38] sm:$0xff]
      %v312 = vld [vmem:[#allocation2 + $0x40] sm:$0xff]
      %322 = vrot.lane.b32.xlu0 %v304, 127
      %v323 = vpop.permute.xlu0 %322
      %324 = vrot.lane.b32.xlu0 %v305, 127
      %v325 = vpop.permute.xlu0 %324
      %326 = vrot.lane.b32.xlu0 %v306, 127
      %v327 = vpop.permute.xlu0 %326
      %328 = vrot.lane.b32.xlu0 %v307, 127
      %v329 = vpop.permute.xlu0 %328
      %330 = vrot.lane.b32.xlu0 %v308, 127
      %v331 = vpop.permute.xlu0 %330
      %332 = vrot.lane.b32.xlu0 %v309, 127
      %v333 = vpop.permute.xlu0 %332
      %334 = vrot.lane.b32.xlu0 %v310, 127
      %v335 = vpop.permute.xlu0 %334
      %336 = vrot.lane.b32.xlu0 %v311, 127
      %v337 = vpop.permute.xlu0 %336
      %338 = vrot.lane.b32.xlu0 %v312, 127
      %v339 = vpop.permute.xlu0 %338
      %vm340 = vcmask 1039360
      %v341 = vsel %vm340, %v323, %v325
      %v342 = vsel %vm340, %v325, %v327
      %v343 = vsel %vm340, %v327, %v329
      %v344 = vsel %vm340, %v329, %v331
      %v345 = vsel %vm340, %v331, %v333
      %v346 = vsel %vm340, %v333, %v335
      %v347 = vsel %vm340, %v335, %v337
      %v348 = vsel %vm340, %v337, %v339
      %357 = vst [vmem:[#allocation3 + $0x40] sm:$0xff] %v341
      %358 = vst [vmem:[#allocation3 + $0x48] sm:$0xff] %v342
      %359 = vst [vmem:[#allocation3 + $0x50] sm:$0xff] %v343
      %360 = vst [vmem:[#allocation3 + $0x58] sm:$0xff] %v344
      %361 = vst [vmem:[#allocation3 + $0x60] sm:$0xff] %v345
      %362 = vst [vmem:[#allocation3 + $0x68] sm:$0xff] %v346
      %363 = vst [vmem:[#allocation3 + $0x70] sm:$0xff] %v347
      %364 = vst [vmem:[#allocation3 + $0x78] sm:$0xff] %v348
      %v365 = vld [vmem:[#allocation2] sm:$0xff]
      %v366 = vld [vmem:[#allocation2 + $0x8] sm:$0xff]
      %v367 = vld [vmem:[#allocation2 + $0x10] sm:$0xff]
      %v368 = vld [vmem:[#allocation2 + $0x18] sm:$0xff]
      %v369 = vld [vmem:[#allocation2 + $0x20] sm:$0xff]
      %v370 = vld [vmem:[#allocation2 + $0x28] sm:$0xff]
      %v371 = vld [vmem:[#allocation2 + $0x30] sm:$0xff]
      %v372 = vld [vmem:[#allocation2 + $0x38] sm:$0xff]
      %v373 = vld [vmem:[#allocation2 + $0x40] sm:$0xff]
      %383 = vrot.lane.b32.xlu0 %v365, 126
      %v384 = vpop.permute.xlu0 %383
      %385 = vrot.lane.b32.xlu0 %v366, 126
      %v386 = vpop.permute.xlu0 %385
      %387 = vrot.lane.b32.xlu0 %v367, 126
      %v388 = vpop.permute.xlu0 %387
      %389 = vrot.lane.b32.xlu0 %v368, 126
      %v390 = vpop.permute.xlu0 %389
      %391 = vrot.lane.b32.xlu0 %v369, 126
      %v392 = vpop.permute.xlu0 %391
      %393 = vrot.lane.b32.xlu0 %v370, 126
      %v394 = vpop.permute.xlu0 %393
      %395 = vrot.lane.b32.xlu0 %v371, 126
      %v396 = vpop.permute.xlu0 %395
      %397 = vrot.lane.b32.xlu0 %v372, 126
      %v398 = vpop.permute.xlu0 %397
      %399 = vrot.lane.b32.xlu0 %v373, 126
      %v400 = vpop.permute.xlu0 %399
      %vm401 = vcmask 1031168
      %v402 = vsel %vm401, %v384, %v386
      %v403 = vsel %vm401, %v386, %v388
      %v404 = vsel %vm401, %v388, %v390
      %v405 = vsel %vm401, %v390, %v392
      %v406 = vsel %vm401, %v392, %v394
      %v407 = vsel %vm401, %v394, %v396
      %v408 = vsel %vm401, %v396, %v398
      %v409 = vsel %vm401, %v398, %v400
      %418 = vst [vmem:[#allocation3 + $0x80] sm:$0xff] %v402
      %419 = vst [vmem:[#allocation3 + $0x88] sm:$0xff] %v403
      %420 = vst [vmem:[#allocation3 + $0x90] sm:$0xff] %v404
      %421 = vst [vmem:[#allocation3 + $0x98] sm:$0xff] %v405
      %422 = vst [vmem:[#allocation3 + $0xa0] sm:$0xff] %v406
      %423 = vst [vmem:[#allocation3 + $0xa8] sm:$0xff] %v407
      %424 = vst [vmem:[#allocation3 + $0xb0] sm:$0xff] %v408
      %425 = vst [vmem:[#allocation3 + $0xb8] sm:$0xff] %v409
      %v426 = vld [vmem:[#allocation2] sm:$0xff]
      %v427 = vld [vmem:[#allocation2 + $0x8] sm:$0xff]
      %v428 = vld [vmem:[#allocation2 + $0x10] sm:$0xff]
      %v429 = vld [vmem:[#allocation2 + $0x18] sm:$0xff]
      %v430 = vld [vmem:[#allocation2 + $0x20] sm:$0xff]
      %v431 = vld [vmem:[#allocation2 + $0x28] sm:$0xff]
      %v432 = vld [vmem:[#allocation2 + $0x30] sm:$0xff]
      %v433 = vld [vmem:[#allocation2 + $0x38] sm:$0xff]
      %v434 = vld [vmem:[#allocation2 + $0x40] sm:$0xff]
      %444 = vrot.lane.b32.xlu0 %v426, 118
      %v445 = vpop.permute.xlu0 %444
      %446 = vrot.lane.b32.xlu0 %v427, 118
      %v447 = vpop.permute.xlu0 %446
      %448 = vrot.lane.b32.xlu0 %v428, 118
      %v449 = vpop.permute.xlu0 %448
      %450 = vrot.lane.b32.xlu0 %v429, 118
      %v451 = vpop.permute.xlu0 %450
      %452 = vrot.lane.b32.xlu0 %v430, 118
      %v453 = vpop.permute.xlu0 %452
      %454 = vrot.lane.b32.xlu0 %v431, 118
      %v455 = vpop.permute.xlu0 %454
      %456 = vrot.lane.b32.xlu0 %v432, 118
      %v457 = vpop.permute.xlu0 %456
      %458 = vrot.lane.b32.xlu0 %v433, 118
      %v459 = vpop.permute.xlu0 %458
      %460 = vrot.lane.b32.xlu0 %v434, 118
      %v461 = vpop.permute.xlu0 %460
      %vm462 = vcmask 965632
      %v463 = vsel %vm462, %v445, %v447
      %v464 = vsel %vm462, %v447, %v449
      %v465 = vsel %vm462, %v449, %v451
      %v466 = vsel %vm462, %v451, %v453
      %v467 = vsel %vm462, %v453, %v455
      %v468 = vsel %vm462, %v455, %v457
      %v469 = vsel %vm462, %v457, %v459
      %v470 = vsel %vm462, %v459, %v461
      %479 = vst [vmem:[#allocation3 + $0xc0] sm:$0xff] %v463
      %480 = vst [vmem:[#allocation3 + $0xc8] sm:$0xff] %v464
      %481 = vst [vmem:[#allocation3 + $0xd0] sm:$0xff] %v465
      %482 = vst [vmem:[#allocation3 + $0xd8] sm:$0xff] %v466
      %483 = vst [vmem:[#allocation3 + $0xe0] sm:$0xff] %v467
      %484 = vst [vmem:[#allocation3 + $0xe8] sm:$0xff] %v468
      %485 = vst [vmem:[#allocation3 + $0xf0] sm:$0xff] %v469
      %486 = vst [vmem:[#allocation3 + $0xf8] sm:$0xff] %v470
      %v487 = vld [vmem:[#allocation2] sm:$0xff]
      %v488 = vld [vmem:[#allocation2 + $0x8] sm:$0xff]
      %v489 = vld [vmem:[#allocation2 + $0x10] sm:$0xff]
      %v490 = vld [vmem:[#allocation2 + $0x18] sm:$0xff]
      %v491 = vld [vmem:[#allocation2 + $0x20] sm:$0xff]
      %v492 = vld [vmem:[#allocation2 + $0x28] sm:$0xff]
      %v493 = vld [vmem:[#allocation2 + $0x30] sm:$0xff]
      %v494 = vld [vmem:[#allocation2 + $0x38] sm:$0xff]
      %v495 = vld [vmem:[#allocation2 + $0x40] sm:$0xff]
      %505 = vrot.lane.b32.xlu0 %v487, 117
      %v506 = vpop.permute.xlu0 %505
      %507 = vrot.lane.b32.xlu0 %v488, 117
      %v508 = vpop.permute.xlu0 %507
      %509 = vrot.lane.b32.xlu0 %v489, 117
      %v510 = vpop.permute.xlu0 %509
      %511 = vrot.lane.b32.xlu0 %v490, 117
      %v512 = vpop.permute.xlu0 %511
      %513 = vrot.lane.b32.xlu0 %v491, 117
      %v514 = vpop.permute.xlu0 %513
      %515 = vrot.lane.b32.xlu0 %v492, 117
      %v516 = vpop.permute.xlu0 %515
      %517 = vrot.lane.b32.xlu0 %v493, 117
      %v518 = vpop.permute.xlu0 %517
      %519 = vrot.lane.b32.xlu0 %v494, 117
      %v520 = vpop.permute.xlu0 %519
      %521 = vrot.lane.b32.xlu0 %v495, 117
      %v522 = vpop.permute.xlu0 %521
      %vm523 = vcmask 957440
      %v524 = vsel %vm523, %v506, %v508
      %v525 = vsel %vm523, %v508, %v510
      %v526 = vsel %vm523, %v510, %v512
      %v527 = vsel %vm523, %v512, %v514
      %v528 = vsel %vm523, %v514, %v516
      %v529 = vsel %vm523, %v516, %v518
      %v530 = vsel %vm523, %v518, %v520
      %v531 = vsel %vm523, %v520, %v522
      %540 = vst [vmem:[#allocation3 + $0x100] sm:$0xff] %v524
      %541 = vst [vmem:[#allocation3 + $0x108] sm:$0xff] %v525
      %542 = vst [vmem:[#allocation3 + $0x110] sm:$0xff] %v526
      %543 = vst [vmem:[#allocation3 + $0x118] sm:$0xff] %v527
      %544 = vst [vmem:[#allocation3 + $0x120] sm:$0xff] %v528
      %545 = vst [vmem:[#allocation3 + $0x128] sm:$0xff] %v529
      %546 = vst [vmem:[#allocation3 + $0x130] sm:$0xff] %v530
      %547 = vst [vmem:[#allocation3 + $0x138] sm:$0xff] %v531
      %v548 = vld [vmem:[#allocation2] sm:$0xff]
      %v549 = vld [vmem:[#allocation2 + $0x8] sm:$0xff]
      %v550 = vld [vmem:[#allocation2 + $0x10] sm:$0xff]
      %v551 = vld [vmem:[#allocation2 + $0x18] sm:$0xff]
      %v552 = vld [vmem:[#allocation2 + $0x20] sm:$0xff]
      %v553 = vld [vmem:[#allocation2 + $0x28] sm:$0xff]
      %v554 = vld [vmem:[#allocation2 + $0x30] sm:$0xff]
      %v555 = vld [vmem:[#allocation2 + $0x38] sm:$0xff]
      %v556 = vld [vmem:[#allocation2 + $0x40] sm:$0xff]
      %566 = vrot.lane.b32.xlu0 %v548, 116
      %v567 = vpop.permute.xlu0 %566
      %568 = vrot.lane.b32.xlu0 %v549, 116
      %v569 = vpop.permute.xlu0 %568
      %570 = vrot.lane.b32.xlu0 %v550, 116
      %v571 = vpop.permute.xlu0 %570
      %572 = vrot.lane.b32.xlu0 %v551, 116
      %v573 = vpop.permute.xlu0 %572
      %574 = vrot.lane.b32.xlu0 %v552, 116
      %v575 = vpop.permute.xlu0 %574
      %576 = vrot.lane.b32.xlu0 %v553, 116
      %v577 = vpop.permute.xlu0 %576
      %578 = vrot.lane.b32.xlu0 %v554, 116
      %v579 = vpop.permute.xlu0 %578
      %580 = vrot.lane.b32.xlu0 %v555, 116
      %v581 = vpop.permute.xlu0 %580
      %582 = vrot.lane.b32.xlu0 %v556, 116
      %v583 = vpop.permute.xlu0 %582
      %vm584 = vcmask 949248
      %v585 = vsel %vm584, %v567, %v569
      %v586 = vsel %vm584, %v569, %v571
      %v587 = vsel %vm584, %v571, %v573
      %v588 = vsel %vm584, %v573, %v575
      %v589 = vsel %vm584, %v575, %v577
      %v590 = vsel %vm584, %v577, %v579
      %v591 = vsel %vm584, %v579, %v581
      %v592 = vsel %vm584, %v581, %v583
      %601 = vst [vmem:[#allocation3 + $0x140] sm:$0xff] %v585
      %602 = vst [vmem:[#allocation3 + $0x148] sm:$0xff] %v586
      %603 = vst [vmem:[#allocation3 + $0x150] sm:$0xff] %v587
      %604 = vst [vmem:[#allocation3 + $0x158] sm:$0xff] %v588
      %605 = vst [vmem:[#allocation3 + $0x160] sm:$0xff] %v589
      %606 = vst [vmem:[#allocation3 + $0x168] sm:$0xff] %v590
      %607 = vst [vmem:[#allocation3 + $0x170] sm:$0xff] %v591
      %608 = vst [vmem:[#allocation3 + $0x178] sm:$0xff] %v592
      %v609 = vld [vmem:[#allocation2] sm:$0xff]
      %v610 = vld [vmem:[#allocation2 + $0x8] sm:$0xff]
      %v611 = vld [vmem:[#allocation2 + $0x10] sm:$0xff]
      %v612 = vld [vmem:[#allocation2 + $0x18] sm:$0xff]
      %v613 = vld [vmem:[#allocation2 + $0x20] sm:$0xff]
      %v614 = vld [vmem:[#allocation2 + $0x28] sm:$0xff]
      %v615 = vld [vmem:[#allocation2 + $0x30] sm:$0xff]
      %v616 = vld [vmem:[#allocation2 + $0x38] sm:$0xff]
      %v617 = vld [vmem:[#allocation2 + $0x40] sm:$0xff]
      %627 = vrot.lane.b32.xlu0 %v609, 108
      %v628 = vpop.permute.xlu0 %627
      %629 = vrot.lane.b32.xlu0 %v610, 108
      %v630 = vpop.permute.xlu0 %629
      %631 = vrot.lane.b32.xlu0 %v611, 108
      %v632 = vpop.permute.xlu0 %631
      %633 = vrot.lane.b32.xlu0 %v612, 108
      %v634 = vpop.permute.xlu0 %633
      %635 = vrot.lane.b32.xlu0 %v613, 108
      %v636 = vpop.permute.xlu0 %635
      %637 = vrot.lane.b32.xlu0 %v614, 108
      %v638 = vpop.permute.xlu0 %637
      %639 = vrot.lane.b32.xlu0 %v615, 108
      %v640 = vpop.permute.xlu0 %639
      %641 = vrot.lane.b32.xlu0 %v616, 108
      %v642 = vpop.permute.xlu0 %641
      %643 = vrot.lane.b32.xlu0 %v617, 108
      %v644 = vpop.permute.xlu0 %643
      %vm645 = vcmask 883712
      %v646 = vsel %vm645, %v628, %v630
      %v647 = vsel %vm645, %v630, %v632
      %v648 = vsel %vm645, %v632, %v634
      %v649 = vsel %vm645, %v634, %v636
      %v650 = vsel %vm645, %v636, %v638
      %v651 = vsel %vm645, %v638, %v640
      %v652 = vsel %vm645, %v640, %v642
      %v653 = vsel %vm645, %v642, %v644
      %662 = vst [vmem:[#allocation3 + $0x180] sm:$0xff] %v646
      %663 = vst [vmem:[#allocation3 + $0x188] sm:$0xff] %v647
      %664 = vst [vmem:[#allocation3 + $0x190] sm:$0xff] %v648
      %665 = vst [vmem:[#allocation3 + $0x198] sm:$0xff] %v649
      %666 = vst [vmem:[#allocation3 + $0x1a0] sm:$0xff] %v650
      %667 = vst [vmem:[#allocation3 + $0x1a8] sm:$0xff] %v651
      %668 = vst [vmem:[#allocation3 + $0x1b0] sm:$0xff] %v652
      %669 = vst [vmem:[#allocation3 + $0x1b8] sm:$0xff] %v653
      %v670 = vld [vmem:[#allocation2] sm:$0xff]
      %v671 = vld [vmem:[#allocation2 + $0x8] sm:$0xff]
      %v672 = vld [vmem:[#allocation2 + $0x10] sm:$0xff]
      %v673 = vld [vmem:[#allocation2 + $0x18] sm:$0xff]
      %v674 = vld [vmem:[#allocation2 + $0x20] sm:$0xff]
      %v675 = vld [vmem:[#allocation2 + $0x28] sm:$0xff]
      %v676 = vld [vmem:[#allocation2 + $0x30] sm:$0xff]
      %v677 = vld [vmem:[#allocation2 + $0x38] sm:$0xff]
      %v678 = vld [vmem:[#allocation2 + $0x40] sm:$0xff]
      %688 = vrot.lane.b32.xlu0 %v670, 107
      %v689 = vpop.permute.xlu0 %688
      %690 = vrot.lane.b32.xlu0 %v671, 107
      %v691 = vpop.permute.xlu0 %690
      %692 = vrot.lane.b32.xlu0 %v672, 107
      %v693 = vpop.permute.xlu0 %692
      %694 = vrot.lane.b32.xlu0 %v673, 107
      %v695 = vpop.permute.xlu0 %694
      %696 = vrot.lane.b32.xlu0 %v674, 107
      %v697 = vpop.permute.xlu0 %696
      %698 = vrot.lane.b32.xlu0 %v675, 107
      %v699 = vpop.permute.xlu0 %698
      %700 = vrot.lane.b32.xlu0 %v676, 107
      %v701 = vpop.permute.xlu0 %700
      %702 = vrot.lane.b32.xlu0 %v677, 107
      %v703 = vpop.permute.xlu0 %702
      %704 = vrot.lane.b32.xlu0 %v678, 107
      %v705 = vpop.permute.xlu0 %704
      %vm706 = vcmask 875520
      %v707 = vsel %vm706, %v689, %v691
      %v708 = vsel %vm706, %v691, %v693
      %v709 = vsel %vm706, %v693, %v695
      %v710 = vsel %vm706, %v695, %v697
      %v711 = vsel %vm706, %v697, %v699
      %v712 = vsel %vm706, %v699, %v701
      %v713 = vsel %vm706, %v701, %v703
      %v714 = vsel %vm706, %v703, %v705
      %723 = vst [vmem:[#allocation3 + $0x1c0] sm:$0xff] %v707
      %724 = vst [vmem:[#allocation3 + $0x1c8] sm:$0xff] %v708
      %725 = vst [vmem:[#allocation3 + $0x1d0] sm:$0xff] %v709
      %726 = vst [vmem:[#allocation3 + $0x1d8] sm:$0xff] %v710
      %727 = vst [vmem:[#allocation3 + $0x1e0] sm:$0xff] %v711
      %728 = vst [vmem:[#allocation3 + $0x1e8] sm:$0xff] %v712
      %729 = vst [vmem:[#allocation3 + $0x1f0] sm:$0xff] %v713
      %730 = vst [vmem:[#allocation3 + $0x1f8] sm:$0xff] %v714
      %v731 = vld [vmem:[#allocation2] sm:$0xff]
      %v732 = vld [vmem:[#allocation2 + $0x8] sm:$0xff]
      %v733 = vld [vmem:[#allocation2 + $0x10] sm:$0xff]
      %v734 = vld [vmem:[#allocation2 + $0x18] sm:$0xff]
      %v735 = vld [vmem:[#allocation2 + $0x20] sm:$0xff]
      %v736 = vld [vmem:[#allocation2 + $0x28] sm:$0xff]
      %v737 = vld [vmem:[#allocation2 + $0x30] sm:$0xff]
      %v738 = vld [vmem:[#allocation2 + $0x38] sm:$0xff]
      %v739 = vld [vmem:[#allocation2 + $0x40] sm:$0xff]
      %749 = vrot.lane.b32.xlu0 %v731, 106
      %v750 = vpop.permute.xlu0 %749
      %751 = vrot.lane.b32.xlu0 %v732, 106
      %v752 = vpop.permute.xlu0 %751
      %753 = vrot.lane.b32.xlu0 %v733, 106
      %v754 = vpop.permute.xlu0 %753
      %755 = vrot.lane.b32.xlu0 %v734, 106
      %v756 = vpop.permute.xlu0 %755
      %757 = vrot.lane.b32.xlu0 %v735, 106
      %v758 = vpop.permute.xlu0 %757
      %759 = vrot.lane.b32.xlu0 %v736, 106
      %v760 = vpop.permute.xlu0 %759
      %761 = vrot.lane.b32.xlu0 %v737, 106
      %v762 = vpop.permute.xlu0 %761
      %763 = vrot.lane.b32.xlu0 %v738, 106
      %v764 = vpop.permute.xlu0 %763
      %765 = vrot.lane.b32.xlu0 %v739, 106
      %v766 = vpop.permute.xlu0 %765
      %vm767 = vcmask 867328
      %v768 = vsel %vm767, %v750, %v752
      %v769 = vsel %vm767, %v752, %v754
      %v770 = vsel %vm767, %v754, %v756
      %v771 = vsel %vm767, %v756, %v758
      %v772 = vsel %vm767, %v758, %v760
      %v773 = vsel %vm767, %v760, %v762
      %v774 = vsel %vm767, %v762, %v764
      %v775 = vsel %vm767, %v764, %v766
      %784 = vst [vmem:[#allocation3 + $0x200] sm:$0xff] %v768
      %785 = vst [vmem:[#allocation3 + $0x208] sm:$0xff] %v769
      %786 = vst [vmem:[#allocation3 + $0x210] sm:$0xff] %v770
      %787 = vst [vmem:[#allocation3 + $0x218] sm:$0xff] %v771
      %788 = vst [vmem:[#allocation3 + $0x220] sm:$0xff] %v772
      %789 = vst [vmem:[#allocation3 + $0x228] sm:$0xff] %v773
      %790 = vst [vmem:[#allocation3 + $0x230] sm:$0xff] %v774
      %791 = vst [vmem:[#allocation3 + $0x238] sm:$0xff] %v775
      %v792 = vld [vmem:[#allocation2] sm:$0xff]
      %v793 = vld [vmem:[#allocation2 + $0x8] sm:$0xff]
      %v794 = vld [vmem:[#allocation2 + $0x10] sm:$0xff]
      %v795 = vld [vmem:[#allocation2 + $0x18] sm:$0xff]
      %v796 = vld [vmem:[#allocation2 + $0x20] sm:$0xff]
      %v797 = vld [vmem:[#allocation2 + $0x28] sm:$0xff]
      %v798 = vld [vmem:[#allocation2 + $0x30] sm:$0xff]
      %v799 = vld [vmem:[#allocation2 + $0x38] sm:$0xff]
      %v800 = vld [vmem:[#allocation2 + $0x40] sm:$0xff]
      %810 = vrot.lane.b32.xlu0 %v792, 28
      %v811 = vpop.permute.xlu0 %810
      %812 = vrot.lane.b32.xlu0 %v793, 28
      %v813 = vpop.permute.xlu0 %812
      %814 = vrot.lane.b32.xlu0 %v794, 28
      %v815 = vpop.permute.xlu0 %814
      %816 = vrot.lane.b32.xlu0 %v795, 28
      %v817 = vpop.permute.xlu0 %816
      %818 = vrot.lane.b32.xlu0 %v796, 28
      %v819 = vpop.permute.xlu0 %818
      %820 = vrot.lane.b32.xlu0 %v797, 28
      %v821 = vpop.permute.xlu0 %820
      %822 = vrot.lane.b32.xlu0 %v798, 28
      %v823 = vpop.permute.xlu0 %822
      %824 = vrot.lane.b32.xlu0 %v799, 28
      %v825 = vpop.permute.xlu0 %824
      %826 = vrot.lane.b32.xlu0 %v800, 28
      %v827 = vpop.permute.xlu0 %826
      %vm828 = vcmask 228352
      %v829 = vsel %vm828, %v811, %v813
      %v830 = vsel %vm828, %v813, %v815
      %v831 = vsel %vm828, %v815, %v817
      %v832 = vsel %vm828, %v817, %v819
      %v833 = vsel %vm828, %v819, %v821
      %v834 = vsel %vm828, %v821, %v823
      %v835 = vsel %vm828, %v823, %v825
      %v836 = vsel %vm828, %v825, %v827
      %845 = vst [vmem:[#allocation3 + $0x240] sm:$0xff] %v829
      %846 = vst [vmem:[#allocation3 + $0x248] sm:$0xff] %v830
      %847 = vst [vmem:[#allocation3 + $0x250] sm:$0xff] %v831
      %848 = vst [vmem:[#allocation3 + $0x258] sm:$0xff] %v832
      %849 = vst [vmem:[#allocation3 + $0x260] sm:$0xff] %v833
      %850 = vst [vmem:[#allocation3 + $0x268] sm:$0xff] %v834
      %851 = vst [vmem:[#allocation3 + $0x270] sm:$0xff] %v835
      %852 = vst [vmem:[#allocation3 + $0x278] sm:$0xff] %v836
      %v853 = vld [vmem:[#allocation2] sm:$0xff]
      %v854 = vld [vmem:[#allocation2 + $0x8] sm:$0xff]
      %v855 = vld [vmem:[#allocation2 + $0x10] sm:$0xff]
      %v856 = vld [vmem:[#allocation2 + $0x18] sm:$0xff]
      %v857 = vld [vmem:[#allocation2 + $0x20] sm:$0xff]
      %v858 = vld [vmem:[#allocation2 + $0x28] sm:$0xff]
      %v859 = vld [vmem:[#allocation2 + $0x30] sm:$0xff]
      %v860 = vld [vmem:[#allocation2 + $0x38] sm:$0xff]
      %v861 = vld [vmem:[#allocation2 + $0x40] sm:$0xff]
      %871 = vrot.lane.b32.xlu0 %v853, 27
      %v872 = vpop.permute.xlu0 %871
      %873 = vrot.lane.b32.xlu0 %v854, 27
      %v874 = vpop.permute.xlu0 %873
      %875 = vrot.lane.b32.xlu0 %v855, 27
      %v876 = vpop.permute.xlu0 %875
      %877 = vrot.lane.b32.xlu0 %v856, 27
      %v878 = vpop.permute.xlu0 %877
      %879 = vrot.lane.b32.xlu0 %v857, 27
      %v880 = vpop.permute.xlu0 %879
      %881 = vrot.lane.b32.xlu0 %v858, 27
      %v882 = vpop.permute.xlu0 %881
      %883 = vrot.lane.b32.xlu0 %v859, 27
      %v884 = vpop.permute.xlu0 %883
      %885 = vrot.lane.b32.xlu0 %v860, 27
      %v886 = vpop.permute.xlu0 %885
      %887 = vrot.lane.b32.xlu0 %v861, 27
      %v888 = vpop.permute.xlu0 %887
      %vm889 = vcmask 220160
      %v890 = vsel %vm889, %v872, %v874
      %v891 = vsel %vm889, %v874, %v876
      %v892 = vsel %vm889, %v876, %v878
      %v893 = vsel %vm889, %v878, %v880
      %v894 = vsel %vm889, %v880, %v882
      %v895 = vsel %vm889, %v882, %v884
      %v896 = vsel %vm889, %v884, %v886
      %v897 = vsel %vm889, %v886, %v888
      %906 = vst [vmem:[#allocation3 + $0x280] sm:$0xff] %v890
      %907 = vst [vmem:[#allocation3 + $0x288] sm:$0xff] %v891
      %908 = vst [vmem:[#allocation3 + $0x290] sm:$0xff] %v892
      %909 = vst [vmem:[#allocation3 + $0x298] sm:$0xff] %v893
      %910 = vst [vmem:[#allocation3 + $0x2a0] sm:$0xff] %v894
      %911 = vst [vmem:[#allocation3 + $0x2a8] sm:$0xff] %v895
      %912 = vst [vmem:[#allocation3 + $0x2b0] sm:$0xff] %v896
      %913 = vst [vmem:[#allocation3 + $0x2b8] sm:$0xff] %v897
      %v914 = vld [vmem:[#allocation2] sm:$0xff]
      %v915 = vld [vmem:[#allocation2 + $0x8] sm:$0xff]
      %v916 = vld [vmem:[#allocation2 + $0x10] sm:$0xff]
      %v917 = vld [vmem:[#allocation2 + $0x18] sm:$0xff]
      %v918 = vld [vmem:[#allocation2 + $0x20] sm:$0xff]
      %v919 = vld [vmem:[#allocation2 + $0x28] sm:$0xff]
      %v920 = vld [vmem:[#allocation2 + $0x30] sm:$0xff]
      %v921 = vld [vmem:[#allocation2 + $0x38] sm:$0xff]
      %v922 = vld [vmem:[#allocation2 + $0x40] sm:$0xff]
      %932 = vrot.lane.b32.xlu0 %v914, 26
      %v933 = vpop.permute.xlu0 %932
      %934 = vrot.lane.b32.xlu0 %v915, 26
      %v935 = vpop.permute.xlu0 %934
      %936 = vrot.lane.b32.xlu0 %v916, 26
      %v937 = vpop.permute.xlu0 %936
      %938 = vrot.lane.b32.xlu0 %v917, 26
      %v939 = vpop.permute.xlu0 %938
      %940 = vrot.lane.b32.xlu0 %v918, 26
      %v941 = vpop.permute.xlu0 %940
      %942 = vrot.lane.b32.xlu0 %v919, 26
      %v943 = vpop.permute.xlu0 %942
      %944 = vrot.lane.b32.xlu0 %v920, 26
      %v945 = vpop.permute.xlu0 %944
      %946 = vrot.lane.b32.xlu0 %v921, 26
      %v947 = vpop.permute.xlu0 %946
      %948 = vrot.lane.b32.xlu0 %v922, 26
      %v949 = vpop.permute.xlu0 %948
      %vm950 = vcmask 211968
      %v951 = vsel %vm950, %v933, %v935
      %v952 = vsel %vm950, %v935, %v937
      %v953 = vsel %vm950, %v937, %v939
      %v954 = vsel %vm950, %v939, %v941
      %v955 = vsel %vm950, %v941, %v943
      %v956 = vsel %vm950, %v943, %v945
      %v957 = vsel %vm950, %v945, %v947
      %v958 = vsel %vm950, %v947, %v949
      %967 = vst [vmem:[#allocation3 + $0x2c0] sm:$0xff] %v951
      %968 = vst [vmem:[#allocation3 + $0x2c8] sm:$0xff] %v952
      %969 = vst [vmem:[#allocation3 + $0x2d0] sm:$0xff] %v953
      %970 = vst [vmem:[#allocation3 + $0x2d8] sm:$0xff] %v954
      %971 = vst [vmem:[#allocation3 + $0x2e0] sm:$0xff] %v955
      %972 = vst [vmem:[#allocation3 + $0x2e8] sm:$0xff] %v956
      %973 = vst [vmem:[#allocation3 + $0x2f0] sm:$0xff] %v957
      %974 = vst [vmem:[#allocation3 + $0x2f8] sm:$0xff] %v958
      %v975 = vld [vmem:[#allocation2] sm:$0xff]
      %v976 = vld [vmem:[#allocation2 + $0x8] sm:$0xff]
      %v977 = vld [vmem:[#allocation2 + $0x10] sm:$0xff]
      %v978 = vld [vmem:[#allocation2 + $0x18] sm:$0xff]
      %v979 = vld [vmem:[#allocation2 + $0x20] sm:$0xff]
      %v980 = vld [vmem:[#allocation2 + $0x28] sm:$0xff]
      %v981 = vld [vmem:[#allocation2 + $0x30] sm:$0xff]
      %v982 = vld [vmem:[#allocation2 + $0x38] sm:$0xff]
      %v983 = vld [vmem:[#allocation2 + $0x40] sm:$0xff]
      %993 = vrot.lane.b32.xlu0 %v975, 18
      %v994 = vpop.permute.xlu0 %993
      %995 = vrot.lane.b32.xlu0 %v976, 18
      %v996 = vpop.permute.xlu0 %995
      %997 = vrot.lane.b32.xlu0 %v977, 18
      %v998 = vpop.permute.xlu0 %997
      %999 = vrot.lane.b32.xlu0 %v978, 18
      %v1000 = vpop.permute.xlu0 %999
      %1001 = vrot.lane.b32.xlu0 %v979, 18
      %v1002 = vpop.permute.xlu0 %1001
      %1003 = vrot.lane.b32.xlu0 %v980, 18
      %v1004 = vpop.permute.xlu0 %1003
      %1005 = vrot.lane.b32.xlu0 %v981, 18
      %v1006 = vpop.permute.xlu0 %1005
      %1007 = vrot.lane.b32.xlu0 %v982, 18
      %v1008 = vpop.permute.xlu0 %1007
      %1009 = vrot.lane.b32.xlu0 %v983, 18
      %v1010 = vpop.permute.xlu0 %1009
      %vm1011 = vcmask 146432
      %v1012 = vsel %vm1011, %v994, %v996
      %v1013 = vsel %vm1011, %v996, %v998
      %v1014 = vsel %vm1011, %v998, %v1000
      %v1015 = vsel %vm1011, %v1000, %v1002
      %v1016 = vsel %vm1011, %v1002, %v1004
      %v1017 = vsel %vm1011, %v1004, %v1006
      %v1018 = vsel %vm1011, %v1006, %v1008
      %v1019 = vsel %vm1011, %v1008, %v1010
      %1028 = vst [vmem:[#allocation3 + $0x300] sm:$0xff] %v1012
      %1029 = vst [vmem:[#allocation3 + $0x308] sm:$0xff] %v1013
      %1030 = vst [vmem:[#allocation3 + $0x310] sm:$0xff] %v1014
      %1031 = vst [vmem:[#allocation3 + $0x318] sm:$0xff] %v1015
      %1032 = vst [vmem:[#allocation3 + $0x320] sm:$0xff] %v1016
      %1033 = vst [vmem:[#allocation3 + $0x328] sm:$0xff] %v1017
      %1034 = vst [vmem:[#allocation3 + $0x330] sm:$0xff] %v1018
      %1035 = vst [vmem:[#allocation3 + $0x338] sm:$0xff] %v1019
      %v1036 = vld [vmem:[#allocation2] sm:$0xff]
      %v1037 = vld [vmem:[#allocation2 + $0x8] sm:$0xff]
      %v1038 = vld [vmem:[#allocation2 + $0x10] sm:$0xff]
      %v1039 = vld [vmem:[#allocation2 + $0x18] sm:$0xff]
      %v1040 = vld [vmem:[#allocation2 + $0x20] sm:$0xff]
      %v1041 = vld [vmem:[#allocation2 + $0x28] sm:$0xff]
      %v1042 = vld [vmem:[#allocation2 + $0x30] sm:$0xff]
      %v1043 = vld [vmem:[#allocation2 + $0x38] sm:$0xff]
      %v1044 = vld [vmem:[#allocation2 + $0x40] sm:$0xff]
      %1054 = vrot.lane.b32.xlu0 %v1036, 17
      %v1055 = vpop.permute.xlu0 %1054
      %1056 = vrot.lane.b32.xlu0 %v1037, 17
      %v1057 = vpop.permute.xlu0 %1056
      %1058 = vrot.lane.b32.xlu0 %v1038, 17
      %v1059 = vpop.permute.xlu0 %1058
      %1060 = vrot.lane.b32.xlu0 %v1039, 17
      %v1061 = vpop.permute.xlu0 %1060
      %1062 = vrot.lane.b32.xlu0 %v1040, 17
      %v1063 = vpop.permute.xlu0 %1062
      %1064 = vrot.lane.b32.xlu0 %v1041, 17
      %v1065 = vpop.permute.xlu0 %1064
      %1066 = vrot.lane.b32.xlu0 %v1042, 17
      %v1067 = vpop.permute.xlu0 %1066
      %1068 = vrot.lane.b32.xlu0 %v1043, 17
      %v1069 = vpop.permute.xlu0 %1068
      %1070 = vrot.lane.b32.xlu0 %v1044, 17
      %v1071 = vpop.permute.xlu0 %1070
      %vm1072 = vcmask 138240
      %v1073 = vsel %vm1072, %v1055, %v1057
      %v1074 = vsel %vm1072, %v1057, %v1059
      %v1075 = vsel %vm1072, %v1059, %v1061
      %v1076 = vsel %vm1072, %v1061, %v1063
      %v1077 = vsel %vm1072, %v1063, %v1065
      %v1078 = vsel %vm1072, %v1065, %v1067
      %v1079 = vsel %vm1072, %v1067, %v1069
      %v1080 = vsel %vm1072, %v1069, %v1071
      %1089 = vst [vmem:[#allocation3 + $0x340] sm:$0xff] %v1073
      %1090 = vst [vmem:[#allocation3 + $0x348] sm:$0xff] %v1074
      %1091 = vst [vmem:[#allocation3 + $0x350] sm:$0xff] %v1075
      %1092 = vst [vmem:[#allocation3 + $0x358] sm:$0xff] %v1076
      %1093 = vst [vmem:[#allocation3 + $0x360] sm:$0xff] %v1077
      %1094 = vst [vmem:[#allocation3 + $0x368] sm:$0xff] %v1078
      %1095 = vst [vmem:[#allocation3 + $0x370] sm:$0xff] %v1079
      %1096 = vst [vmem:[#allocation3 + $0x378] sm:$0xff] %v1080
      %v1097 = vld [vmem:[#allocation2] sm:$0xff]
      %v1098 = vld [vmem:[#allocation2 + $0x8] sm:$0xff]
      %v1099 = vld [vmem:[#allocation2 + $0x10] sm:$0xff]
      %v1100 = vld [vmem:[#allocation2 + $0x18] sm:$0xff]
      %v1101 = vld [vmem:[#allocation2 + $0x20] sm:$0xff]
      %v1102 = vld [vmem:[#allocation2 + $0x28] sm:$0xff]
      %v1103 = vld [vmem:[#allocation2 + $0x30] sm:$0xff]
      %v1104 = vld [vmem:[#allocation2 + $0x38] sm:$0xff]
      %v1105 = vld [vmem:[#allocation2 + $0x40] sm:$0xff]
      %1115 = vrot.lane.b32.xlu0 %v1097, 16
      %v1116 = vpop.permute.xlu0 %1115
      %1117 = vrot.lane.b32.xlu0 %v1098, 16
      %v1118 = vpop.permute.xlu0 %1117
      %1119 = vrot.lane.b32.xlu0 %v1099, 16
      %v1120 = vpop.permute.xlu0 %1119
      %1121 = vrot.lane.b32.xlu0 %v1100, 16
      %v1122 = vpop.permute.xlu0 %1121
      %1123 = vrot.lane.b32.xlu0 %v1101, 16
      %v1124 = vpop.permute.xlu0 %1123
      %1125 = vrot.lane.b32.xlu0 %v1102, 16
      %v1126 = vpop.permute.xlu0 %1125
      %1127 = vrot.lane.b32.xlu0 %v1103, 16
      %v1128 = vpop.permute.xlu0 %1127
      %1129 = vrot.lane.b32.xlu0 %v1104, 16
      %v1130 = vpop.permute.xlu0 %1129
      %1131 = vrot.lane.b32.xlu0 %v1105, 16
      %v1132 = vpop.permute.xlu0 %1131
      %vm1133 = vcmask 130048
      %v1134 = vsel %vm1133, %v1116, %v1118
      %v1135 = vsel %vm1133, %v1118, %v1120
      %v1136 = vsel %vm1133, %v1120, %v1122
      %v1137 = vsel %vm1133, %v1122, %v1124
      %v1138 = vsel %vm1133, %v1124, %v1126
      %v1139 = vsel %vm1133, %v1126, %v1128
      %v1140 = vsel %vm1133, %v1128, %v1130
      %v1141 = vsel %vm1133, %v1130, %v1132
      %1150 = vst [vmem:[#allocation3 + $0x380] sm:$0xff] %v1134
      %1151 = vst [vmem:[#allocation3 + $0x388] sm:$0xff] %v1135
      %1152 = vst [vmem:[#allocation3 + $0x390] sm:$0xff] %v1136
      %1153 = vst [vmem:[#allocation3 + $0x398] sm:$0xff] %v1137
      %1154 = vst [vmem:[#allocation3 + $0x3a0] sm:$0xff] %v1138
      %1155 = vst [vmem:[#allocation3 + $0x3a8] sm:$0xff] %v1139
      %1156 = vst [vmem:[#allocation3 + $0x3b0] sm:$0xff] %v1140
      %1157 = vst [vmem:[#allocation3 + $0x3b8] sm:$0xff] %v1141
      %v1158 = vld [vmem:[#allocation2] sm:$0xff]
      %v1159 = vld [vmem:[#allocation2 + $0x8] sm:$0xff]
      %v1160 = vld [vmem:[#allocation2 + $0x10] sm:$0xff]
      %v1161 = vld [vmem:[#allocation2 + $0x18] sm:$0xff]
      %v1162 = vld [vmem:[#allocation2 + $0x20] sm:$0xff]
      %v1163 = vld [vmem:[#allocation2 + $0x28] sm:$0xff]
      %v1164 = vld [vmem:[#allocation2 + $0x30] sm:$0xff]
      %v1165 = vld [vmem:[#allocation2 + $0x38] sm:$0xff]
      %v1166 = vld [vmem:[#allocation2 + $0x40] sm:$0xff]
      %1176 = vrot.lane.b32.xlu0 %v1158, 8
      %v1177 = vpop.permute.xlu0 %1176
      %1178 = vrot.lane.b32.xlu0 %v1159, 8
      %v1179 = vpop.permute.xlu0 %1178
      %1180 = vrot.lane.b32.xlu0 %v1160, 8
      %v1181 = vpop.permute.xlu0 %1180
      %1182 = vrot.lane.b32.xlu0 %v1161, 8
      %v1183 = vpop.permute.xlu0 %1182
      %1184 = vrot.lane.b32.xlu0 %v1162, 8
      %v1185 = vpop.permute.xlu0 %1184
      %1186 = vrot.lane.b32.xlu0 %v1163, 8
      %v1187 = vpop.permute.xlu0 %1186
      %1188 = vrot.lane.b32.xlu0 %v1164, 8
      %v1189 = vpop.permute.xlu0 %1188
      %1190 = vrot.lane.b32.xlu0 %v1165, 8
      %v1191 = vpop.permute.xlu0 %1190
      %1192 = vrot.lane.b32.xlu0 %v1166, 8
      %v1193 = vpop.permute.xlu0 %1192
      %vm1194 = vcmask 64512
      %v1195 = vsel %vm1194, %v1177, %v1179
      %v1196 = vsel %vm1194, %v1179, %v1181
      %v1197 = vsel %vm1194, %v1181, %v1183
      %v1198 = vsel %vm1194, %v1183, %v1185
      %v1199 = vsel %vm1194, %v1185, %v1187
      %v1200 = vsel %vm1194, %v1187, %v1189
      %v1201 = vsel %vm1194, %v1189, %v1191
      %v1202 = vsel %vm1194, %v1191, %v1193
      %1211 = vst [vmem:[#allocation3 + $0x3c0] sm:$0xff] %v1195
      %1212 = vst [vmem:[#allocation3 + $0x3c8] sm:$0xff] %v1196
      %1213 = vst [vmem:[#allocation3 + $0x3d0] sm:$0xff] %v1197
      %1214 = vst [vmem:[#allocation3 + $0x3d8] sm:$0xff] %v1198
      %1215 = vst [vmem:[#allocation3 + $0x3e0] sm:$0xff] %v1199
      %1216 = vst [vmem:[#allocation3 + $0x3e8] sm:$0xff] %v1200
      %1217 = vst [vmem:[#allocation3 + $0x3f0] sm:$0xff] %v1201
      %1218 = vst [vmem:[#allocation3 + $0x3f8] sm:$0xff] %v1202
      %v1219 = vld [vmem:[#allocation2] sm:$0xff]
      %v1220 = vld [vmem:[#allocation2 + $0x8] sm:$0xff]
      %v1221 = vld [vmem:[#allocation2 + $0x10] sm:$0xff]
      %v1222 = vld [vmem:[#allocation2 + $0x18] sm:$0xff]
      %v1223 = vld [vmem:[#allocation2 + $0x20] sm:$0xff]
      %v1224 = vld [vmem:[#allocation2 + $0x28] sm:$0xff]
      %v1225 = vld [vmem:[#allocation2 + $0x30] sm:$0xff]
      %v1226 = vld [vmem:[#allocation2 + $0x38] sm:$0xff]
      %v1227 = vld [vmem:[#allocation2 + $0x40] sm:$0xff]
      %1237 = vrot.lane.b32.xlu0 %v1219, 7
      %v1238 = vpop.permute.xlu0 %1237
      %1239 = vrot.lane.b32.xlu0 %v1220, 7
      %v1240 = vpop.permute.xlu0 %1239
      %1241 = vrot.lane.b32.xlu0 %v1221, 7
      %v1242 = vpop.permute.xlu0 %1241
      %1243 = vrot.lane.b32.xlu0 %v1222, 7
      %v1244 = vpop.permute.xlu0 %1243
      %1245 = vrot.lane.b32.xlu0 %v1223, 7
      %v1246 = vpop.permute.xlu0 %1245
      %1247 = vrot.lane.b32.xlu0 %v1224, 7
      %v1248 = vpop.permute.xlu0 %1247
      %1249 = vrot.lane.b32.xlu0 %v1225, 7
      %v1250 = vpop.permute.xlu0 %1249
      %1251 = vrot.lane.b32.xlu0 %v1226, 7
      %v1252 = vpop.permute.xlu0 %1251
      %1253 = vrot.lane.b32.xlu0 %v1227, 7
      %v1254 = vpop.permute.xlu0 %1253
      %vm1255 = vcmask 56320
      %v1256 = vsel %vm1255, %v1238, %v1240
      %v1257 = vsel %vm1255, %v1240, %v1242
      %v1258 = vsel %vm1255, %v1242, %v1244
      %v1259 = vsel %vm1255, %v1244, %v1246
      %v1260 = vsel %vm1255, %v1246, %v1248
      %v1261 = vsel %vm1255, %v1248, %v1250
      %v1262 = vsel %vm1255, %v1250, %v1252
      %v1263 = vsel %vm1255, %v1252, %v1254
      %1272 = vst [vmem:[#allocation3 + $0x400] sm:$0xff] %v1256
      %1273 = vst [vmem:[#allocation3 + $0x408] sm:$0xff] %v1257
      %1274 = vst [vmem:[#allocation3 + $0x410] sm:$0xff] %v1258
      %1275 = vst [vmem:[#allocation3 + $0x418] sm:$0xff] %v1259
      %1276 = vst [vmem:[#allocation3 + $0x420] sm:$0xff] %v1260
      %1277 = vst [vmem:[#allocation3 + $0x428] sm:$0xff] %v1261
      %1278 = vst [vmem:[#allocation3 + $0x430] sm:$0xff] %v1262
      %1279 = vst [vmem:[#allocation3 + $0x438] sm:$0xff] %v1263
      %v1280 = vld [vmem:[#allocation2] sm:$0xff]
      %v1281 = vld [vmem:[#allocation2 + $0x8] sm:$0xff]
      %v1282 = vld [vmem:[#allocation2 + $0x10] sm:$0xff]
      %v1283 = vld [vmem:[#allocation2 + $0x18] sm:$0xff]
      %v1284 = vld [vmem:[#allocation2 + $0x20] sm:$0xff]
      %v1285 = vld [vmem:[#allocation2 + $0x28] sm:$0xff]
      %v1286 = vld [vmem:[#allocation2 + $0x30] sm:$0xff]
      %v1287 = vld [vmem:[#allocation2 + $0x38] sm:$0xff]
      %v1288 = vld [vmem:[#allocation2 + $0x40] sm:$0xff]
      %1298 = vrot.lane.b32.xlu0 %v1280, 6
      %v1299 = vpop.permute.xlu0 %1298
      %1300 = vrot.lane.b32.xlu0 %v1281, 6
      %v1301 = vpop.permute.xlu0 %1300
      %1302 = vrot.lane.b32.xlu0 %v1282, 6
      %v1303 = vpop.permute.xlu0 %1302
      %1304 = vrot.lane.b32.xlu0 %v1283, 6
      %v1305 = vpop.permute.xlu0 %1304
      %1306 = vrot.lane.b32.xlu0 %v1284, 6
      %v1307 = vpop.permute.xlu0 %1306
      %1308 = vrot.lane.b32.xlu0 %v1285, 6
      %v1309 = vpop.permute.xlu0 %1308
      %1310 = vrot.lane.b32.xlu0 %v1286, 6
      %v1311 = vpop.permute.xlu0 %1310
      %1312 = vrot.lane.b32.xlu0 %v1287, 6
      %v1313 = vpop.permute.xlu0 %1312
      %1314 = vrot.lane.b32.xlu0 %v1288, 6
      %v1315 = vpop.permute.xlu0 %1314
      %vm1316 = vcmask 48128
      %v1317 = vsel %vm1316, %v1299, %v1301
      %v1318 = vsel %vm1316, %v1301, %v1303
      %v1319 = vsel %vm1316, %v1303, %v1305
      %v1320 = vsel %vm1316, %v1305, %v1307
      %v1321 = vsel %vm1316, %v1307, %v1309
      %v1322 = vsel %vm1316, %v1309, %v1311
      %v1323 = vsel %vm1316, %v1311, %v1313
      %v1324 = vsel %vm1316, %v1313, %v1315
      %1333 = vst [vmem:[#allocation3 + $0x440] sm:$0xff] %v1317
      %1334 = vst [vmem:[#allocation3 + $0x448] sm:$0xff] %v1318
      %1335 = vst [vmem:[#allocation3 + $0x450] sm:$0xff] %v1319
      %1336 = vst [vmem:[#allocation3 + $0x458] sm:$0xff] %v1320
      %1337 = vst [vmem:[#allocation3 + $0x460] sm:$0xff] %v1321
      %1338 = vst [vmem:[#allocation3 + $0x468] sm:$0xff] %v1322
      %1339 = vst [vmem:[#allocation3 + $0x470] sm:$0xff] %v1323
      %1340 = vst [vmem:[#allocation3 + $0x478] sm:$0xff] %v1324
      %v1341 = vld [vmem:[#allocation2 + $0x8] sm:$0xff]
      %v1342 = vld [vmem:[#allocation2 + $0x10] sm:$0xff]
      %v1343 = vld [vmem:[#allocation2 + $0x18] sm:$0xff]
      %v1344 = vld [vmem:[#allocation2 + $0x20] sm:$0xff]
      %v1345 = vld [vmem:[#allocation2 + $0x28] sm:$0xff]
      %v1346 = vld [vmem:[#allocation2 + $0x30] sm:$0xff]
      %v1347 = vld [vmem:[#allocation2 + $0x38] sm:$0xff]
      %v1348 = vld [vmem:[#allocation2 + $0x40] sm:$0xff]
      %v1349 = vld [vmem:[#allocation2 + $0x48] sm:$0xff]
      %1359 = vrot.lane.b32.xlu0 %v1341, 56
      %v1360 = vpop.permute.xlu0 %1359
      %1361 = vrot.lane.b32.xlu0 %v1342, 56
      %v1362 = vpop.permute.xlu0 %1361
      %1363 = vrot.lane.b32.xlu0 %v1343, 56
      %v1364 = vpop.permute.xlu0 %1363
      %1365 = vrot.lane.b32.xlu0 %v1344, 56
      %v1366 = vpop.permute.xlu0 %1365
      %1367 = vrot.lane.b32.xlu0 %v1345, 56
      %v1368 = vpop.permute.xlu0 %1367
      %1369 = vrot.lane.b32.xlu0 %v1346, 56
      %v1370 = vpop.permute.xlu0 %1369
      %1371 = vrot.lane.b32.xlu0 %v1347, 56
      %v1372 = vpop.permute.xlu0 %1371
      %1373 = vrot.lane.b32.xlu0 %v1348, 56
      %v1374 = vpop.permute.xlu0 %1373
      %1375 = vrot.lane.b32.xlu0 %v1349, 56
      %v1376 = vpop.permute.xlu0 %1375
      %vm1377 = vcmask 457728
      %v1378 = vsel %vm1377, %v1360, %v1362
      %v1379 = vsel %vm1377, %v1362, %v1364
      %v1380 = vsel %vm1377, %v1364, %v1366
      %v1381 = vsel %vm1377, %v1366, %v1368
      %v1382 = vsel %vm1377, %v1368, %v1370
      %v1383 = vsel %vm1377, %v1370, %v1372
      %v1384 = vsel %vm1377, %v1372, %v1374
      %v1385 = vsel %vm1377, %v1374, %v1376
      %1394 = vst [vmem:[#allocation3 + $0x480] sm:$0xff] %v1378
      %1395 = vst [vmem:[#allocation3 + $0x488] sm:$0xff] %v1379
      %1396 = vst [vmem:[#allocation3 + $0x490] sm:$0xff] %v1380
      %1397 = vst [vmem:[#allocation3 + $0x498] sm:$0xff] %v1381
      %1398 = vst [vmem:[#allocation3 + $0x4a0] sm:$0xff] %v1382
      %1399 = vst [vmem:[#allocation3 + $0x4a8] sm:$0xff] %v1383
      %1400 = vst [vmem:[#allocation3 + $0x4b0] sm:$0xff] %v1384
      %1401 = vst [vmem:[#allocation3 + $0x4b8] sm:$0xff] %v1385
      %v1402 = vld [vmem:[#allocation2 + $0x8] sm:$0xff]
      %v1403 = vld [vmem:[#allocation2 + $0x10] sm:$0xff]
      %v1404 = vld [vmem:[#allocation2 + $0x18] sm:$0xff]
      %v1405 = vld [vmem:[#allocation2 + $0x20] sm:$0xff]
      %v1406 = vld [vmem:[#allocation2 + $0x28] sm:$0xff]
      %v1407 = vld [vmem:[#allocation2 + $0x30] sm:$0xff]
      %v1408 = vld [vmem:[#allocation2 + $0x38] sm:$0xff]
      %v1409 = vld [vmem:[#allocation2 + $0x40] sm:$0xff]
      %v1410 = vld [vmem:[#allocation2 + $0x48] sm:$0xff]
      %1420 = vrot.lane.b32.xlu0 %v1402, 55
      %v1421 = vpop.permute.xlu0 %1420
      %1422 = vrot.lane.b32.xlu0 %v1403, 55
      %v1423 = vpop.permute.xlu0 %1422
      %1424 = vrot.lane.b32.xlu0 %v1404, 55
      %v1425 = vpop.permute.xlu0 %1424
      %1426 = vrot.lane.b32.xlu0 %v1405, 55
      %v1427 = vpop.permute.xlu0 %1426
      %1428 = vrot.lane.b32.xlu0 %v1406, 55
      %v1429 = vpop.permute.xlu0 %1428
      %1430 = vrot.lane.b32.xlu0 %v1407, 55
      %v1431 = vpop.permute.xlu0 %1430
      %1432 = vrot.lane.b32.xlu0 %v1408, 55
      %v1433 = vpop.permute.xlu0 %1432
      %1434 = vrot.lane.b32.xlu0 %v1409, 55
      %v1435 = vpop.permute.xlu0 %1434
      %1436 = vrot.lane.b32.xlu0 %v1410, 55
      %v1437 = vpop.permute.xlu0 %1436
      %vm1438 = vcmask 449536
      %v1439 = vsel %vm1438, %v1421, %v1423
      %v1440 = vsel %vm1438, %v1423, %v1425
      %v1441 = vsel %vm1438, %v1425, %v1427
      %v1442 = vsel %vm1438, %v1427, %v1429
      %v1443 = vsel %vm1438, %v1429, %v1431
      %v1444 = vsel %vm1438, %v1431, %v1433
      %v1445 = vsel %vm1438, %v1433, %v1435
      %v1446 = vsel %vm1438, %v1435, %v1437
      %1455 = vst [vmem:[#allocation3 + $0x4c0] sm:$0xff] %v1439
      %1456 = vst [vmem:[#allocation3 + $0x4c8] sm:$0xff] %v1440
      %1457 = vst [vmem:[#allocation3 + $0x4d0] sm:$0xff] %v1441
      %1458 = vst [vmem:[#allocation3 + $0x4d8] sm:$0xff] %v1442
      %1459 = vst [vmem:[#allocation3 + $0x4e0] sm:$0xff] %v1443
      %1460 = vst [vmem:[#allocation3 + $0x4e8] sm:$0xff] %v1444
      %1461 = vst [vmem:[#allocation3 + $0x4f0] sm:$0xff] %v1445
      %1462 = vst [vmem:[#allocation3 + $0x4f8] sm:$0xff] %v1446
      %v1463 = vld [vmem:[#allocation2 + $0x8] sm:$0xff]
      %v1464 = vld [vmem:[#allocation2 + $0x10] sm:$0xff]
      %v1465 = vld [vmem:[#allocation2 + $0x18] sm:$0xff]
      %v1466 = vld [vmem:[#allocation2 + $0x20] sm:$0xff]
      %v1467 = vld [vmem:[#allocation2 + $0x28] sm:$0xff]
      %v1468 = vld [vmem:[#allocation2 + $0x30] sm:$0xff]
      %v1469 = vld [vmem:[#allocation2 + $0x38] sm:$0xff]
      %v1470 = vld [vmem:[#allocation2 + $0x40] sm:$0xff]
      %v1471 = vld [vmem:[#allocation2 + $0x48] sm:$0xff]
      %1481 = vrot.lane.b32.xlu0 %v1463, 54
      %v1482 = vpop.permute.xlu0 %1481
      %1483 = vrot.lane.b32.xlu0 %v1464, 54
      %v1484 = vpop.permute.xlu0 %1483
      %1485 = vrot.lane.b32.xlu0 %v1465, 54
      %v1486 = vpop.permute.xlu0 %1485
      %1487 = vrot.lane.b32.xlu0 %v1466, 54
      %v1488 = vpop.permute.xlu0 %1487
      %1489 = vrot.lane.b32.xlu0 %v1467, 54
      %v1490 = vpop.permute.xlu0 %1489
      %1491 = vrot.lane.b32.xlu0 %v1468, 54
      %v1492 = vpop.permute.xlu0 %1491
      %1493 = vrot.lane.b32.xlu0 %v1469, 54
      %v1494 = vpop.permute.xlu0 %1493
      %1495 = vrot.lane.b32.xlu0 %v1470, 54
      %v1496 = vpop.permute.xlu0 %1495
      %1497 = vrot.lane.b32.xlu0 %v1471, 54
      %v1498 = vpop.permute.xlu0 %1497
      %vm1499 = vcmask 441344
      %v1500 = vsel %vm1499, %v1482, %v1484
      %v1501 = vsel %vm1499, %v1484, %v1486
      %v1502 = vsel %vm1499, %v1486, %v1488
      %v1503 = vsel %vm1499, %v1488, %v1490
      %v1504 = vsel %vm1499, %v1490, %v1492
      %v1505 = vsel %vm1499, %v1492, %v1494
      %v1506 = vsel %vm1499, %v1494, %v1496
      %v1507 = vsel %vm1499, %v1496, %v1498
      %1516 = vst [vmem:[#allocation3 + $0x500] sm:$0xff] %v1500
      %1517 = vst [vmem:[#allocation3 + $0x508] sm:$0xff] %v1501
      %1518 = vst [vmem:[#allocation3 + $0x510] sm:$0xff] %v1502
      %1519 = vst [vmem:[#allocation3 + $0x518] sm:$0xff] %v1503
      %1520 = vst [vmem:[#allocation3 + $0x520] sm:$0xff] %v1504
      %1521 = vst [vmem:[#allocation3 + $0x528] sm:$0xff] %v1505
      %1522 = vst [vmem:[#allocation3 + $0x530] sm:$0xff] %v1506
      %1523 = vst [vmem:[#allocation3 + $0x538] sm:$0xff] %v1507
      %v1524 = vld [vmem:[#allocation2 + $0x8] sm:$0xff]
      %v1525 = vld [vmem:[#allocation2 + $0x10] sm:$0xff]
      %v1526 = vld [vmem:[#allocation2 + $0x18] sm:$0xff]
      %v1527 = vld [vmem:[#allocation2 + $0x20] sm:$0xff]
      %v1528 = vld [vmem:[#allocation2 + $0x28] sm:$0xff]
      %v1529 = vld [vmem:[#allocation2 + $0x30] sm:$0xff]
      %v1530 = vld [vmem:[#allocation2 + $0x38] sm:$0xff]
      %v1531 = vld [vmem:[#allocation2 + $0x40] sm:$0xff]
      %v1532 = vld [vmem:[#allocation2 + $0x48] sm:$0xff]
      %1542 = vrot.lane.b32.xlu0 %v1524, 46
      %v1543 = vpop.permute.xlu0 %1542
      %1544 = vrot.lane.b32.xlu0 %v1525, 46
      %v1545 = vpop.permute.xlu0 %1544
      %1546 = vrot.lane.b32.xlu0 %v1526, 46
      %v1547 = vpop.permute.xlu0 %1546
      %1548 = vrot.lane.b32.xlu0 %v1527, 46
      %v1549 = vpop.permute.xlu0 %1548
      %1550 = vrot.lane.b32.xlu0 %v1528, 46
      %v1551 = vpop.permute.xlu0 %1550
      %1552 = vrot.lane.b32.xlu0 %v1529, 46
      %v1553 = vpop.permute.xlu0 %1552
      %1554 = vrot.lane.b32.xlu0 %v1530, 46
      %v1555 = vpop.permute.xlu0 %1554
      %1556 = vrot.lane.b32.xlu0 %v1531, 46
      %v1557 = vpop.permute.xlu0 %1556
      %1558 = vrot.lane.b32.xlu0 %v1532, 46
      %v1559 = vpop.permute.xlu0 %1558
      %vm1560 = vcmask 375808
      %v1561 = vsel %vm1560, %v1543, %v1545
      %v1562 = vsel %vm1560, %v1545, %v1547
      %v1563 = vsel %vm1560, %v1547, %v1549
      %v1564 = vsel %vm1560, %v1549, %v1551
      %v1565 = vsel %vm1560, %v1551, %v1553
      %v1566 = vsel %vm1560, %v1553, %v1555
      %v1567 = vsel %vm1560, %v1555, %v1557
      %v1568 = vsel %vm1560, %v1557, %v1559
      %1577 = vst [vmem:[#allocation3 + $0x540] sm:$0xff] %v1561
      %1578 = vst [vmem:[#allocation3 + $0x548] sm:$0xff] %v1562
      %1579 = vst [vmem:[#allocation3 + $0x550] sm:$0xff] %v1563
      %1580 = vst [vmem:[#allocation3 + $0x558] sm:$0xff] %v1564
      %1581 = vst [vmem:[#allocation3 + $0x560] sm:$0xff] %v1565
      %1582 = vst [vmem:[#allocation3 + $0x568] sm:$0xff] %v1566
      %1583 = vst [vmem:[#allocation3 + $0x570] sm:$0xff] %v1567
      %1584 = vst [vmem:[#allocation3 + $0x578] sm:$0xff] %v1568
      %v1585 = vld [vmem:[#allocation2 + $0x8] sm:$0xff]
      %v1586 = vld [vmem:[#allocation2 + $0x10] sm:$0xff]
      %v1587 = vld [vmem:[#allocation2 + $0x18] sm:$0xff]
      %v1588 = vld [vmem:[#allocation2 + $0x20] sm:$0xff]
      %v1589 = vld [vmem:[#allocation2 + $0x28] sm:$0xff]
      %v1590 = vld [vmem:[#allocation2 + $0x30] sm:$0xff]
      %v1591 = vld [vmem:[#allocation2 + $0x38] sm:$0xff]
      %v1592 = vld [vmem:[#allocation2 + $0x40] sm:$0xff]
      %v1593 = vld [vmem:[#allocation2 + $0x48] sm:$0xff]
      %1603 = vrot.lane.b32.xlu0 %v1585, 45
      %v1604 = vpop.permute.xlu0 %1603
      %1605 = vrot.lane.b32.xlu0 %v1586, 45
      %v1606 = vpop.permute.xlu0 %1605
      %1607 = vrot.lane.b32.xlu0 %v1587, 45
      %v1608 = vpop.permute.xlu0 %1607
      %1609 = vrot.lane.b32.xlu0 %v1588, 45
      %v1610 = vpop.permute.xlu0 %1609
      %1611 = vrot.lane.b32.xlu0 %v1589, 45
      %v1612 = vpop.permute.xlu0 %1611
      %1613 = vrot.lane.b32.xlu0 %v1590, 45
      %v1614 = vpop.permute.xlu0 %1613
      %1615 = vrot.lane.b32.xlu0 %v1591, 45
      %v1616 = vpop.permute.xlu0 %1615
      %1617 = vrot.lane.b32.xlu0 %v1592, 45
      %v1618 = vpop.permute.xlu0 %1617
      %1619 = vrot.lane.b32.xlu0 %v1593, 45
      %v1620 = vpop.permute.xlu0 %1619
      %vm1621 = vcmask 367616
      %v1622 = vsel %vm1621, %v1604, %v1606
      %v1623 = vsel %vm1621, %v1606, %v1608
      %v1624 = vsel %vm1621, %v1608, %v1610
      %v1625 = vsel %vm1621, %v1610, %v1612
      %v1626 = vsel %vm1621, %v1612, %v1614
      %v1627 = vsel %vm1621, %v1614, %v1616
      %v1628 = vsel %vm1621, %v1616, %v1618
      %v1629 = vsel %vm1621, %v1618, %v1620
      %1638 = vst [vmem:[#allocation3 + $0x580] sm:$0xff] %v1622
      %1639 = vst [vmem:[#allocation3 + $0x588] sm:$0xff] %v1623
      %1640 = vst [vmem:[#allocation3 + $0x590] sm:$0xff] %v1624
      %1641 = vst [vmem:[#allocation3 + $0x598] sm:$0xff] %v1625
      %1642 = vst [vmem:[#allocation3 + $0x5a0] sm:$0xff] %v1626
      %1643 = vst [vmem:[#allocation3 + $0x5a8] sm:$0xff] %v1627
      %1644 = vst [vmem:[#allocation3 + $0x5b0] sm:$0xff] %v1628
      %1645 = vst [vmem:[#allocation3 + $0x5b8] sm:$0xff] %v1629
      %v1646 = vld [vmem:[#allocation2 + $0x8] sm:$0xff]
      %v1647 = vld [vmem:[#allocation2 + $0x10] sm:$0xff]
      %v1648 = vld [vmem:[#allocation2 + $0x18] sm:$0xff]
      %v1649 = vld [vmem:[#allocation2 + $0x20] sm:$0xff]
      %v1650 = vld [vmem:[#allocation2 + $0x28] sm:$0xff]
      %v1651 = vld [vmem:[#allocation2 + $0x30] sm:$0xff]
      %v1652 = vld [vmem:[#allocation2 + $0x38] sm:$0xff]
      %v1653 = vld [vmem:[#allocation2 + $0x40] sm:$0xff]
      %v1654 = vld [vmem:[#allocation2 + $0x48] sm:$0xff]
      %1664 = vrot.lane.b32.xlu0 %v1646, 44
      %v1665 = vpop.permute.xlu0 %1664
      %1666 = vrot.lane.b32.xlu0 %v1647, 44
      %v1667 = vpop.permute.xlu0 %1666
      %1668 = vrot.lane.b32.xlu0 %v1648, 44
      %v1669 = vpop.permute.xlu0 %1668
      %1670 = vrot.lane.b32.xlu0 %v1649, 44
      %v1671 = vpop.permute.xlu0 %1670
      %1672 = vrot.lane.b32.xlu0 %v1650, 44
      %v1673 = vpop.permute.xlu0 %1672
      %1674 = vrot.lane.b32.xlu0 %v1651, 44
      %v1675 = vpop.permute.xlu0 %1674
      %1676 = vrot.lane.b32.xlu0 %v1652, 44
      %v1677 = vpop.permute.xlu0 %1676
      %1678 = vrot.lane.b32.xlu0 %v1653, 44
      %v1679 = vpop.permute.xlu0 %1678
      %1680 = vrot.lane.b32.xlu0 %v1654, 44
      %v1681 = vpop.permute.xlu0 %1680
      %vm1682 = vcmask 359424
      %v1683 = vsel %vm1682, %v1665, %v1667
      %v1684 = vsel %vm1682, %v1667, %v1669
      %v1685 = vsel %vm1682, %v1669, %v1671
      %v1686 = vsel %vm1682, %v1671, %v1673
      %v1687 = vsel %vm1682, %v1673, %v1675
      %v1688 = vsel %vm1682, %v1675, %v1677
      %v1689 = vsel %vm1682, %v1677, %v1679
      %v1690 = vsel %vm1682, %v1679, %v1681
      %1699 = vst [vmem:[#allocation3 + $0x5c0] sm:$0xff] %v1683
      %1700 = vst [vmem:[#allocation3 + $0x5c8] sm:$0xff] %v1684
      %1701 = vst [vmem:[#allocation3 + $0x5d0] sm:$0xff] %v1685
      %1702 = vst [vmem:[#allocation3 + $0x5d8] sm:$0xff] %v1686
      %1703 = vst [vmem:[#allocation3 + $0x5e0] sm:$0xff] %v1687
      %1704 = vst [vmem:[#allocation3 + $0x5e8] sm:$0xff] %v1688
      %1705 = vst [vmem:[#allocation3 + $0x5f0] sm:$0xff] %v1689
      %1706 = vst [vmem:[#allocation3 + $0x5f8] sm:$0xff] %v1690
      %v1707 = vld [vmem:[#allocation2 + $0x8] sm:$0xff]
      %v1708 = vld [vmem:[#allocation2 + $0x10] sm:$0xff]
      %v1709 = vld [vmem:[#allocation2 + $0x18] sm:$0xff]
      %v1710 = vld [vmem:[#allocation2 + $0x20] sm:$0xff]
      %v1711 = vld [vmem:[#allocation2 + $0x28] sm:$0xff]
      %v1712 = vld [vmem:[#allocation2 + $0x30] sm:$0xff]
      %v1713 = vld [vmem:[#allocation2 + $0x38] sm:$0xff]
      %v1714 = vld [vmem:[#allocation2 + $0x40] sm:$0xff]
      %v1715 = vld [vmem:[#allocation2 + $0x48] sm:$0xff]
      %1725 = vrot.lane.b32.xlu0 %v1707, 36
      %v1726 = vpop.permute.xlu0 %1725
      %1727 = vrot.lane.b32.xlu0 %v1708, 36
      %v1728 = vpop.permute.xlu0 %1727
      %1729 = vrot.lane.b32.xlu0 %v1709, 36
      %v1730 = vpop.permute.xlu0 %1729
      %1731 = vrot.lane.b32.xlu0 %v1710, 36
      %v1732 = vpop.permute.xlu0 %1731
      %1733 = vrot.lane.b32.xlu0 %v1711, 36
      %v1734 = vpop.permute.xlu0 %1733
      %1735 = vrot.lane.b32.xlu0 %v1712, 36
      %v1736 = vpop.permute.xlu0 %1735
      %1737 = vrot.lane.b32.xlu0 %v1713, 36
      %v1738 = vpop.permute.xlu0 %1737
      %1739 = vrot.lane.b32.xlu0 %v1714, 36
      %v1740 = vpop.permute.xlu0 %1739
      %1741 = vrot.lane.b32.xlu0 %v1715, 36
      %v1742 = vpop.permute.xlu0 %1741
      %vm1743 = vcmask 293888
      %v1744 = vsel %vm1743, %v1726, %v1728
      %v1745 = vsel %vm1743, %v1728, %v1730
      %v1746 = vsel %vm1743, %v1730, %v1732
      %v1747 = vsel %vm1743, %v1732, %v1734
      %v1748 = vsel %vm1743, %v1734, %v1736
      %v1749 = vsel %vm1743, %v1736, %v1738
      %v1750 = vsel %vm1743, %v1738, %v1740
      %v1751 = vsel %vm1743, %v1740, %v1742
      %1760 = vst [vmem:[#allocation3 + $0x600] sm:$0xff] %v1744
      %1761 = vst [vmem:[#allocation3 + $0x608] sm:$0xff] %v1745
      %1762 = vst [vmem:[#allocation3 + $0x610] sm:$0xff] %v1746
      %1763 = vst [vmem:[#allocation3 + $0x618] sm:$0xff] %v1747
      %1764 = vst [vmem:[#allocation3 + $0x620] sm:$0xff] %v1748
      %1765 = vst [vmem:[#allocation3 + $0x628] sm:$0xff] %v1749
      %1766 = vst [vmem:[#allocation3 + $0x630] sm:$0xff] %v1750
      %1767 = vst [vmem:[#allocation3 + $0x638] sm:$0xff] %v1751
      %v1768 = vld [vmem:[#allocation2 + $0x8] sm:$0xff]
      %v1769 = vld [vmem:[#allocation2 + $0x10] sm:$0xff]
      %v1770 = vld [vmem:[#allocation2 + $0x18] sm:$0xff]
      %v1771 = vld [vmem:[#allocation2 + $0x20] sm:$0xff]
      %v1772 = vld [vmem:[#allocation2 + $0x28] sm:$0xff]
      %v1773 = vld [vmem:[#allocation2 + $0x30] sm:$0xff]
      %v1774 = vld [vmem:[#allocation2 + $0x38] sm:$0xff]
      %v1775 = vld [vmem:[#allocation2 + $0x40] sm:$0xff]
      %v1776 = vld [vmem:[#allocation2 + $0x48] sm:$0xff]
      %1786 = vrot.lane.b32.xlu0 %v1768, 35
      %v1787 = vpop.permute.xlu0 %1786
      %1788 = vrot.lane.b32.xlu0 %v1769, 35
      %v1789 = vpop.permute.xlu0 %1788
      %1790 = vrot.lane.b32.xlu0 %v1770, 35
      %v1791 = vpop.permute.xlu0 %1790
      %1792 = vrot.lane.b32.xlu0 %v1771, 35
      %v1793 = vpop.permute.xlu0 %1792
      %1794 = vrot.lane.b32.xlu0 %v1772, 35
      %v1795 = vpop.permute.xlu0 %1794
      %1796 = vrot.lane.b32.xlu0 %v1773, 35
      %v1797 = vpop.permute.xlu0 %1796
      %1798 = vrot.lane.b32.xlu0 %v1774, 35
      %v1799 = vpop.permute.xlu0 %1798
      %1800 = vrot.lane.b32.xlu0 %v1775, 35
      %v1801 = vpop.permute.xlu0 %1800
      %1802 = vrot.lane.b32.xlu0 %v1776, 35
      %v1803 = vpop.permute.xlu0 %1802
      %vm1804 = vcmask 285696
      %v1805 = vsel %vm1804, %v1787, %v1789
      %v1806 = vsel %vm1804, %v1789, %v1791
      %v1807 = vsel %vm1804, %v1791, %v1793
      %v1808 = vsel %vm1804, %v1793, %v1795
      %v1809 = vsel %vm1804, %v1795, %v1797
      %v1810 = vsel %vm1804, %v1797, %v1799
      %v1811 = vsel %vm1804, %v1799, %v1801
      %v1812 = vsel %vm1804, %v1801, %v1803
      %1821 = vst [vmem:[#allocation3 + $0x640] sm:$0xff] %v1805
      %1822 = vst [vmem:[#allocation3 + $0x648] sm:$0xff] %v1806
      %1823 = vst [vmem:[#allocation3 + $0x650] sm:$0xff] %v1807
      %1824 = vst [vmem:[#allocation3 + $0x658] sm:$0xff] %v1808
      %1825 = vst [vmem:[#allocation3 + $0x660] sm:$0xff] %v1809
      %1826 = vst [vmem:[#allocation3 + $0x668] sm:$0xff] %v1810
      %1827 = vst [vmem:[#allocation3 + $0x670] sm:$0xff] %v1811
      %1828 = vst [vmem:[#allocation3 + $0x678] sm:$0xff] %v1812
      %v1829 = vld [vmem:[#allocation2 + $0x8] sm:$0xff]
      %v1830 = vld [vmem:[#allocation2 + $0x10] sm:$0xff]
      %v1831 = vld [vmem:[#allocation2 + $0x18] sm:$0xff]
      %v1832 = vld [vmem:[#allocation2 + $0x20] sm:$0xff]
      %v1833 = vld [vmem:[#allocation2 + $0x28] sm:$0xff]
      %v1834 = vld [vmem:[#allocation2 + $0x30] sm:$0xff]
      %v1835 = vld [vmem:[#allocation2 + $0x38] sm:$0xff]
      %v1836 = vld [vmem:[#allocation2 + $0x40] sm:$0xff]
      %v1837 = vld [vmem:[#allocation2 + $0x48] sm:$0xff]
      %1847 = vrot.lane.b32.xlu0 %v1829, 34
      %v1848 = vpop.permute.xlu0 %1847
      %1849 = vrot.lane.b32.xlu0 %v1830, 34
      %v1850 = vpop.permute.xlu0 %1849
      %1851 = vrot.lane.b32.xlu0 %v1831, 34
      %v1852 = vpop.permute.xlu0 %1851
      %1853 = vrot.lane.b32.xlu0 %v1832, 34
      %v1854 = vpop.permute.xlu0 %1853
      %1855 = vrot.lane.b32.xlu0 %v1833, 34
      %v1856 = vpop.permute.xlu0 %1855
      %1857 = vrot.lane.b32.xlu0 %v1834, 34
      %v1858 = vpop.permute.xlu0 %1857
      %1859 = vrot.lane.b32.xlu0 %v1835, 34
      %v1860 = vpop.permute.xlu0 %1859
      %1861 = vrot.lane.b32.xlu0 %v1836, 34
      %v1862 = vpop.permute.xlu0 %1861
      %1863 = vrot.lane.b32.xlu0 %v1837, 34
      %v1864 = vpop.permute.xlu0 %1863
      %vm1865 = vcmask 277504
      %v1866 = vsel %vm1865, %v1848, %v1850
      %v1867 = vsel %vm1865, %v1850, %v1852
      %v1868 = vsel %vm1865, %v1852, %v1854
      %v1869 = vsel %vm1865, %v1854, %v1856
      %v1870 = vsel %vm1865, %v1856, %v1858
      %v1871 = vsel %vm1865, %v1858, %v1860
      %v1872 = vsel %vm1865, %v1860, %v1862
      %v1873 = vsel %vm1865, %v1862, %v1864
      %1882 = vst [vmem:[#allocation3 + $0x680] sm:$0xff] %v1866
      %1883 = vst [vmem:[#allocation3 + $0x688] sm:$0xff] %v1867
      %1884 = vst [vmem:[#allocation3 + $0x690] sm:$0xff] %v1868
      %1885 = vst [vmem:[#allocation3 + $0x698] sm:$0xff] %v1869
      %1886 = vst [vmem:[#allocation3 + $0x6a0] sm:$0xff] %v1870
      %1887 = vst [vmem:[#allocation3 + $0x6a8] sm:$0xff] %v1871
      %1888 = vst [vmem:[#allocation3 + $0x6b0] sm:$0xff] %v1872
      %1889 = vst [vmem:[#allocation3 + $0x6b8] sm:$0xff] %v1873
      %v1890 = vld [vmem:[%s2] sm:$0xff]
      %v1891 = vld [vmem:[%s2 + $0x8] sm:$0xff]
      %v1892 = vld [vmem:[#allocation3] sm:$0xff]
      %v1893 = vld [vmem:[#allocation3 + $0x8] sm:$0xff]
      %v1894 = vld [vmem:[#allocation3 + $0x10] sm:$0xff]
      %v1895 = vld [vmem:[#allocation3 + $0x18] sm:$0xff]
      %v1896 = vld [vmem:[#allocation3 + $0x20] sm:$0xff]
      %v1897 = vld [vmem:[#allocation3 + $0x28] sm:$0xff]
      %v1898 = vld [vmem:[#allocation3 + $0x30] sm:$0xff]
      %v1899 = vld [vmem:[#allocation3 + $0x38] sm:$0xff]
      %v1900 = vld [vmem:[#allocation3 + $0x40] sm:$0xff]
      %v1901 = vld [vmem:[#allocation3 + $0x48] sm:$0xff]
      %v1902 = vld [vmem:[#allocation3 + $0x50] sm:$0xff]
      %v1903 = vld [vmem:[#allocation3 + $0x58] sm:$0xff]
      %v1904 = vld [vmem:[#allocation3 + $0x60] sm:$0xff]
      %v1905 = vld [vmem:[#allocation3 + $0x68] sm:$0xff]
      %v1906 = vld [vmem:[#allocation3 + $0x70] sm:$0xff]
      %v1907 = vld [vmem:[#allocation3 + $0x78] sm:$0xff]
      %v1908 = vld [vmem:[#allocation3 + $0x80] sm:$0xff]
      %v1909 = vld [vmem:[#allocation3 + $0x88] sm:$0xff]
      %v1910 = vld [vmem:[#allocation3 + $0x90] sm:$0xff]
      %v1911 = vld [vmem:[#allocation3 + $0x98] sm:$0xff]
      %v1912 = vld [vmem:[#allocation3 + $0xa0] sm:$0xff]
      %v1913 = vld [vmem:[#allocation3 + $0xa8] sm:$0xff]
      %v1914 = vld [vmem:[#allocation3 + $0xb0] sm:$0xff]
      %v1915 = vld [vmem:[#allocation3 + $0xb8] sm:$0xff]
      %v1916 = vld [vmem:[#allocation3 + $0xc0] sm:$0xff]
      %v1917 = vld [vmem:[#allocation3 + $0xc8] sm:$0xff]
      %v1918 = vld [vmem:[#allocation3 + $0xd0] sm:$0xff]
      %v1919 = vld [vmem:[#allocation3 + $0xd8] sm:$0xff]
      %v1920 = vld [vmem:[#allocation3 + $0xe0] sm:$0xff]
      %v1921 = vld [vmem:[#allocation3 + $0xe8] sm:$0xff]
      %v1922 = vld [vmem:[#allocation3 + $0xf0] sm:$0xff]
      %v1923 = vld [vmem:[#allocation3 + $0xf8] sm:$0xff]
      %v1924 = vld [vmem:[#allocation3 + $0x100] sm:$0xff]
      %v1925 = vld [vmem:[#allocation3 + $0x108] sm:$0xff]
      %v1926 = vld [vmem:[#allocation3 + $0x110] sm:$0xff]
      %v1927 = vld [vmem:[#allocation3 + $0x118] sm:$0xff]
      %v1928 = vld [vmem:[#allocation3 + $0x120] sm:$0xff]
      %v1929 = vld [vmem:[#allocation3 + $0x128] sm:$0xff]
      %v1930 = vld [vmem:[#allocation3 + $0x130] sm:$0xff]
      %v1931 = vld [vmem:[#allocation3 + $0x138] sm:$0xff]
      %v1932 = vld [vmem:[#allocation3 + $0x140] sm:$0xff]
      %v1933 = vld [vmem:[#allocation3 + $0x148] sm:$0xff]
      %v1934 = vld [vmem:[#allocation3 + $0x150] sm:$0xff]
      %v1935 = vld [vmem:[#allocation3 + $0x158] sm:$0xff]
      %v1936 = vld [vmem:[#allocation3 + $0x160] sm:$0xff]
      %v1937 = vld [vmem:[#allocation3 + $0x168] sm:$0xff]
      %v1938 = vld [vmem:[#allocation3 + $0x170] sm:$0xff]
      %v1939 = vld [vmem:[#allocation3 + $0x178] sm:$0xff]
      %v1940 = vld [vmem:[#allocation3 + $0x180] sm:$0xff]
      %v1941 = vld [vmem:[#allocation3 + $0x188] sm:$0xff]
      %v1942 = vld [vmem:[#allocation3 + $0x190] sm:$0xff]
      %v1943 = vld [vmem:[#allocation3 + $0x198] sm:$0xff]
      %v1944 = vld [vmem:[#allocation3 + $0x1a0] sm:$0xff]
      %v1945 = vld [vmem:[#allocation3 + $0x1a8] sm:$0xff]
      %v1946 = vld [vmem:[#allocation3 + $0x1b0] sm:$0xff]
      %v1947 = vld [vmem:[#allocation3 + $0x1b8] sm:$0xff]
      %v1948 = vld [vmem:[#allocation3 + $0x1c0] sm:$0xff]
      %v1949 = vld [vmem:[#allocation3 + $0x1c8] sm:$0xff]
      %v1950 = vld [vmem:[#allocation3 + $0x1d0] sm:$0xff]
      %v1951 = vld [vmem:[#allocation3 + $0x1d8] sm:$0xff]
      %v1952 = vld [vmem:[#allocation3 + $0x1e0] sm:$0xff]
      %v1953 = vld [vmem:[#allocation3 + $0x1e8] sm:$0xff]
      %v1954 = vld [vmem:[#allocation3 + $0x1f0] sm:$0xff]
      %v1955 = vld [vmem:[#allocation3 + $0x1f8] sm:$0xff]
      %v1956 = vld [vmem:[#allocation3 + $0x200] sm:$0xff]
      %v1957 = vld [vmem:[#allocation3 + $0x208] sm:$0xff]
      %v1958 = vld [vmem:[#allocation3 + $0x210] sm:$0xff]
      %v1959 = vld [vmem:[#allocation3 + $0x218] sm:$0xff]
      %v1960 = vld [vmem:[#allocation3 + $0x220] sm:$0xff]
      %v1961 = vld [vmem:[#allocation3 + $0x228] sm:$0xff]
      %v1962 = vld [vmem:[#allocation3 + $0x230] sm:$0xff]
      %v1963 = vld [vmem:[#allocation3 + $0x238] sm:$0xff]
      %v1964 = vld [vmem:[#allocation3 + $0x240] sm:$0xff]
      %v1965 = vld [vmem:[#allocation3 + $0x248] sm:$0xff]
      %v1966 = vld [vmem:[#allocation3 + $0x250] sm:$0xff]
      %v1967 = vld [vmem:[#allocation3 + $0x258] sm:$0xff]
      %v1968 = vld [vmem:[#allocation3 + $0x260] sm:$0xff]
      %v1969 = vld [vmem:[#allocation3 + $0x268] sm:$0xff]
      %v1970 = vld [vmem:[#allocation3 + $0x270] sm:$0xff]
      %v1971 = vld [vmem:[#allocation3 + $0x278] sm:$0xff]
      %v1972 = vld [vmem:[#allocation3 + $0x280] sm:$0xff]
      %v1973 = vld [vmem:[#allocation3 + $0x288] sm:$0xff]
      %v1974 = vld [vmem:[#allocation3 + $0x290] sm:$0xff]
      %v1975 = vld [vmem:[#allocation3 + $0x298] sm:$0xff]
      %v1976 = vld [vmem:[#allocation3 + $0x2a0] sm:$0xff]
      %v1977 = vld [vmem:[#allocation3 + $0x2a8] sm:$0xff]
      %v1978 = vld [vmem:[#allocation3 + $0x2b0] sm:$0xff]
      %v1979 = vld [vmem:[#allocation3 + $0x2b8] sm:$0xff]
      %v1980 = vld [vmem:[#allocation3 + $0x2c0] sm:$0xff]
      %v1981 = vld [vmem:[#allocation3 + $0x2c8] sm:$0xff]
      %v1982 = vld [vmem:[#allocation3 + $0x2d0] sm:$0xff]
      %v1983 = vld [vmem:[#allocation3 + $0x2d8] sm:$0xff]
      %v1984 = vld [vmem:[#allocation3 + $0x2e0] sm:$0xff]
      %v1985 = vld [vmem:[#allocation3 + $0x2e8] sm:$0xff]
      %v1986 = vld [vmem:[#allocation3 + $0x2f0] sm:$0xff]
      %v1987 = vld [vmem:[#allocation3 + $0x2f8] sm:$0xff]
      %v1988 = vld [vmem:[#allocation3 + $0x300] sm:$0xff]
      %v1989 = vld [vmem:[#allocation3 + $0x308] sm:$0xff]
      %v1990 = vld [vmem:[#allocation3 + $0x310] sm:$0xff]
      %v1991 = vld [vmem:[#allocation3 + $0x318] sm:$0xff]
      %v1992 = vld [vmem:[#allocation3 + $0x320] sm:$0xff]
      %v1993 = vld [vmem:[#allocation3 + $0x328] sm:$0xff]
      %v1994 = vld [vmem:[#allocation3 + $0x330] sm:$0xff]
      %v1995 = vld [vmem:[#allocation3 + $0x338] sm:$0xff]
      %v1996 = vld [vmem:[#allocation3 + $0x340] sm:$0xff]
      %v1997 = vld [vmem:[#allocation3 + $0x348] sm:$0xff]
      %v1998 = vld [vmem:[#allocation3 + $0x350] sm:$0xff]
      %v1999 = vld [vmem:[#allocation3 + $0x358] sm:$0xff]
      %v2000 = vld [vmem:[#allocation3 + $0x360] sm:$0xff]
      %v2001 = vld [vmem:[#allocation3 + $0x368] sm:$0xff]
      %v2002 = vld [vmem:[#allocation3 + $0x370] sm:$0xff]
      %v2003 = vld [vmem:[#allocation3 + $0x378] sm:$0xff]
      %v2004 = vld [vmem:[#allocation3 + $0x380] sm:$0xff]
      %v2005 = vld [vmem:[#allocation3 + $0x388] sm:$0xff]
      %v2006 = vld [vmem:[#allocation3 + $0x390] sm:$0xff]
      %v2007 = vld [vmem:[#allocation3 + $0x398] sm:$0xff]
      %v2008 = vld [vmem:[#allocation3 + $0x3a0] sm:$0xff]
      %v2009 = vld [vmem:[#allocation3 + $0x3a8] sm:$0xff]
      %v2010 = vld [vmem:[#allocation3 + $0x3b0] sm:$0xff]
      %v2011 = vld [vmem:[#allocation3 + $0x3b8] sm:$0xff]
      %v2012 = vld [vmem:[#allocation3 + $0x3c0] sm:$0xff]
      %v2013 = vld [vmem:[#allocation3 + $0x3c8] sm:$0xff]
      %v2014 = vld [vmem:[#allocation3 + $0x3d0] sm:$0xff]
      %v2015 = vld [vmem:[#allocation3 + $0x3d8] sm:$0xff]
      %v2016 = vld [vmem:[#allocation3 + $0x3e0] sm:$0xff]
      %v2017 = vld [vmem:[#allocation3 + $0x3e8] sm:$0xff]
      %v2018 = vld [vmem:[#allocation3 + $0x3f0] sm:$0xff]
      %v2019 = vld [vmem:[#allocation3 + $0x3f8] sm:$0xff]
      %v2020 = vld [vmem:[#allocation3 + $0x400] sm:$0xff]
      %v2021 = vld [vmem:[#allocation3 + $0x408] sm:$0xff]
      %v2022 = vld [vmem:[#allocation3 + $0x410] sm:$0xff]
      %v2023 = vld [vmem:[#allocation3 + $0x418] sm:$0xff]
      %v2024 = vld [vmem:[#allocation3 + $0x420] sm:$0xff]
      %v2025 = vld [vmem:[#allocation3 + $0x428] sm:$0xff]
      %v2026 = vld [vmem:[#allocation3 + $0x430] sm:$0xff]
      %v2027 = vld [vmem:[#allocation3 + $0x438] sm:$0xff]
      %v2028 = vld [vmem:[#allocation3 + $0x440] sm:$0xff]
      %v2029 = vld [vmem:[#allocation3 + $0x448] sm:$0xff]
      %v2030 = vld [vmem:[#allocation3 + $0x450] sm:$0xff]
      %v2031 = vld [vmem:[#allocation3 + $0x458] sm:$0xff]
      %v2032 = vld [vmem:[#allocation3 + $0x460] sm:$0xff]
      %v2033 = vld [vmem:[#allocation3 + $0x468] sm:$0xff]
      %v2034 = vld [vmem:[#allocation3 + $0x470] sm:$0xff]
      %v2035 = vld [vmem:[#allocation3 + $0x478] sm:$0xff]
      %v2036 = vld [vmem:[#allocation3 + $0x480] sm:$0xff]
      %v2037 = vld [vmem:[#allocation3 + $0x488] sm:$0xff]
      %v2038 = vld [vmem:[#allocation3 + $0x490] sm:$0xff]
      %v2039 = vld [vmem:[#allocation3 + $0x498] sm:$0xff]
      %v2040 = vld [vmem:[#allocation3 + $0x4a0] sm:$0xff]
      %v2041 = vld [vmem:[#allocation3 + $0x4a8] sm:$0xff]
      %v2042 = vld [vmem:[#allocation3 + $0x4b0] sm:$0xff]
      %v2043 = vld [vmem:[#allocation3 + $0x4b8] sm:$0xff]
      %v2044 = vld [vmem:[#allocation3 + $0x4c0] sm:$0xff]
      %v2045 = vld [vmem:[#allocation3 + $0x4c8] sm:$0xff]
      %v2046 = vld [vmem:[#allocation3 + $0x4d0] sm:$0xff]
      %v2047 = vld [vmem:[#allocation3 + $0x4d8] sm:$0xff]
      %v2048 = vld [vmem:[#allocation3 + $0x4e0] sm:$0xff]
      %v2049 = vld [vmem:[#allocation3 + $0x4e8] sm:$0xff]
      %v2050 = vld [vmem:[#allocation3 + $0x4f0] sm:$0xff]
      %v2051 = vld [vmem:[#allocation3 + $0x4f8] sm:$0xff]
      %v2052 = vld [vmem:[#allocation3 + $0x500] sm:$0xff]
      %v2053 = vld [vmem:[#allocation3 + $0x508] sm:$0xff]
      %v2054 = vld [vmem:[#allocation3 + $0x510] sm:$0xff]
      %v2055 = vld [vmem:[#allocation3 + $0x518] sm:$0xff]
      %v2056 = vld [vmem:[#allocation3 + $0x520] sm:$0xff]
      %v2057 = vld [vmem:[#allocation3 + $0x528] sm:$0xff]
      %v2058 = vld [vmem:[#allocation3 + $0x530] sm:$0xff]
      %v2059 = vld [vmem:[#allocation3 + $0x538] sm:$0xff]
      %v2060 = vld [vmem:[#allocation3 + $0x540] sm:$0xff]
      %v2061 = vld [vmem:[#allocation3 + $0x548] sm:$0xff]
      %v2062 = vld [vmem:[#allocation3 + $0x550] sm:$0xff]
      %v2063 = vld [vmem:[#allocation3 + $0x558] sm:$0xff]
      %v2064 = vld [vmem:[#allocation3 + $0x560] sm:$0xff]
      %v2065 = vld [vmem:[#allocation3 + $0x568] sm:$0xff]
      %v2066 = vld [vmem:[#allocation3 + $0x570] sm:$0xff]
      %v2067 = vld [vmem:[#allocation3 + $0x578] sm:$0xff]
      %v2068 = vld [vmem:[#allocation3 + $0x580] sm:$0xff]
      %v2069 = vld [vmem:[#allocation3 + $0x588] sm:$0xff]
      %v2070 = vld [vmem:[#allocation3 + $0x590] sm:$0xff]
      %v2071 = vld [vmem:[#allocation3 + $0x598] sm:$0xff]
      %v2072 = vld [vmem:[#allocation3 + $0x5a0] sm:$0xff]
      %v2073 = vld [vmem:[#allocation3 + $0x5a8] sm:$0xff]
      %v2074 = vld [vmem:[#allocation3 + $0x5b0] sm:$0xff]
      %v2075 = vld [vmem:[#allocation3 + $0x5b8] sm:$0xff]
      %v2076 = vld [vmem:[#allocation3 + $0x5c0] sm:$0xff]
      %v2077 = vld [vmem:[#allocation3 + $0x5c8] sm:$0xff]
      %v2078 = vld [vmem:[#allocation3 + $0x5d0] sm:$0xff]
      %v2079 = vld [vmem:[#allocation3 + $0x5d8] sm:$0xff]
      %v2080 = vld [vmem:[#allocation3 + $0x5e0] sm:$0xff]
      %v2081 = vld [vmem:[#allocation3 + $0x5e8] sm:$0xff]
      %v2082 = vld [vmem:[#allocation3 + $0x5f0] sm:$0xff]
      %v2083 = vld [vmem:[#allocation3 + $0x5f8] sm:$0xff]
      %v2084 = vld [vmem:[#allocation3 + $0x600] sm:$0xff]
      %v2085 = vld [vmem:[#allocation3 + $0x608] sm:$0xff]
      %v2086 = vld [vmem:[#allocation3 + $0x610] sm:$0xff]
      %v2087 = vld [vmem:[#allocation3 + $0x618] sm:$0xff]
      %v2088 = vld [vmem:[#allocation3 + $0x620] sm:$0xff]
      %v2089 = vld [vmem:[#allocation3 + $0x628] sm:$0xff]
      %v2090 = vld [vmem:[#allocation3 + $0x630] sm:$0xff]
      %v2091 = vld [vmem:[#allocation3 + $0x638] sm:$0xff]
      %v2092 = vld [vmem:[#allocation3 + $0x640] sm:$0xff]
      %v2093 = vld [vmem:[#allocation3 + $0x648] sm:$0xff]
      %v2094 = vld [vmem:[#allocation3 + $0x650] sm:$0xff]
      %v2095 = vld [vmem:[#allocation3 + $0x658] sm:$0xff]
      %v2096 = vld [vmem:[#allocation3 + $0x660] sm:$0xff]
      %v2097 = vld [vmem:[#allocation3 + $0x668] sm:$0xff]
      %v2098 = vld [vmem:[#allocation3 + $0x670] sm:$0xff]
      %v2099 = vld [vmem:[#allocation3 + $0x678] sm:$0xff]
      %v2100 = vld [vmem:[#allocation3 + $0x680] sm:$0xff]
      %v2101 = vld [vmem:[#allocation3 + $0x688] sm:$0xff]
      %v2102 = vld [vmem:[#allocation3 + $0x690] sm:$0xff]
      %v2103 = vld [vmem:[#allocation3 + $0x698] sm:$0xff]
      %v2104 = vld [vmem:[#allocation3 + $0x6a0] sm:$0xff]
      %v2105 = vld [vmem:[#allocation3 + $0x6a8] sm:$0xff]
      %v2106 = vld [vmem:[#allocation3 + $0x6b0] sm:$0xff]
      %v2107 = vld [vmem:[#allocation3 + $0x6b8] sm:$0xff]
      %vm2108 = vcmask 719872
      %v2110 = vsel %vm2108, %v1891, 0
      %2112 = vmatprep.subr.mxu0 %v1893
      %2113 = vmatpush1.msra.mxu0 %v1892
      %2114 = vmatprep.subr.mxu0 %v1901
      %2115 = vmatpush1.msra.mxu0 %v1900
      %2116 = vmatprep.subr.mxu0 %v1909
      %2117 = vmatpush1.msra.mxu0 %v1908
      %2118 = vmatprep.subr.mxu0 %v1917
      %2119 = vmatpush1.msra.mxu0 %v1916
      %2120 = vmatprep.subr.mxu0 %v1925
      %2121 = vmatpush1.msra.mxu0 %v1924
      %2122 = vmatprep.subr.mxu0 %v1933
      %2123 = vmatpush1.msra.mxu0 %v1932
      %2124 = vmatprep.subr.mxu0 %v1941
      %2125 = vmatpush1.msra.mxu0 %v1940
      %2126 = vmatprep.subr.mxu0 %v1949
      %2127 = vmatpush1.msra.mxu0 %v1948
      %2128 = vmatprep.subr.mxu0 %v1957
      %2129 = vmatpush1.msra.mxu0 %v1956
      %2130 = vmatprep.subr.mxu0 %v1965
      %2131 = vmatpush1.msra.mxu0 %v1964
      %2132 = vmatprep.subr.mxu0 %v1973
      %2133 = vmatpush1.msra.mxu0 %v1972
      %2134 = vmatprep.subr.mxu0 %v1981
      %2135 = vmatpush1.msra.mxu0 %v1980
      %2136 = vmatprep.subr.mxu0 %v1989
      %2137 = vmatpush1.msra.mxu0 %v1988
      %2138 = vmatprep.subr.mxu0 %v1997
      %2139 = vmatpush1.msra.mxu0 %v1996
      %2140 = vmatprep.subr.mxu0 %v2005
      %2141 = vmatpush1.msra.mxu0 %v2004
      %2142 = vmatprep.subr.mxu0 %v2013
      %2143 = vmatpush1.msra.mxu0 %v2012
      %2144 = vmatprep.subr.mxu0 %v2021
      %2145 = vmatpush1.msra.mxu0 %v2020
      %2146 = vmatprep.subr.mxu0 %v2029
      %2147 = vmatpush1.msra.mxu0 %v2028
      %2148 = vmatprep.subr.mxu0 %v2037
      %2149 = vmatpush1.msra.mxu0 %v2036
      %2150 = vmatprep.subr.mxu0 %v2045
      %2151 = vmatpush1.msra.mxu0 %v2044
      %2152 = vmatprep.subr.mxu0 %v2053
      %2153 = vmatpush1.msra.mxu0 %v2052
      %2154 = vmatprep.subr.mxu0 %v2061
      %2155 = vmatpush1.msra.mxu0 %v2060
      %2156 = vmatprep.subr.mxu0 %v2069
      %2157 = vmatpush1.msra.mxu0 %v2068
      %2158 = vmatprep.subr.mxu0 %v2077
      %2159 = vmatpush1.msra.mxu0 %v2076
      %2160 = vmatprep.subr.mxu0 %v2085
      %2161 = vmatpush1.msra.mxu0 %v2084
      %2162 = vmatprep.subr.mxu0 %v2093
      %2163 = vmatpush1.msra.mxu0 %v2092
      %2164 = vmatprep.subr.mxu0 %v2101
      %2165 = vmatpush1.msra.mxu0 %v2100
      %2166 = vmatprep.subr.mxu0 0.0
      %2167 = vmatpush1.msra.mxu0 0.0
      %2168 = vmatprep.subr.mxu0 0.0
      %2169 = vmatpush1.msra.mxu0 0.0
      %2170 = vmatprep.subr.mxu0 0.0
      %2171 = vmatpush1.msra.mxu0 0.0
      %2172 = vmatprep.subr.mxu0 0.0
      %2173 = vmatpush1.msra.mxu0 0.0
      %2174 = vmatprep.subr.mxu0 0.0
      %2175 = vmatpush1.msra.mxu0 0.0
      %2176 = vmatprep.mubr.f32.mxu0 %v2110
      %2177 = vmatmul.mubr.f32.gmra.mrb[0].mxu0 %v1890
      %v2178 = vpop.f32.mrb[0].mxu0
      %v2179 = vadd.f32 0.0, %v2178
      %v2180 = vpop.f32.mrb[0].mxu0
      %v2181 = vadd.f32 0.0, %v2180
      %2182 = vdwg.mxu0
      %2183 = vmatprep.subr.mxu0 %v1895
      %2184 = vmatpush1.msra.mxu0 %v1894
      %2185 = vmatprep.subr.mxu0 %v1903
      %2186 = vmatpush1.msra.mxu0 %v1902
      %2187 = vmatprep.subr.mxu0 %v1911
      %2188 = vmatpush1.msra.mxu0 %v1910
      %2189 = vmatprep.subr.mxu0 %v1919
      %2190 = vmatpush1.msra.mxu0 %v1918
      %2191 = vmatprep.subr.mxu0 %v1927
      %2192 = vmatpush1.msra.mxu0 %v1926
      %2193 = vmatprep.subr.mxu0 %v1935
      %2194 = vmatpush1.msra.mxu0 %v1934
      %2195 = vmatprep.subr.mxu0 %v1943
      %2196 = vmatpush1.msra.mxu0 %v1942
      %2197 = vmatprep.subr.mxu0 %v1951
      %2198 = vmatpush1.msra.mxu0 %v1950
      %2199 = vmatprep.subr.mxu0 %v1959
      %2200 = vmatpush1.msra.mxu0 %v1958
      %2201 = vmatprep.subr.mxu0 %v1967
      %2202 = vmatpush1.msra.mxu0 %v1966
      %2203 = vmatprep.subr.mxu0 %v1975
      %2204 = vmatpush1.msra.mxu0 %v1974
      %2205 = vmatprep.subr.mxu0 %v1983
      %2206 = vmatpush1.msra.mxu0 %v1982
      %2207 = vmatprep.subr.mxu0 %v1991
      %2208 = vmatpush1.msra.mxu0 %v1990
      %2209 = vmatprep.subr.mxu0 %v1999
      %2210 = vmatpush1.msra.mxu0 %v1998
      %2211 = vmatprep.subr.mxu0 %v2007
      %2212 = vmatpush1.msra.mxu0 %v2006
      %2213 = vmatprep.subr.mxu0 %v2015
      %2214 = vmatpush1.msra.mxu0 %v2014
      %2215 = vmatprep.subr.mxu0 %v2023
      %2216 = vmatpush1.msra.mxu0 %v2022
      %2217 = vmatprep.subr.mxu0 %v2031
      %2218 = vmatpush1.msra.mxu0 %v2030
      %2219 = vmatprep.subr.mxu0 %v2039
      %2220 = vmatpush1.msra.mxu0 %v2038
      %2221 = vmatprep.subr.mxu0 %v2047
      %2222 = vmatpush1.msra.mxu0 %v2046
      %2223 = vmatprep.subr.mxu0 %v2055
      %2224 = vmatpush1.msra.mxu0 %v2054
      %2225 = vmatprep.subr.mxu0 %v2063
      %2226 = vmatpush1.msra.mxu0 %v2062
      %2227 = vmatprep.subr.mxu0 %v2071
      %2228 = vmatpush1.msra.mxu0 %v2070
      %2229 = vmatprep.subr.mxu0 %v2079
      %2230 = vmatpush1.msra.mxu0 %v2078
      %2231 = vmatprep.subr.mxu0 %v2087
      %2232 = vmatpush1.msra.mxu0 %v2086
      %2233 = vmatprep.subr.mxu0 %v2095
      %2234 = vmatpush1.msra.mxu0 %v2094
      %2235 = vmatprep.subr.mxu0 %v2103
      %2236 = vmatpush1.msra.mxu0 %v2102
      %2237 = vmatprep.subr.mxu0 0.0
      %2238 = vmatpush1.msra.mxu0 0.0
      %2239 = vmatprep.subr.mxu0 0.0
      %2240 = vmatpush1.msra.mxu0 0.0
      %2241 = vmatprep.subr.mxu0 0.0
      %2242 = vmatpush1.msra.mxu0 0.0
      %2243 = vmatprep.subr.mxu0 0.0
      %2244 = vmatpush1.msra.mxu0 0.0
      %2245 = vmatprep.subr.mxu0 0.0
      %2246 = vmatpush1.msra.mxu0 0.0
      %2247 = vmatprep.mubr.f32.mxu0 %v2110
      %2248 = vmatmul.mubr.f32.gmra.mrb[0].mxu0 %v1890
      %v2249 = vpop.f32.mrb[0].mxu0
      %v2250 = vadd.f32 0.0, %v2249
      %v2251 = vpop.f32.mrb[0].mxu0
      %v2252 = vadd.f32 0.0, %v2251
      %2253 = vdwg.mxu0
      %2254 = vmatprep.subr.mxu0 %v1897
      %2255 = vmatpush1.msra.mxu0 %v1896
      %2256 = vmatprep.subr.mxu0 %v1905
      %2257 = vmatpush1.msra.mxu0 %v1904
      %2258 = vmatprep.subr.mxu0 %v1913
      %2259 = vmatpush1.msra.mxu0 %v1912
      %2260 = vmatprep.subr.mxu0 %v1921
      %2261 = vmatpush1.msra.mxu0 %v1920
      %2262 = vmatprep.subr.mxu0 %v1929
      %2263 = vmatpush1.msra.mxu0 %v1928
      %2264 = vmatprep.subr.mxu0 %v1937
      %2265 = vmatpush1.msra.mxu0 %v1936
      %2266 = vmatprep.subr.mxu0 %v1945
      %2267 = vmatpush1.msra.mxu0 %v1944
      %2268 = vmatprep.subr.mxu0 %v1953
      %2269 = vmatpush1.msra.mxu0 %v1952
      %2270 = vmatprep.subr.mxu0 %v1961
      %2271 = vmatpush1.msra.mxu0 %v1960
      %2272 = vmatprep.subr.mxu0 %v1969
      %2273 = vmatpush1.msra.mxu0 %v1968
      %2274 = vmatprep.subr.mxu0 %v1977
      %2275 = vmatpush1.msra.mxu0 %v1976
      %2276 = vmatprep.subr.mxu0 %v1985
      %2277 = vmatpush1.msra.mxu0 %v1984
      %2278 = vmatprep.subr.mxu0 %v1993
      %2279 = vmatpush1.msra.mxu0 %v1992
      %2280 = vmatprep.subr.mxu0 %v2001
      %2281 = vmatpush1.msra.mxu0 %v2000
      %2282 = vmatprep.subr.mxu0 %v2009
      %2283 = vmatpush1.msra.mxu0 %v2008
      %2284 = vmatprep.subr.mxu0 %v2017
      %2285 = vmatpush1.msra.mxu0 %v2016
      %2286 = vmatprep.subr.mxu0 %v2025
      %2287 = vmatpush1.msra.mxu0 %v2024
      %2288 = vmatprep.subr.mxu0 %v2033
      %2289 = vmatpush1.msra.mxu0 %v2032
      %2290 = vmatprep.subr.mxu0 %v2041
      %2291 = vmatpush1.msra.mxu0 %v2040
      %2292 = vmatprep.subr.mxu0 %v2049
      %2293 = vmatpush1.msra.mxu0 %v2048
      %2294 = vmatprep.subr.mxu0 %v2057
      %2295 = vmatpush1.msra.mxu0 %v2056
      %2296 = vmatprep.subr.mxu0 %v2065
      %2297 = vmatpush1.msra.mxu0 %v2064
      %2298 = vmatprep.subr.mxu0 %v2073
      %2299 = vmatpush1.msra.mxu0 %v2072
      %2300 = vmatprep.subr.mxu0 %v2081
      %2301 = vmatpush1.msra.mxu0 %v2080
      %2302 = vmatprep.subr.mxu0 %v2089
      %2303 = vmatpush1.msra.mxu0 %v2088
      %2304 = vmatprep.subr.mxu0 %v2097
      %2305 = vmatpush1.msra.mxu0 %v2096
      %2306 = vmatprep.subr.mxu0 %v2105
      %2307 = vmatpush1.msra.mxu0 %v2104
      %2308 = vmatprep.subr.mxu0 0.0
      %2309 = vmatpush1.msra.mxu0 0.0
      %2310 = vmatprep.subr.mxu0 0.0
      %2311 = vmatpush1.msra.mxu0 0.0
      %2312 = vmatprep.subr.mxu0 0.0
      %2313 = vmatpush1.msra.mxu0 0.0
      %2314 = vmatprep.subr.mxu0 0.0
      %2315 = vmatpush1.msra.mxu0 0.0
      %2316 = vmatprep.subr.mxu0 0.0
      %2317 = vmatpush1.msra.mxu0 0.0
      %2318 = vmatprep.mubr.f32.mxu0 %v2110
      %2319 = vmatmul.mubr.f32.gmra.mrb[0].mxu0 %v1890
      %v2320 = vpop.f32.mrb[0].mxu0
      %v2321 = vadd.f32 0.0, %v2320
      %v2322 = vpop.f32.mrb[0].mxu0
      %v2323 = vadd.f32 0.0, %v2322
      %2324 = vdwg.mxu0
      %2325 = vmatprep.subr.mxu0 %v1899
      %2326 = vmatpush1.msra.mxu0 %v1898
      %2327 = vmatprep.subr.mxu0 %v1907
      %2328 = vmatpush1.msra.mxu0 %v1906
      %2329 = vmatprep.subr.mxu0 %v1915
      %2330 = vmatpush1.msra.mxu0 %v1914
      %2331 = vmatprep.subr.mxu0 %v1923
      %2332 = vmatpush1.msra.mxu0 %v1922
      %2333 = vmatprep.subr.mxu0 %v1931
      %2334 = vmatpush1.msra.mxu0 %v1930
      %2335 = vmatprep.subr.mxu0 %v1939
      %2336 = vmatpush1.msra.mxu0 %v1938
      %2337 = vmatprep.subr.mxu0 %v1947
      %2338 = vmatpush1.msra.mxu0 %v1946
      %2339 = vmatprep.subr.mxu0 %v1955
      %2340 = vmatpush1.msra.mxu0 %v1954
      %2341 = vmatprep.subr.mxu0 %v1963
      %2342 = vmatpush1.msra.mxu0 %v1962
      %2343 = vmatprep.subr.mxu0 %v1971
      %2344 = vmatpush1.msra.mxu0 %v1970
      %2345 = vmatprep.subr.mxu0 %v1979
      %2346 = vmatpush1.msra.mxu0 %v1978
      %2347 = vmatprep.subr.mxu0 %v1987
      %2348 = vmatpush1.msra.mxu0 %v1986
      %2349 = vmatprep.subr.mxu0 %v1995
      %2350 = vmatpush1.msra.mxu0 %v1994
      %2351 = vmatprep.subr.mxu0 %v2003
      %2352 = vmatpush1.msra.mxu0 %v2002
      %2353 = vmatprep.subr.mxu0 %v2011
      %2354 = vmatpush1.msra.mxu0 %v2010
      %2355 = vmatprep.subr.mxu0 %v2019
      %2356 = vmatpush1.msra.mxu0 %v2018
      %2357 = vmatprep.subr.mxu0 %v2027
      %2358 = vmatpush1.msra.mxu0 %v2026
      %2359 = vmatprep.subr.mxu0 %v2035
      %2360 = vmatpush1.msra.mxu0 %v2034
      %2361 = vmatprep.subr.mxu0 %v2043
      %2362 = vmatpush1.msra.mxu0 %v2042
      %2363 = vmatprep.subr.mxu0 %v2051
      %2364 = vmatpush1.msra.mxu0 %v2050
      %2365 = vmatprep.subr.mxu0 %v2059
      %2366 = vmatpush1.msra.mxu0 %v2058
      %2367 = vmatprep.subr.mxu0 %v2067
      %2368 = vmatpush1.msra.mxu0 %v2066
      %2369 = vmatprep.subr.mxu0 %v2075
      %2370 = vmatpush1.msra.mxu0 %v2074
      %2371 = vmatprep.subr.mxu0 %v2083
      %2372 = vmatpush1.msra.mxu0 %v2082
      %2373 = vmatprep.subr.mxu0 %v2091
      %2374 = vmatpush1.msra.mxu0 %v2090
      %2375 = vmatprep.subr.mxu0 %v2099
      %2376 = vmatpush1.msra.mxu0 %v2098
      %2377 = vmatprep.subr.mxu0 %v2107
      %2378 = vmatpush1.msra.mxu0 %v2106
      %2379 = vmatprep.subr.mxu0 0.0
      %2380 = vmatpush1.msra.mxu0 0.0
      %2381 = vmatprep.subr.mxu0 0.0
      %2382 = vmatpush1.msra.mxu0 0.0
      %2383 = vmatprep.subr.mxu0 0.0
      %2384 = vmatpush1.msra.mxu0 0.0
      %2385 = vmatprep.subr.mxu0 0.0
      %2386 = vmatpush1.msra.mxu0 0.0
      %2387 = vmatprep.subr.mxu0 0.0
      %2388 = vmatpush1.msra.mxu0 0.0
      %2389 = vmatprep.mubr.f32.mxu0 %v2110
      %2390 = vmatmul.mubr.f32.gmra.mrb[0].mxu0 %v1890
      %v2391 = vpop.f32.mrb[0].mxu0
      %v2392 = vadd.f32 0.0, %v2391
      %v2393 = vpop.f32.mrb[0].mxu0
      %v2394 = vadd.f32 0.0, %v2393
      %2395 = vdwg.mxu0
      %2396 = vst [vmem:[%s262] sm:$0xff] %v2179
      %2397 = vst [vmem:[%s262 + $0x8] sm:$0xff] %v2181
      %2398 = vst [vmem:[%s262 + $0x10] sm:$0xff] %v2250
      %2399 = vst [vmem:[%s262 + $0x18] sm:$0xff] %v2252
      %2400 = vst [vmem:[%s262 + $0x20] sm:$0xff] %v2321
      %2401 = vst [vmem:[%s262 + $0x28] sm:$0xff] %v2323
      %2402 = vst [vmem:[%s262 + $0x30] sm:$0xff] %v2392
      %2403 = vst [vmem:[%s262 + $0x38] sm:$0xff] %v2394
      %v2404 = vlaneseq
      %v2405 = vand.u32 %v2404, 127
      %v2406 = vadd.s32 %v2405, 128
      %v2407 = vadd.s32 %v2405, 256
      %v2408 = vadd.s32 %v2405, 384
      %v2409 = vadd.s32 %v2405, 512
      %v2410 = vadd.s32 %v2405, 640
      %v2411 = vadd.s32 %v2405, 768
      %v2412 = vadd.s32 %v2405, 896
      %s2413 = smul.u32 %s16, 1024
      %v2414 = vstv %s2413
      %v2415 = vadd.s32 %v2405, %v2414
      %v2416 = vadd.s32 %v2406, %v2414
      %v2417 = vadd.s32 %v2407, %v2414
      %v2418 = vadd.s32 %v2408, %v2414
      %v2419 = vadd.s32 %v2409, %v2414
      %v2420 = vadd.s32 %v2410, %v2414
      %v2421 = vadd.s32 %v2411, %v2414
      %v2422 = vadd.s32 %v2412, %v2414
      %vm2423 = vcmp.lt.s32.totalorder %v2415, 2000
      %vm2424 = vcmp.lt.s32.totalorder %v2416, 2000
      %vm2425 = vcmp.lt.s32.totalorder %v2417, 2000
      %vm2426 = vcmp.lt.s32.totalorder %v2418, 2000
      %vm2427 = vcmp.lt.s32.totalorder %v2419, 2000
      %vm2428 = vcmp.lt.s32.totalorder %v2420, 2000
      %vm2429 = vcmp.lt.s32.totalorder %v2421, 2000
      %vm2430 = vcmp.lt.s32.totalorder %v2422, 2000
      %vm2431 = vcmp.lt.s32.totalorder %v2415, 0
      %v2432 = vsub.s32 0, %v2415
      %v2433 = vsel %vm2431, %v2432, %v2415
      %v2434 = vmul.u32.u64.compose %v2433, 3435973837
      %v2435 = vextract.low.u32 %v2434
      %v2436 = vextract.high.u32 %v2434
      %v2437 = vshrl.u32 %v2436, 3
      %v2438 = vmul.u32 %v2437, 10
      %v2439 = vsub.s32 %v2433, %v2438
      %v2440 = vsub.s32 0, %v2439
      %v2441 = vsel %vm2431, %v2440, %v2439
      %vm2442 = vcmp.lt.s32.totalorder %v2416, 0
      %v2443 = vsub.s32 0, %v2416
      %v2444 = vsel %vm2442, %v2443, %v2416
      %v2445 = vmul.u32.u64.compose %v2444, 3435973837
      %v2446 = vextract.low.u32 %v2445
      %v2447 = vextract.high.u32 %v2445
      %v2448 = vshrl.u32 %v2447, 3
      %v2449 = vmul.u32 %v2448, 10
      %v2450 = vsub.s32 %v2444, %v2449
      %v2451 = vsub.s32 0, %v2450
      %v2452 = vsel %vm2442, %v2451, %v2450
      %vm2453 = vcmp.lt.s32.totalorder %v2417, 0
      %v2454 = vsub.s32 0, %v2417
      %v2455 = vsel %vm2453, %v2454, %v2417
      %v2456 = vmul.u32.u64.compose %v2455, 3435973837
      %v2457 = vextract.low.u32 %v2456
      %v2458 = vextract.high.u32 %v2456
      %v2459 = vshrl.u32 %v2458, 3
      %v2460 = vmul.u32 %v2459, 10
      %v2461 = vsub.s32 %v2455, %v2460
      %v2462 = vsub.s32 0, %v2461
      %v2463 = vsel %vm2453, %v2462, %v2461
      %vm2464 = vcmp.lt.s32.totalorder %v2418, 0
      %v2465 = vsub.s32 0, %v2418
      %v2466 = vsel %vm2464, %v2465, %v2418
      %v2467 = vmul.u32.u64.compose %v2466, 3435973837
      %v2468 = vextract.low.u32 %v2467
      %v2469 = vextract.high.u32 %v2467
      %v2470 = vshrl.u32 %v2469, 3
      %v2471 = vmul.u32 %v2470, 10
      %v2472 = vsub.s32 %v2466, %v2471
      %v2473 = vsub.s32 0, %v2472
      %v2474 = vsel %vm2464, %v2473, %v2472
      %vm2475 = vcmp.lt.s32.totalorder %v2419, 0
      %v2476 = vsub.s32 0, %v2419
      %v2477 = vsel %vm2475, %v2476, %v2419
      %v2478 = vmul.u32.u64.compose %v2477, 3435973837
      %v2479 = vextract.low.u32 %v2478
      %v2480 = vextract.high.u32 %v2478
      %v2481 = vshrl.u32 %v2480, 3
      %v2482 = vmul.u32 %v2481, 10
      %v2483 = vsub.s32 %v2477, %v2482
      %v2484 = vsub.s32 0, %v2483
      %v2485 = vsel %vm2475, %v2484, %v2483
      %vm2486 = vcmp.lt.s32.totalorder %v2420, 0
      %v2487 = vsub.s32 0, %v2420
      %v2488 = vsel %vm2486, %v2487, %v2420
      %v2489 = vmul.u32.u64.compose %v2488, 3435973837
      %v2490 = vextract.low.u32 %v2489
      %v2491 = vextract.high.u32 %v2489
      %v2492 = vshrl.u32 %v2491, 3
      %v2493 = vmul.u32 %v2492, 10
      %v2494 = vsub.s32 %v2488, %v2493
      %v2495 = vsub.s32 0, %v2494
      %v2496 = vsel %vm2486, %v2495, %v2494
      %vm2497 = vcmp.lt.s32.totalorder %v2421, 0
      %v2498 = vsub.s32 0, %v2421
      %v2499 = vsel %vm2497, %v2498, %v2421
      %v2500 = vmul.u32.u64.compose %v2499, 3435973837
      %v2501 = vextract.low.u32 %v2500
      %v2502 = vextract.high.u32 %v2500
      %v2503 = vshrl.u32 %v2502, 3
      %v2504 = vmul.u32 %v2503, 10
      %v2505 = vsub.s32 %v2499, %v2504
      %v2506 = vsub.s32 0, %v2505
      %v2507 = vsel %vm2497, %v2506, %v2505
      %vm2508 = vcmp.lt.s32.totalorder %v2422, 0
      %v2509 = vsub.s32 0, %v2422
      %v2510 = vsel %vm2508, %v2509, %v2422
      %v2511 = vmul.u32.u64.compose %v2510, 3435973837
      %v2512 = vextract.low.u32 %v2511
      %v2513 = vextract.high.u32 %v2511
      %v2514 = vshrl.u32 %v2513, 3
      %v2515 = vmul.u32 %v2514, 10
      %v2516 = vsub.s32 %v2510, %v2515
      %v2517 = vsub.s32 0, %v2516
      %v2518 = vsel %vm2508, %v2517, %v2516
      %vm2519 = vcmp.ne.s32.totalorder %v2441, 0
      %vm2520 = vcmp.ne.s32.totalorder %v2452, 0
      %vm2521 = vcmp.ne.s32.totalorder %v2463, 0
      %vm2522 = vcmp.ne.s32.totalorder %v2474, 0
      %vm2523 = vcmp.ne.s32.totalorder %v2485, 0
      %vm2524 = vcmp.ne.s32.totalorder %v2496, 0
      %vm2525 = vcmp.ne.s32.totalorder %v2507, 0
      %vm2526 = vcmp.ne.s32.totalorder %v2518, 0
      %vm2527 = vcmp.lt.s32.totalorder %v2441, 0
      %vm2528 = vcmp.lt.s32.totalorder %v2452, 0
      %vm2529 = vcmp.lt.s32.totalorder %v2463, 0
      %vm2530 = vcmp.lt.s32.totalorder %v2474, 0
      %vm2531 = vcmp.lt.s32.totalorder %v2485, 0
      %vm2532 = vcmp.lt.s32.totalorder %v2496, 0
      %vm2533 = vcmp.lt.s32.totalorder %v2507, 0
      %vm2534 = vcmp.lt.s32.totalorder %v2518, 0
      %vm2535 = vmand %vm2527, %vm2519
      %vm2536 = vmand %vm2528, %vm2520
      %vm2537 = vmand %vm2529, %vm2521
      %vm2538 = vmand %vm2530, %vm2522
      %vm2539 = vmand %vm2531, %vm2523
      %vm2540 = vmand %vm2532, %vm2524
      %vm2541 = vmand %vm2533, %vm2525
      %vm2542 = vmand %vm2534, %vm2526
      %v2543 = vadd.s32 %v2441, 10
      %v2544 = vadd.s32 %v2452, 10
      %v2545 = vadd.s32 %v2463, 10
      %v2546 = vadd.s32 %v2474, 10
      %v2547 = vadd.s32 %v2485, 10
      %v2548 = vadd.s32 %v2496, 10
      %v2549 = vadd.s32 %v2507, 10
      %v2550 = vadd.s32 %v2518, 10
      %v2551 = vsel %vm2535, %v2543, %v2441
      %v2552 = vsel %vm2536, %v2544, %v2452
      %v2553 = vsel %vm2537, %v2545, %v2463
      %v2554 = vsel %vm2538, %v2546, %v2474
      %v2555 = vsel %vm2539, %v2547, %v2485
      %v2556 = vsel %vm2540, %v2548, %v2496
      %v2557 = vsel %vm2541, %v2549, %v2507
      %v2558 = vsel %vm2542, %v2550, %v2518
      %vm2559 = vcmp.lt.s32.totalorder %v2551, 8
      %vm2560 = vcmp.lt.s32.totalorder %v2552, 8
      %vm2561 = vcmp.lt.s32.totalorder %v2553, 8
      %vm2562 = vcmp.lt.s32.totalorder %v2554, 8
      %vm2563 = vcmp.lt.s32.totalorder %v2555, 8
      %vm2564 = vcmp.lt.s32.totalorder %v2556, 8
      %vm2565 = vcmp.lt.s32.totalorder %v2557, 8
      %vm2566 = vcmp.lt.s32.totalorder %v2558, 8
      %vm2567 = vmand %vm2423, %vm2559
      %vm2568 = vmand %vm2424, %vm2560
      %vm2569 = vmand %vm2425, %vm2561
      %vm2570 = vmand %vm2426, %vm2562
      %vm2571 = vmand %vm2427, %vm2563
      %vm2572 = vmand %vm2428, %vm2564
      %vm2573 = vmand %vm2429, %vm2565
      %vm2574 = vmand %vm2430, %vm2566
      %vm2575 = vcmp.lt.s32.totalorder %v2415, 0
      %v2576 = vsub.s32 0, %v2415
      %v2577 = vsel %vm2575, %v2576, %v2415
      %v2578 = vmul.u32.u64.compose %v2577, 2748779070
      %v2579 = vextract.low.u32 %v2578
      %v2580 = vextract.high.u32 %v2578
      %v2581 = vshrl.u32 %v2580, 6
      %v2582 = vmul.u32 %v2581, 100
      %v2583 = vsub.s32 %v2577, %v2582
      %v2584 = vsub.s32 0, %v2583
      %v2585 = vsel %vm2575, %v2584, %v2583
      %vm2586 = vcmp.lt.s32.totalorder %v2416, 0
      %v2587 = vsub.s32 0, %v2416
      %v2588 = vsel %vm2586, %v2587, %v2416
      %v2589 = vmul.u32.u64.compose %v2588, 2748779070
      %v2590 = vextract.low.u32 %v2589
      %v2591 = vextract.high.u32 %v2589
      %v2592 = vshrl.u32 %v2591, 6
      %v2593 = vmul.u32 %v2592, 100
      %v2594 = vsub.s32 %v2588, %v2593
      %v2595 = vsub.s32 0, %v2594
      %v2596 = vsel %vm2586, %v2595, %v2594
      %vm2597 = vcmp.lt.s32.totalorder %v2417, 0
      %v2598 = vsub.s32 0, %v2417
      %v2599 = vsel %vm2597, %v2598, %v2417
      %v2600 = vmul.u32.u64.compose %v2599, 2748779070
      %v2601 = vextract.low.u32 %v2600
      %v2602 = vextract.high.u32 %v2600
      %v2603 = vshrl.u32 %v2602, 6
      %v2604 = vmul.u32 %v2603, 100
      %v2605 = vsub.s32 %v2599, %v2604
      %v2606 = vsub.s32 0, %v2605
      %v2607 = vsel %vm2597, %v2606, %v2605
      %vm2608 = vcmp.lt.s32.totalorder %v2418, 0
      %v2609 = vsub.s32 0, %v2418
      %v2610 = vsel %vm2608, %v2609, %v2418
      %v2611 = vmul.u32.u64.compose %v2610, 2748779070
      %v2612 = vextract.low.u32 %v2611
      %v2613 = vextract.high.u32 %v2611
      %v2614 = vshrl.u32 %v2613, 6
      %v2615 = vmul.u32 %v2614, 100
      %v2616 = vsub.s32 %v2610, %v2615
      %v2617 = vsub.s32 0, %v2616
      %v2618 = vsel %vm2608, %v2617, %v2616
      %vm2619 = vcmp.lt.s32.totalorder %v2419, 0
      %v2620 = vsub.s32 0, %v2419
      %v2621 = vsel %vm2619, %v2620, %v2419
      %v2622 = vmul.u32.u64.compose %v2621, 2748779070
      %v2623 = vextract.low.u32 %v2622
      %v2624 = vextract.high.u32 %v2622
      %v2625 = vshrl.u32 %v2624, 6
      %v2626 = vmul.u32 %v2625, 100
      %v2627 = vsub.s32 %v2621, %v2626
      %v2628 = vsub.s32 0, %v2627
      %v2629 = vsel %vm2619, %v2628, %v2627
      %vm2630 = vcmp.lt.s32.totalorder %v2420, 0
      %v2631 = vsub.s32 0, %v2420
      %v2632 = vsel %vm2630, %v2631, %v2420
      %v2633 = vmul.u32.u64.compose %v2632, 2748779070
      %v2634 = vextract.low.u32 %v2633
      %v2635 = vextract.high.u32 %v2633
      %v2636 = vshrl.u32 %v2635, 6
      %v2637 = vmul.u32 %v2636, 100
      %v2638 = vsub.s32 %v2632, %v2637
      %v2639 = vsub.s32 0, %v2638
      %v2640 = vsel %vm2630, %v2639, %v2638
      %vm2641 = vcmp.lt.s32.totalorder %v2421, 0
      %v2642 = vsub.s32 0, %v2421
      %v2643 = vsel %vm2641, %v2642, %v2421
      %v2644 = vmul.u32.u64.compose %v2643, 2748779070
      %v2645 = vextract.low.u32 %v2644
      %v2646 = vextract.high.u32 %v2644
      %v2647 = vshrl.u32 %v2646, 6
      %v2648 = vmul.u32 %v2647, 100
      %v2649 = vsub.s32 %v2643, %v2648
      %v2650 = vsub.s32 0, %v2649
      %v2651 = vsel %vm2641, %v2650, %v2649
      %vm2652 = vcmp.lt.s32.totalorder %v2422, 0
      %v2653 = vsub.s32 0, %v2422
      %v2654 = vsel %vm2652, %v2653, %v2422
      %v2655 = vmul.u32.u64.compose %v2654, 2748779070
      %v2656 = vextract.low.u32 %v2655
      %v2657 = vextract.high.u32 %v2655
      %v2658 = vshrl.u32 %v2657, 6
      %v2659 = vmul.u32 %v2658, 100
      %v2660 = vsub.s32 %v2654, %v2659
      %v2661 = vsub.s32 0, %v2660
      %v2662 = vsel %vm2652, %v2661, %v2660
      %vm2663 = vcmp.ne.s32.totalorder %v2585, 0
      %vm2664 = vcmp.ne.s32.totalorder %v2596, 0
      %vm2665 = vcmp.ne.s32.totalorder %v2607, 0
      %vm2666 = vcmp.ne.s32.totalorder %v2618, 0
      %vm2667 = vcmp.ne.s32.totalorder %v2629, 0
      %vm2668 = vcmp.ne.s32.totalorder %v2640, 0
      %vm2669 = vcmp.ne.s32.totalorder %v2651, 0
      %vm2670 = vcmp.ne.s32.totalorder %v2662, 0
      %vm2671 = vcmp.lt.s32.totalorder %v2585, 0
      %vm2672 = vcmp.lt.s32.totalorder %v2596, 0
      %vm2673 = vcmp.lt.s32.totalorder %v2607, 0
      %vm2674 = vcmp.lt.s32.totalorder %v2618, 0
      %vm2675 = vcmp.lt.s32.totalorder %v2629, 0
      %vm2676 = vcmp.lt.s32.totalorder %v2640, 0
      %vm2677 = vcmp.lt.s32.totalorder %v2651, 0
      %vm2678 = vcmp.lt.s32.totalorder %v2662, 0
      %vm2679 = vmand %vm2671, %vm2663
      %vm2680 = vmand %vm2672, %vm2664
      %vm2681 = vmand %vm2673, %vm2665
      %vm2682 = vmand %vm2674, %vm2666
      %vm2683 = vmand %vm2675, %vm2667
      %vm2684 = vmand %vm2676, %vm2668
      %vm2685 = vmand %vm2677, %vm2669
      %vm2686 = vmand %vm2678, %vm2670
      %v2687 = vadd.s32 %v2585, 100
      %v2688 = vadd.s32 %v2596, 100
      %v2689 = vadd.s32 %v2607, 100
      %v2690 = vadd.s32 %v2618, 100
      %v2691 = vadd.s32 %v2629, 100
      %v2692 = vadd.s32 %v2640, 100
      %v2693 = vadd.s32 %v2651, 100
      %v2694 = vadd.s32 %v2662, 100
      %v2695 = vsel %vm2679, %v2687, %v2585
      %v2696 = vsel %vm2680, %v2688, %v2596
      %v2697 = vsel %vm2681, %v2689, %v2607
      %v2698 = vsel %vm2682, %v2690, %v2618
      %v2699 = vsel %vm2683, %v2691, %v2629
      %v2700 = vsel %vm2684, %v2692, %v2640
      %v2701 = vsel %vm2685, %v2693, %v2651
      %v2702 = vsel %vm2686, %v2694, %v2662
      %vm2703 = vcmp.lt.s32.totalorder %v2695, 80
      %vm2704 = vcmp.lt.s32.totalorder %v2696, 80
      %vm2705 = vcmp.lt.s32.totalorder %v2697, 80
      %vm2706 = vcmp.lt.s32.totalorder %v2698, 80
      %vm2707 = vcmp.lt.s32.totalorder %v2699, 80
      %vm2708 = vcmp.lt.s32.totalorder %v2700, 80
      %vm2709 = vcmp.lt.s32.totalorder %v2701, 80
      %vm2710 = vcmp.lt.s32.totalorder %v2702, 80
      %vm2711 = vmand %vm2567, %vm2703
      %vm2712 = vmand %vm2568, %vm2704
      %vm2713 = vmand %vm2569, %vm2705
      %vm2714 = vmand %vm2570, %vm2706
      %vm2715 = vmand %vm2571, %vm2707
      %vm2716 = vmand %vm2572, %vm2708
      %vm2717 = vmand %vm2573, %vm2709
      %vm2718 = vmand %vm2574, %vm2710
      %vm2719 = vcmp.lt.s32.totalorder %v2415, 0
      %v2720 = vsub.s32 0, %v2415
      %v2721 = vsel %vm2719, %v2720, %v2415
      %v2722 = vmul.u32.u64.compose %v2721, 2199023256
      %v2723 = vextract.low.u32 %v2722
      %v2724 = vextract.high.u32 %v2722
      %v2725 = vshrl.u32 %v2724, 9
      %v2726 = vmul.u32 %v2725, 1000
      %v2727 = vsub.s32 %v2721, %v2726
      %v2728 = vsub.s32 0, %v2727
      %v2729 = vsel %vm2719, %v2728, %v2727
      %vm2730 = vcmp.lt.s32.totalorder %v2416, 0
      %v2731 = vsub.s32 0, %v2416
      %v2732 = vsel %vm2730, %v2731, %v2416
      %v2733 = vmul.u32.u64.compose %v2732, 2199023256
      %v2734 = vextract.low.u32 %v2733
      %v2735 = vextract.high.u32 %v2733
      %v2736 = vshrl.u32 %v2735, 9
      %v2737 = vmul.u32 %v2736, 1000
      %v2738 = vsub.s32 %v2732, %v2737
      %v2739 = vsub.s32 0, %v2738
      %v2740 = vsel %vm2730, %v2739, %v2738
      %vm2741 = vcmp.lt.s32.totalorder %v2417, 0
      %v2742 = vsub.s32 0, %v2417
      %v2743 = vsel %vm2741, %v2742, %v2417
      %v2744 = vmul.u32.u64.compose %v2743, 2199023256
      %v2745 = vextract.low.u32 %v2744
      %v2746 = vextract.high.u32 %v2744
      %v2747 = vshrl.u32 %v2746, 9
      %v2748 = vmul.u32 %v2747, 1000
      %v2749 = vsub.s32 %v2743, %v2748
      %v2750 = vsub.s32 0, %v2749
      %v2751 = vsel %vm2741, %v2750, %v2749
      %vm2752 = vcmp.lt.s32.totalorder %v2418, 0
      %v2753 = vsub.s32 0, %v2418
      %v2754 = vsel %vm2752, %v2753, %v2418
      %v2755 = vmul.u32.u64.compose %v2754, 2199023256
      %v2756 = vextract.low.u32 %v2755
      %v2757 = vextract.high.u32 %v2755
      %v2758 = vshrl.u32 %v2757, 9
      %v2759 = vmul.u32 %v2758, 1000
      %v2760 = vsub.s32 %v2754, %v2759
      %v2761 = vsub.s32 0, %v2760
      %v2762 = vsel %vm2752, %v2761, %v2760
      %vm2763 = vcmp.lt.s32.totalorder %v2419, 0
      %v2764 = vsub.s32 0, %v2419
      %v2765 = vsel %vm2763, %v2764, %v2419
      %v2766 = vmul.u32.u64.compose %v2765, 2199023256
      %v2767 = vextract.low.u32 %v2766
      %v2768 = vextract.high.u32 %v2766
      %v2769 = vshrl.u32 %v2768, 9
      %v2770 = vmul.u32 %v2769, 1000
      %v2771 = vsub.s32 %v2765, %v2770
      %v2772 = vsub.s32 0, %v2771
      %v2773 = vsel %vm2763, %v2772, %v2771
      %vm2774 = vcmp.lt.s32.totalorder %v2420, 0
      %v2775 = vsub.s32 0, %v2420
      %v2776 = vsel %vm2774, %v2775, %v2420
      %v2777 = vmul.u32.u64.compose %v2776, 2199023256
      %v2778 = vextract.low.u32 %v2777
      %v2779 = vextract.high.u32 %v2777
      %v2780 = vshrl.u32 %v2779, 9
      %v2781 = vmul.u32 %v2780, 1000
      %v2782 = vsub.s32 %v2776, %v2781
      %v2783 = vsub.s32 0, %v2782
      %v2784 = vsel %vm2774, %v2783, %v2782
      %vm2785 = vcmp.lt.s32.totalorder %v2421, 0
      %v2786 = vsub.s32 0, %v2421
      %v2787 = vsel %vm2785, %v2786, %v2421
      %v2788 = vmul.u32.u64.compose %v2787, 2199023256
      %v2789 = vextract.low.u32 %v2788
      %v2790 = vextract.high.u32 %v2788
      %v2791 = vshrl.u32 %v2790, 9
      %v2792 = vmul.u32 %v2791, 1000
      %v2793 = vsub.s32 %v2787, %v2792
      %v2794 = vsub.s32 0, %v2793
      %v2795 = vsel %vm2785, %v2794, %v2793
      %vm2796 = vcmp.lt.s32.totalorder %v2422, 0
      %v2797 = vsub.s32 0, %v2422
      %v2798 = vsel %vm2796, %v2797, %v2422
      %v2799 = vmul.u32.u64.compose %v2798, 2199023256
      %v2800 = vextract.low.u32 %v2799
      %v2801 = vextract.high.u32 %v2799
      %v2802 = vshrl.u32 %v2801, 9
      %v2803 = vmul.u32 %v2802, 1000
      %v2804 = vsub.s32 %v2798, %v2803
      %v2805 = vsub.s32 0, %v2804
      %v2806 = vsel %vm2796, %v2805, %v2804
      %vm2807 = vcmp.ne.s32.totalorder %v2729, 0
      %vm2808 = vcmp.ne.s32.totalorder %v2740, 0
      %vm2809 = vcmp.ne.s32.totalorder %v2751, 0
      %vm2810 = vcmp.ne.s32.totalorder %v2762, 0
      %vm2811 = vcmp.ne.s32.totalorder %v2773, 0
      %vm2812 = vcmp.ne.s32.totalorder %v2784, 0
      %vm2813 = vcmp.ne.s32.totalorder %v2795, 0
      %vm2814 = vcmp.ne.s32.totalorder %v2806, 0
      %vm2815 = vcmp.lt.s32.totalorder %v2729, 0
      %vm2816 = vcmp.lt.s32.totalorder %v2740, 0
      %vm2817 = vcmp.lt.s32.totalorder %v2751, 0
      %vm2818 = vcmp.lt.s32.totalorder %v2762, 0
      %vm2819 = vcmp.lt.s32.totalorder %v2773, 0
      %vm2820 = vcmp.lt.s32.totalorder %v2784, 0
      %vm2821 = vcmp.lt.s32.totalorder %v2795, 0
      %vm2822 = vcmp.lt.s32.totalorder %v2806, 0
      %vm2823 = vmand %vm2815, %vm2807
      %vm2824 = vmand %vm2816, %vm2808
      %vm2825 = vmand %vm2817, %vm2809
      %vm2826 = vmand %vm2818, %vm2810
      %vm2827 = vmand %vm2819, %vm2811
      %vm2828 = vmand %vm2820, %vm2812
      %vm2829 = vmand %vm2821, %vm2813
      %vm2830 = vmand %vm2822, %vm2814
      %v2831 = vadd.s32 %v2729, 1000
      %v2832 = vadd.s32 %v2740, 1000
      %v2833 = vadd.s32 %v2751, 1000
      %v2834 = vadd.s32 %v2762, 1000
      %v2835 = vadd.s32 %v2773, 1000
      %v2836 = vadd.s32 %v2784, 1000
      %v2837 = vadd.s32 %v2795, 1000
      %v2838 = vadd.s32 %v2806, 1000
      %v2839 = vsel %vm2823, %v2831, %v2729
      %v2840 = vsel %vm2824, %v2832, %v2740
      %v2841 = vsel %vm2825, %v2833, %v2751
      %v2842 = vsel %vm2826, %v2834, %v2762
      %v2843 = vsel %vm2827, %v2835, %v2773
      %v2844 = vsel %vm2828, %v2836, %v2784
      %v2845 = vsel %vm2829, %v2837, %v2795
      %v2846 = vsel %vm2830, %v2838, %v2806
      %vm2847 = vcmp.lt.s32.totalorder %v2839, 800
      %vm2848 = vcmp.lt.s32.totalorder %v2840, 800
      %vm2849 = vcmp.lt.s32.totalorder %v2841, 800
      %vm2850 = vcmp.lt.s32.totalorder %v2842, 800
      %vm2851 = vcmp.lt.s32.totalorder %v2843, 800
      %vm2852 = vcmp.lt.s32.totalorder %v2844, 800
      %vm2853 = vcmp.lt.s32.totalorder %v2845, 800
      %vm2854 = vcmp.lt.s32.totalorder %v2846, 800
      %vm2855 = vmand %vm2711, %vm2847
      %vm2856 = vmand %vm2712, %vm2848
      %vm2857 = vmand %vm2713, %vm2849
      %vm2858 = vmand %vm2714, %vm2850
      %vm2859 = vmand %vm2715, %vm2851
      %vm2860 = vmand %vm2716, %vm2852
      %vm2861 = vmand %vm2717, %vm2853
      %vm2862 = vmand %vm2718, %vm2854
      %v2863 = vsel %vm2855, 1, 0
      %v2864 = vsel %vm2856, 1, 0
      %v2865 = vsel %vm2857, 1, 0
      %v2866 = vsel %vm2858, 1, 0
      %v2867 = vsel %vm2859, 1, 0
      %v2868 = vsel %vm2860, 1, 0
      %v2869 = vsel %vm2861, 1, 0
      %v2870 = vsel %vm2862, 1, 0
      %v2871 = vcvt.s32.f32 %v2863
      %v2872 = vcvt.s32.f32 %v2864
      %v2873 = vcvt.s32.f32 %v2865
      %v2874 = vcvt.s32.f32 %v2866
      %v2875 = vcvt.s32.f32 %v2867
      %v2876 = vcvt.s32.f32 %v2868
      %v2877 = vcvt.s32.f32 %v2869
      %v2878 = vcvt.s32.f32 %v2870
      %v2879 = vmul.f32 %v2179, %v2871
      %v2880 = vmul.f32 %v2181, %v2872
      %v2881 = vmul.f32 %v2250, %v2873
      %v2882 = vmul.f32 %v2252, %v2874
      %v2883 = vmul.f32 %v2321, %v2875
      %v2884 = vmul.f32 %v2323, %v2876
      %v2885 = vmul.f32 %v2392, %v2877
      %v2886 = vmul.f32 %v2394, %v2878
      %v2887 = vadd.f32 %v2879, %v2880
      %v2888 = vadd.f32 %v2887, %v2881
      %v2889 = vadd.f32 %v2888, %v2882
      %v2890 = vadd.f32 %v2889, %v2883
      %v2891 = vadd.f32 %v2890, %v2884
      %v2892 = vadd.f32 %v2891, %v2885
      %v2893 = vadd.f32 %v2892, %v2886
      %2894 = vadd.xlane.f32.xlu0 %v2893
      %v2895 = vpop.xlane.xlu0 %2894
      %v2896 = vmul.f32 %v2879, %v2179
      %v2897 = vmul.f32 %v2880, %v2181
      %v2898 = vmul.f32 %v2881, %v2250
      %v2899 = vmul.f32 %v2882, %v2252
      %v2900 = vmul.f32 %v2883, %v2321
      %v2901 = vmul.f32 %v2884, %v2323
      %v2902 = vmul.f32 %v2885, %v2392
      %v2903 = vmul.f32 %v2886, %v2394
      %v2904 = vadd.f32 %v2896, %v2897
      %v2905 = vadd.f32 %v2904, %v2898
      %v2906 = vadd.f32 %v2905, %v2899
      %v2907 = vadd.f32 %v2906, %v2900
      %v2908 = vadd.f32 %v2907, %v2901
      %v2909 = vadd.f32 %v2908, %v2902
      %v2910 = vadd.f32 %v2909, %v2903
      %2911 = vadd.xlane.f32.xlu0 %v2910
      %v2912 = vpop.xlane.xlu0 %2911
      %vm2913 = vcmask 7168
      %v2914 = vsel %vm2913, %v2895, %v2912
      %vm2915 = vcmask 15360
      %2916 = vst.msk [vmem:[%s267] sm:$0xff] %vm2915, %v2914
      %s2917 = smul.u32 8, %s16
      %p2918 = scmp.lt.s32.totalorder %s2917, 15
      %s2919 = scalar_select %p2918, %s2917, 15
      %s2920 = smul.addr %s2919, 8
      %s2921 = scalar_lea.vmem %s3, %s2920
      %p2922 = scmp.lt.s32.totalorder %s16, 1
      %s2923 = scalar_select %p2922, %s16, 1
      %s2924 = smul.addr %s2923, 8
      %s2925 = scalar_lea.vmem %s4, %s2924
      // Predicated region
      $region33: #{conv3d_block_forward.1} parent=31 // pred_check
        %p2926 = pneg %p111
      $region34: #{conv3d_block_forward.1} parent=31 // pred_check_branch
        %2928 = sbr.rel (%p2926) target = $region36
      $region35: #{conv3d_block_forward.1} parent=31 // pred_region
        %s2929 = smul.u32 8, %s16
      $region36: #{conv3d_block_forward.1} parent=31 // pred_fallthru
        _
      // Predicated region
      $region37: #{conv3d_block_forward.1} parent=31 // pred_check
        %p2930 = pneg %p137
      $region38: #{conv3d_block_forward.1} parent=31 // pred_check_branch
        %2932 = sbr.rel (%p2930) target = $region40
      $region39: #{conv3d_block_forward.1} parent=31 // pred_region
        _
      $region40: #{conv3d_block_forward.1} parent=31 // pred_fallthru
        _
    $region32: #{conv3d_block_forward.1} parent=5 // pred_fallthru
      _
    %p2933 = scmp.le.s32.totalorder 2, %s11
    // Predicated region
    $region41: #{conv3d_block_forward.1} parent=5 // pred_check
      %p2934 = pneg %p2933
    $region42: #{conv3d_block_forward.1} parent=5 // pred_check_branch
      %2936 = sbr.rel (%p2934) target = $region44
    $region43: #{conv3d_block_forward.1} parent=5 // pred_region
      %s2937 = ssub.s32 %s11, 2
      // Predicated region
      $region45: #{conv3d_block_forward.1} parent=43 // pred_check
        %p2938 = pneg %p117
      $region46: #{conv3d_block_forward.1} parent=43 // pred_check_branch
        %2940 = sbr.rel (%p2938) target = $region48
      $region47: #{conv3d_block_forward.1} parent=43 // pred_region
        %s2941 = smul.u32 8, %s17
        %p2942 = scmp.lt.s32.totalorder %s2941, 15
        %s2943 = scalar_select %p2942, %s2941, 15
        %s2944 = smul.addr %s2943, 8
        %s2945 = scalar_lea.vmem %s3, %s2944
      $region48: #{conv3d_block_forward.1} parent=43 // pred_fallthru
        _
      // Predicated region
      $region49: #{conv3d_block_forward.1} parent=43 // pred_check
        %p2946 = pneg %p143
      $region50: #{conv3d_block_forward.1} parent=43 // pred_check_branch
        %2948 = sbr.rel (%p2946) target = $region52
      $region51: #{conv3d_block_forward.1} parent=43 // pred_region
        %p2949 = scmp.lt.s32.totalorder %s17, 1
        %s2950 = scalar_select %p2949, %s17, 1
        %s2951 = smul.addr %s2950, 8
        %s2952 = scalar_lea.vmem %s4, %s2951
      $region52: #{conv3d_block_forward.1} parent=43 // pred_fallthru
        _
    $region44: #{conv3d_block_forward.1} parent=5 // pred_fallthru
      _
  $region6: #{conv3d_block_forward.1} parent=0 // loop_footer
    %s15 = sadd.s32 1, %s11
  $region7: #{conv3d_block_forward.1} parent=0 // loop_footer_branch
    %10 = sbr.rel target = $region3
  $region8: #{conv3d_block_forward.1} parent=0 // loop_exit
    _

</llo_original>
